<compile_context>
chip_gen: v6e
topology: v6e:2x2x1
jax: 0.10.0
libtpu: 0.0.40
codegen_flags: <defaults>
</compile_context>

<pallas_src>
import functools

import jax
import jax.numpy as jnp
from jax.experimental import pallas as pl
from jax.experimental.pallas import tpu as pltpu

TOP_K = 50
MIN_TOKENS_TO_KEEP = 5


# ----------------------------- fused Pallas kernel ---------------------------
def _penalty_sample_kernel(logits_ref, ids_ref, top_p_ref, temp_ref, pen_ref,
                           probs_ref, token_ref, *, top_k, min_keep):
    B, V = logits_ref.shape
    _, L = ids_ref.shape

    x = logits_ref[...].astype(jnp.float32)            # (B, V)
    penalty = pen_ref[0]                                # SMEM scalars
    top_p = top_p_ref[0]
    temperature = temp_ref[0]

    vocab_iota = jax.lax.broadcasted_iota(jnp.int32, (B, V), 1)   # token id per lane
    row_iota = jax.lax.broadcasted_iota(jnp.int32, (B, V), 0)     # batch row per sublane
    vocab_iota_f = vocab_iota.astype(jnp.float32)

    # -- 1. repetition penalty: gather + penalize + scatter fused as a mask select --
    hit = vocab_iota == -1                               # all-False mask
    for b in range(B):                                   # statically unrolled (B*L small)
        row_sel = row_iota == b
        for l in range(L):
            tok = ids_ref[b, l]                          # scalar read from SMEM
            hit = jnp.logical_or(hit, jnp.logical_and(row_sel, vocab_iota == tok))
    penalized = jnp.where(x < 0.0, x * penalty, x / penalty)
    x = jnp.where(hit, penalized, x)

    # -- 2. top-k via k rounds of (max, first-argmax, mask-out), all vreg-resident --
    neg_big = jnp.float32(jnp.finfo(jnp.float32).min)
    col_k = jax.lax.broadcasted_iota(jnp.int32, (B, top_k), 1)
    vals = jnp.full((B, top_k), neg_big, jnp.float32)
    toks = jnp.zeros((B, top_k), jnp.int32)
    for i in range(top_k):
        m = jnp.max(x, axis=1, keepdims=True)                             # (B, 1)
        # first index achieving the max (f32 min-reduce over lane ids; exact for V < 2^24)
        idx_f = jnp.min(jnp.where(x == m, vocab_iota_f, jnp.float32(V)),
                        axis=1, keepdims=True)
        idx = idx_f.astype(jnp.int32)                                     # (B, 1)
        vals = jnp.where(col_k == i, m, vals)
        toks = jnp.where(col_k == i, idx, toks)
        x = jnp.where(vocab_iota == idx, neg_big, x)                      # remove winner

    # -- 3. temperature, softmax, cumulative sum (lower-triangular matmul on MXU) ---
    scaled = vals / temperature
    m1 = jnp.max(scaled, axis=1, keepdims=True)
    e1 = jnp.exp(scaled - m1)
    p1 = e1 / jnp.sum(e1, axis=1, keepdims=True)
    r = jax.lax.broadcasted_iota(jnp.int32, (top_k, top_k), 0)
    c = jax.lax.broadcasted_iota(jnp.int32, (top_k, top_k), 1)
    tri = (r <= c).astype(jnp.float32)                   # tri[i, j] = 1 iff i <= j
    cum = jnp.dot(p1, tri, preferred_element_type=jnp.float32)  # inclusive cumsum

    # -- 4./5. top-p filter (always keep first min_keep) + final softmax ------------
    keep = col_k < min_keep
    mask = jnp.logical_or(cum < top_p, keep)
    filtered = jnp.where(mask, scaled, jnp.float32(-1000.0))
    m2 = jnp.max(filtered, axis=1, keepdims=True)
    e2 = jnp.exp(filtered - m2)
    probs = e2 / jnp.sum(e2, axis=1, keepdims=True)

    probs_ref[...] = probs
    token_ref[...] = toks


def penalty_sample_head(m_logits, input_ids, top_p, temperature, penalty,
                        *, top_k=TOP_K, min_tokens_to_keep=MIN_TOKENS_TO_KEEP):
    """m_logits: (B, V) float; input_ids: (B, L) int; scalars top_p/temperature/penalty.

    Returns (probs (B, top_k) f32, token (B, top_k) i32)."""
    B, V = m_logits.shape
    assert top_k <= V
    input_ids = input_ids.astype(jnp.int32)
    scal = lambda v: jnp.asarray(v, jnp.float32).reshape((1,))

    kernel = functools.partial(_penalty_sample_kernel,
                               top_k=top_k, min_keep=min_tokens_to_keep)
    return pl.pallas_call(
        kernel,
        out_shape=(jax.ShapeDtypeStruct((B, top_k), jnp.float32),
                   jax.ShapeDtypeStruct((B, top_k), jnp.int32)),
        in_specs=[
            pl.BlockSpec(memory_space=pltpu.MemorySpace.VMEM),   # m_logits  (B, V)
            pl.BlockSpec(memory_space=pltpu.MemorySpace.SMEM),   # input_ids (B, L)
            pl.BlockSpec(memory_space=pltpu.MemorySpace.SMEM),   # top_p       (1,)
            pl.BlockSpec(memory_space=pltpu.MemorySpace.SMEM),   # temperature (1,)
            pl.BlockSpec(memory_space=pltpu.MemorySpace.SMEM),   # penalty     (1,)
        ],
        out_specs=(
            pl.BlockSpec(memory_space=pltpu.MemorySpace.VMEM),   # probs
            pl.BlockSpec(memory_space=pltpu.MemorySpace.VMEM),   # token
        ),
    )(m_logits, input_ids, scal(top_p), scal(temperature), scal(penalty))


# ----------------------------- pure-JAX reference ----------------------------
def _reference(m_logits, input_ids, top_p, temperature, penalty,
               top_k=TOP_K, min_keep=MIN_TOKENS_TO_KEEP):
    gathered = jnp.take_along_axis(m_logits, input_ids, axis=1)
    pen_vals = jnp.where(gathered < 0, gathered * penalty, gathered / penalty)
    m = jax.vmap(lambda row, idx, val: row.at[idx].set(val))(m_logits, input_ids, pen_vals)
    vals, tok = jax.lax.top_k(m.astype(jnp.float32), top_k)
    vals = vals / temperature
    p = jax.nn.softmax(vals, axis=1)
    cum = jnp.cumsum(p, axis=1)
    keep = jnp.arange(top_k) < min_keep
    mask = (cum < top_p) | keep
    filt = jnp.where(mask, vals, jnp.float32(-1000.0))
    probs = jax.nn.softmax(filt, axis=1)
    return probs, tok


# ----------------------------- main -------------------------------------------
if __name__ == "__main__":
    B, V, L = 2, 512, 16
    key = jax.random.PRNGKey(0)
    k1, k2 = jax.random.split(key)
    m_logits = (2.0 * jax.random.normal(k1, (B, V))).astype(jnp.float32)
    input_ids = jax.random.randint(k2, (B, L), 0, V, dtype=jnp.int32)
    top_p, temperature, penalty = 0.9, 0.8, 1.1

    fn = jax.jit(penalty_sample_head)
    probs, token = fn(m_logits, input_ids, top_p, temperature, penalty)
    probs, token = jax.block_until_ready((probs, token))

    # sanity + correctness vs. pure-JAX reference
    ref_probs, ref_token = _reference(m_logits, input_ids, top_p, temperature, penalty)
    assert probs.shape == (B, TOP_K) and token.shape == (B, TOP_K), (probs.shape, token.shape)
    assert jnp.all(jnp.isfinite(probs))
    assert jnp.allclose(jnp.sum(probs, axis=1), 1.0, atol=1e-4)
    assert jnp.array_equal(token, ref_token.astype(jnp.int32))
    assert jnp.allclose(probs, ref_probs, atol=2e-5, rtol=1e-4)
    print("KERNEL_OK")
</pallas_src>

<mosaic_0001>
module attributes {stable_mosaic.version = 11 : i64} {
  func.func @_penalty_sample_kernel(%arg0: memref<2x512xf32, #tpu.memory_space<vmem>>, %arg1: memref<2x16xi32, #tpu.memory_space<smem>>, %arg2: memref<1xf32, #tpu.memory_space<smem>>, %arg3: memref<1xf32, #tpu.memory_space<smem>>, %arg4: memref<1xf32, #tpu.memory_space<smem>>, %arg5: memref<2x50xf32, #tpu.memory_space<vmem>>, %arg6: memref<2x50xi32, #tpu.memory_space<vmem>>) attributes {dimension_semantics = [], scalar_prefetch = 0 : i64, scratch_operands = 0 : i64, tpu.core_type = #tpu.core_type<tc>} {
    %c0 = arith.constant 0 : index
    %c0_0 = arith.constant 0 : index
    %0 = vector.load %arg0[%c0, %c0_0] : memref<2x512xf32, #tpu.memory_space<vmem>>, vector<2x512xf32>
    %c0_1 = arith.constant 0 : index
    %1 = memref.load %arg4[%c0_1] : memref<1xf32, #tpu.memory_space<smem>>
    %c0_2 = arith.constant 0 : index
    %2 = memref.load %arg2[%c0_2] : memref<1xf32, #tpu.memory_space<smem>>
    %c0_3 = arith.constant 0 : index
    %3 = memref.load %arg3[%c0_3] : memref<1xf32, #tpu.memory_space<smem>>
    %4 = tpu.iota {dimensions = array<i32: 1>} : vector<2x512xi32>
    %5 = tpu.iota {dimensions = array<i32: 0>} : vector<2x512xi32>
    %6 = arith.sitofp %4 : vector<2x512xi32> to vector<2x512xf32>
    %c-1_i32 = arith.constant -1 : i32
    %7 = vector.broadcast %c-1_i32 : i32 to vector<2x512xi32>
    %8 = arith.cmpi eq, %4, %7 : vector<2x512xi32>
    %c0_i32 = arith.constant 0 : i32
    %9 = vector.broadcast %c0_i32 : i32 to vector<2x512xi32>
    %10 = arith.cmpi eq, %5, %9 : vector<2x512xi32>
    %c0_4 = arith.constant 0 : index
    %c0_5 = arith.constant 0 : index
    %11 = memref.load %arg1[%c0_4, %c0_5] : memref<2x16xi32, #tpu.memory_space<smem>>
    %12 = vector.broadcast %11 : i32 to vector<2x512xi32>
    %13 = arith.cmpi eq, %4, %12 : vector<2x512xi32>
    %14 = arith.andi %10, %13 : vector<2x512xi1>
    %15 = arith.ori %8, %14 : vector<2x512xi1>
    %c0_6 = arith.constant 0 : index
    %c1 = arith.constant 1 : index
    %16 = memref.load %arg1[%c0_6, %c1] : memref<2x16xi32, #tpu.memory_space<smem>>
    %17 = vector.broadcast %16 : i32 to vector<2x512xi32>
    %18 = arith.cmpi eq, %4, %17 : vector<2x512xi32>
    %19 = arith.andi %10, %18 : vector<2x512xi1>
    %20 = arith.ori %15, %19 : vector<2x512xi1>
    %c0_7 = arith.constant 0 : index
    %c2 = arith.constant 2 : index
    %21 = memref.load %arg1[%c0_7, %c2] : memref<2x16xi32, #tpu.memory_space<smem>>
    %22 = vector.broadcast %21 : i32 to vector<2x512xi32>
    %23 = arith.cmpi eq, %4, %22 : vector<2x512xi32>
    %24 = arith.andi %10, %23 : vector<2x512xi1>
    %25 = arith.ori %20, %24 : vector<2x512xi1>
    %c0_8 = arith.constant 0 : index
    %c3 = arith.constant 3 : index
    %26 = memref.load %arg1[%c0_8, %c3] : memref<2x16xi32, #tpu.memory_space<smem>>
    %27 = vector.broadcast %26 : i32 to vector<2x512xi32>
    %28 = arith.cmpi eq, %4, %27 : vector<2x512xi32>
    %29 = arith.andi %10, %28 : vector<2x512xi1>
    %30 = arith.ori %25, %29 : vector<2x512xi1>
    %c0_9 = arith.constant 0 : index
    %c4 = arith.constant 4 : index
    %31 = memref.load %arg1[%c0_9, %c4] : memref<2x16xi32, #tpu.memory_space<smem>>
    %32 = vector.broadcast %31 : i32 to vector<2x512xi32>
    %33 = arith.cmpi eq, %4, %32 : vector<2x512xi32>
    %34 = arith.andi %10, %33 : vector<2x512xi1>
    %35 = arith.ori %30, %34 : vector<2x512xi1>
    %c0_10 = arith.constant 0 : index
    %c5 = arith.constant 5 : index
    %36 = memref.load %arg1[%c0_10, %c5] : memref<2x16xi32, #tpu.memory_space<smem>>
    %37 = vector.broadcast %36 : i32 to vector<2x512xi32>
    %38 = arith.cmpi eq, %4, %37 : vector<2x512xi32>
    %39 = arith.andi %10, %38 : vector<2x512xi1>
    %40 = arith.ori %35, %39 : vector<2x512xi1>
    %c0_11 = arith.constant 0 : index
    %c6 = arith.constant 6 : index
    %41 = memref.load %arg1[%c0_11, %c6] : memref<2x16xi32, #tpu.memory_space<smem>>
    %42 = vector.broadcast %41 : i32 to vector<2x512xi32>
    %43 = arith.cmpi eq, %4, %42 : vector<2x512xi32>
    %44 = arith.andi %10, %43 : vector<2x512xi1>
    %45 = arith.ori %40, %44 : vector<2x512xi1>
    %c0_12 = arith.constant 0 : index
    %c7 = arith.constant 7 : index
    %46 = memref.load %arg1[%c0_12, %c7] : memref<2x16xi32, #tpu.memory_space<smem>>
    %47 = vector.broadcast %46 : i32 to vector<2x512xi32>
    %48 = arith.cmpi eq, %4, %47 : vector<2x512xi32>
    %49 = arith.andi %10, %48 : vector<2x512xi1>
    %50 = arith.ori %45, %49 : vector<2x512xi1>
    %c0_13 = arith.constant 0 : index
    %c8 = arith.constant 8 : index
    %51 = memref.load %arg1[%c0_13, %c8] : memref<2x16xi32, #tpu.memory_space<smem>>
    %52 = vector.broadcast %51 : i32 to vector<2x512xi32>
    %53 = arith.cmpi eq, %4, %52 : vector<2x512xi32>
    %54 = arith.andi %10, %53 : vector<2x512xi1>
    %55 = arith.ori %50, %54 : vector<2x512xi1>
    %c0_14 = arith.constant 0 : index
    %c9 = arith.constant 9 : index
    %56 = memref.load %arg1[%c0_14, %c9] : memref<2x16xi32, #tpu.memory_space<smem>>
    %57 = vector.broadcast %56 : i32 to vector<2x512xi32>
    %58 = arith.cmpi eq, %4, %57 : vector<2x512xi32>
    %59 = arith.andi %10, %58 : vector<2x512xi1>
    %60 = arith.ori %55, %59 : vector<2x512xi1>
    %c0_15 = arith.constant 0 : index
    %c10 = arith.constant 10 : index
    %61 = memref.load %arg1[%c0_15, %c10] : memref<2x16xi32, #tpu.memory_space<smem>>
    %62 = vector.broadcast %61 : i32 to vector<2x512xi32>
    %63 = arith.cmpi eq, %4, %62 : vector<2x512xi32>
    %64 = arith.andi %10, %63 : vector<2x512xi1>
    %65 = arith.ori %60, %64 : vector<2x512xi1>
    %c0_16 = arith.constant 0 : index
    %c11 = arith.constant 11 : index
    %66 = memref.load %arg1[%c0_16, %c11] : memref<2x16xi32, #tpu.memory_space<smem>>
    %67 = vector.broadcast %66 : i32 to vector<2x512xi32>
    %68 = arith.cmpi eq, %4, %67 : vector<2x512xi32>
    %69 = arith.andi %10, %68 : vector<2x512xi1>
    %70 = arith.ori %65, %69 : vector<2x512xi1>
    %c0_17 = arith.constant 0 : index
    %c12 = arith.constant 12 : index
    %71 = memref.load %arg1[%c0_17, %c12] : memref<2x16xi32, #tpu.memory_space<smem>>
    %72 = vector.broadcast %71 : i32 to vector<2x512xi32>
    %73 = arith.cmpi eq, %4, %72 : vector<2x512xi32>
    %74 = arith.andi %10, %73 : vector<2x512xi1>
    %75 = arith.ori %70, %74 : vector<2x512xi1>
    %c0_18 = arith.constant 0 : index
    %c13 = arith.constant 13 : index
    %76 = memref.load %arg1[%c0_18, %c13] : memref<2x16xi32, #tpu.memory_space<smem>>
    %77 = vector.broadcast %76 : i32 to vector<2x512xi32>
    %78 = arith.cmpi eq, %4, %77 : vector<2x512xi32>
    %79 = arith.andi %10, %78 : vector<2x512xi1>
    %80 = arith.ori %75, %79 : vector<2x512xi1>
    %c0_19 = arith.constant 0 : index
    %c14 = arith.constant 14 : index
    %81 = memref.load %arg1[%c0_19, %c14] : memref<2x16xi32, #tpu.memory_space<smem>>
    %82 = vector.broadcast %81 : i32 to vector<2x512xi32>
    %83 = arith.cmpi eq, %4, %82 : vector<2x512xi32>
    %84 = arith.andi %10, %83 : vector<2x512xi1>
    %85 = arith.ori %80, %84 : vector<2x512xi1>
    %c0_20 = arith.constant 0 : index
    %c15 = arith.constant 15 : index
    %86 = memref.load %arg1[%c0_20, %c15] : memref<2x16xi32, #tpu.memory_space<smem>>
    %87 = vector.broadcast %86 : i32 to vector<2x512xi32>
    %88 = arith.cmpi eq, %4, %87 : vector<2x512xi32>
    %89 = arith.andi %10, %88 : vector<2x512xi1>
    %90 = arith.ori %85, %89 : vector<2x512xi1>
    %c1_i32 = arith.constant 1 : i32
    %91 = vector.broadcast %c1_i32 : i32 to vector<2x512xi32>
    %92 = arith.cmpi eq, %5, %91 : vector<2x512xi32>
    %c1_21 = arith.constant 1 : index
    %c0_22 = arith.constant 0 : index
    %93 = memref.load %arg1[%c1_21, %c0_22] : memref<2x16xi32, #tpu.memory_space<smem>>
    %94 = vector.broadcast %93 : i32 to vector<2x512xi32>
    %95 = arith.cmpi eq, %4, %94 : vector<2x512xi32>
    %96 = arith.andi %92, %95 : vector<2x512xi1>
    %97 = arith.ori %90, %96 : vector<2x512xi1>
    %c1_23 = arith.constant 1 : index
    %c1_24 = arith.constant 1 : index
    %98 = memref.load %arg1[%c1_23, %c1_24] : memref<2x16xi32, #tpu.memory_space<smem>>
    %99 = vector.broadcast %98 : i32 to vector<2x512xi32>
    %100 = arith.cmpi eq, %4, %99 : vector<2x512xi32>
    %101 = arith.andi %92, %100 : vector<2x512xi1>
    %102 = arith.ori %97, %101 : vector<2x512xi1>
    %c1_25 = arith.constant 1 : index
    %c2_26 = arith.constant 2 : index
    %103 = memref.load %arg1[%c1_25, %c2_26] : memref<2x16xi32, #tpu.memory_space<smem>>
    %104 = vector.broadcast %103 : i32 to vector<2x512xi32>
    %105 = arith.cmpi eq, %4, %104 : vector<2x512xi32>
    %106 = arith.andi %92, %105 : vector<2x512xi1>
    %107 = arith.ori %102, %106 : vector<2x512xi1>
    %c1_27 = arith.constant 1 : index
    %c3_28 = arith.constant 3 : index
    %108 = memref.load %arg1[%c1_27, %c3_28] : memref<2x16xi32, #tpu.memory_space<smem>>
    %109 = vector.broadcast %108 : i32 to vector<2x512xi32>
    %110 = arith.cmpi eq, %4, %109 : vector<2x512xi32>
    %111 = arith.andi %92, %110 : vector<2x512xi1>
    %112 = arith.ori %107, %111 : vector<2x512xi1>
    %c1_29 = arith.constant 1 : index
    %c4_30 = arith.constant 4 : index
    %113 = memref.load %arg1[%c1_29, %c4_30] : memref<2x16xi32, #tpu.memory_space<smem>>
    %114 = vector.broadcast %113 : i32 to vector<2x512xi32>
    %115 = arith.cmpi eq, %4, %114 : vector<2x512xi32>
    %116 = arith.andi %92, %115 : vector<2x512xi1>
    %117 = arith.ori %112, %116 : vector<2x512xi1>
    %c1_31 = arith.constant 1 : index
    %c5_32 = arith.constant 5 : index
    %118 = memref.load %arg1[%c1_31, %c5_32] : memref<2x16xi32, #tpu.memory_space<smem>>
    %119 = vector.broadcast %118 : i32 to vector<2x512xi32>
    %120 = arith.cmpi eq, %4, %119 : vector<2x512xi32>
    %121 = arith.andi %92, %120 : vector<2x512xi1>
    %122 = arith.ori %117, %121 : vector<2x512xi1>
    %c1_33 = arith.constant 1 : index
    %c6_34 = arith.constant 6 : index
    %123 = memref.load %arg1[%c1_33, %c6_34] : memref<2x16xi32, #tpu.memory_space<smem>>
    %124 = vector.broadcast %123 : i32 to vector<2x512xi32>
    %125 = arith.cmpi eq, %4, %124 : vector<2x512xi32>
    %126 = arith.andi %92, %125 : vector<2x512xi1>
    %127 = arith.ori %122, %126 : vector<2x512xi1>
    %c1_35 = arith.constant 1 : index
    %c7_36 = arith.constant 7 : index
    %128 = memref.load %arg1[%c1_35, %c7_36] : memref<2x16xi32, #tpu.memory_space<smem>>
    %129 = vector.broadcast %128 : i32 to vector<2x512xi32>
    %130 = arith.cmpi eq, %4, %129 : vector<2x512xi32>
    %131 = arith.andi %92, %130 : vector<2x512xi1>
    %132 = arith.ori %127, %131 : vector<2x512xi1>
    %c1_37 = arith.constant 1 : index
    %c8_38 = arith.constant 8 : index
    %133 = memref.load %arg1[%c1_37, %c8_38] : memref<2x16xi32, #tpu.memory_space<smem>>
    %134 = vector.broadcast %133 : i32 to vector<2x512xi32>
    %135 = arith.cmpi eq, %4, %134 : vector<2x512xi32>
    %136 = arith.andi %92, %135 : vector<2x512xi1>
    %137 = arith.ori %132, %136 : vector<2x512xi1>
    %c1_39 = arith.constant 1 : index
    %c9_40 = arith.constant 9 : index
    %138 = memref.load %arg1[%c1_39, %c9_40] : memref<2x16xi32, #tpu.memory_space<smem>>
    %139 = vector.broadcast %138 : i32 to vector<2x512xi32>
    %140 = arith.cmpi eq, %4, %139 : vector<2x512xi32>
    %141 = arith.andi %92, %140 : vector<2x512xi1>
    %142 = arith.ori %137, %141 : vector<2x512xi1>
    %c1_41 = arith.constant 1 : index
    %c10_42 = arith.constant 10 : index
    %143 = memref.load %arg1[%c1_41, %c10_42] : memref<2x16xi32, #tpu.memory_space<smem>>
    %144 = vector.broadcast %143 : i32 to vector<2x512xi32>
    %145 = arith.cmpi eq, %4, %144 : vector<2x512xi32>
    %146 = arith.andi %92, %145 : vector<2x512xi1>
    %147 = arith.ori %142, %146 : vector<2x512xi1>
    %c1_43 = arith.constant 1 : index
    %c11_44 = arith.constant 11 : index
    %148 = memref.load %arg1[%c1_43, %c11_44] : memref<2x16xi32, #tpu.memory_space<smem>>
    %149 = vector.broadcast %148 : i32 to vector<2x512xi32>
    %150 = arith.cmpi eq, %4, %149 : vector<2x512xi32>
    %151 = arith.andi %92, %150 : vector<2x512xi1>
    %152 = arith.ori %147, %151 : vector<2x512xi1>
    %c1_45 = arith.constant 1 : index
    %c12_46 = arith.constant 12 : index
    %153 = memref.load %arg1[%c1_45, %c12_46] : memref<2x16xi32, #tpu.memory_space<smem>>
    %154 = vector.broadcast %153 : i32 to vector<2x512xi32>
    %155 = arith.cmpi eq, %4, %154 : vector<2x512xi32>
    %156 = arith.andi %92, %155 : vector<2x512xi1>
    %157 = arith.ori %152, %156 : vector<2x512xi1>
    %c1_47 = arith.constant 1 : index
    %c13_48 = arith.constant 13 : index
    %158 = memref.load %arg1[%c1_47, %c13_48] : memref<2x16xi32, #tpu.memory_space<smem>>
    %159 = vector.broadcast %158 : i32 to vector<2x512xi32>
    %160 = arith.cmpi eq, %4, %159 : vector<2x512xi32>
    %161 = arith.andi %92, %160 : vector<2x512xi1>
    %162 = arith.ori %157, %161 : vector<2x512xi1>
    %c1_49 = arith.constant 1 : index
    %c14_50 = arith.constant 14 : index
    %163 = memref.load %arg1[%c1_49, %c14_50] : memref<2x16xi32, #tpu.memory_space<smem>>
    %164 = vector.broadcast %163 : i32 to vector<2x512xi32>
    %165 = arith.cmpi eq, %4, %164 : vector<2x512xi32>
    %166 = arith.andi %92, %165 : vector<2x512xi1>
    %167 = arith.ori %162, %166 : vector<2x512xi1>
    %c1_51 = arith.constant 1 : index
    %c15_52 = arith.constant 15 : index
    %168 = memref.load %arg1[%c1_51, %c15_52] : memref<2x16xi32, #tpu.memory_space<smem>>
    %169 = vector.broadcast %168 : i32 to vector<2x512xi32>
    %170 = arith.cmpi eq, %4, %169 : vector<2x512xi32>
    %171 = arith.andi %92, %170 : vector<2x512xi1>
    %172 = arith.ori %167, %171 : vector<2x512xi1>
    %cst = arith.constant 0.000000e+00 : f32
    %173 = vector.broadcast %cst : f32 to vector<2x512xf32>
    %174 = arith.cmpf olt, %0, %173 : vector<2x512xf32>
    %175 = vector.broadcast %1 : f32 to vector<2x512xf32>
    %176 = arith.mulf %0, %175 : vector<2x512xf32>
    %177 = vector.broadcast %1 : f32 to vector<2x512xf32>
    %178 = arith.divf %0, %177 : vector<2x512xf32>
    %179 = arith.select %174, %176, %178 : vector<2x512xi1>, vector<2x512xf32>
    %180 = arith.select %172, %179, %0 : vector<2x512xi1>, vector<2x512xf32>
    %181 = tpu.iota {dimensions = array<i32: 1>} : vector<2x50xi32>
    %cst_53 = arith.constant -3.40282347E+38 : f32
    %182 = vector.broadcast %cst_53 : f32 to vector<2x50xf32>
    %c0_i32_54 = arith.constant 0 : i32
    %183 = vector.broadcast %c0_i32_54 : i32 to vector<2x50xi32>
    %cst_55 = arith.constant dense<0xFF800000> : vector<2xf32>
    %184 = vector.multi_reduction <maximumf>, %180, %cst_55 [1] : vector<2x512xf32> to vector<2xf32>
    %185 = vector.shape_cast %184 : vector<2xf32> to vector<2x1xf32>
    %186 = vector.broadcast %185 : vector<2x1xf32> to vector<2x512xf32>
    %187 = arith.cmpf oeq, %180, %186 : vector<2x512xf32>
    %cst_56 = arith.constant 5.120000e+02 : f32
    %188 = vector.broadcast %cst_56 : f32 to vector<2x512xf32>
    %189 = arith.select %187, %6, %188 : vector<2x512xi1>, vector<2x512xf32>
    %cst_57 = arith.constant dense<0x7F800000> : vector<2xf32>
    %190 = vector.multi_reduction <minimumf>, %189, %cst_57 [1] : vector<2x512xf32> to vector<2xf32>
    %191 = vector.shape_cast %190 : vector<2xf32> to vector<2x1xf32>
    %192 = arith.fptosi %191 : vector<2x1xf32> to vector<2x1xi32>
    %c0_i32_58 = arith.constant 0 : i32
    %193 = vector.broadcast %c0_i32_58 : i32 to vector<2x50xi32>
    %194 = arith.cmpi eq, %181, %193 : vector<2x50xi32>
    %195 = vector.shape_cast %185 : vector<2x1xf32> to vector<2x1xf32>
    %196 = vector.broadcast %195 : vector<2x1xf32> to vector<2x50xf32>
    %197 = arith.select %194, %196, %182 : vector<2x50xi1>, vector<2x50xf32>
    %c0_i32_59 = arith.constant 0 : i32
    %198 = vector.broadcast %c0_i32_59 : i32 to vector<2x50xi32>
    %199 = arith.cmpi eq, %181, %198 : vector<2x50xi32>
    %200 = vector.shape_cast %192 : vector<2x1xi32> to vector<2x1xi32>
    %201 = vector.broadcast %200 : vector<2x1xi32> to vector<2x50xi32>
    %202 = arith.select %199, %201, %183 : vector<2x50xi1>, vector<2x50xi32>
    %203 = vector.broadcast %192 : vector<2x1xi32> to vector<2x512xi32>
    %204 = arith.cmpi eq, %4, %203 : vector<2x512xi32>
    %cst_60 = arith.constant -3.40282347E+38 : f32
    %205 = vector.broadcast %cst_60 : f32 to vector<2x512xf32>
    %206 = arith.select %204, %205, %180 : vector<2x512xi1>, vector<2x512xf32>
    %cst_61 = arith.constant dense<0xFF800000> : vector<2xf32>
    %207 = vector.multi_reduction <maximumf>, %206, %cst_61 [1] : vector<2x512xf32> to vector<2xf32>
    %208 = vector.shape_cast %207 : vector<2xf32> to vector<2x1xf32>
    %209 = vector.broadcast %208 : vector<2x1xf32> to vector<2x512xf32>
    %210 = arith.cmpf oeq, %206, %209 : vector<2x512xf32>
    %cst_62 = arith.constant 5.120000e+02 : f32
    %211 = vector.broadcast %cst_62 : f32 to vector<2x512xf32>
    %212 = arith.select %210, %6, %211 : vector<2x512xi1>, vector<2x512xf32>
    %cst_63 = arith.constant dense<0x7F800000> : vector<2xf32>
    %213 = vector.multi_reduction <minimumf>, %212, %cst_63 [1] : vector<2x512xf32> to vector<2xf32>
    %214 = vector.shape_cast %213 : vector<2xf32> to vector<2x1xf32>
    %215 = arith.fptosi %214 : vector<2x1xf32> to vector<2x1xi32>
    %c1_i32_64 = arith.constant 1 : i32
    %216 = vector.broadcast %c1_i32_64 : i32 to vector<2x50xi32>
    %217 = arith.cmpi eq, %181, %216 : vector<2x50xi32>
    %218 = vector.shape_cast %208 : vector<2x1xf32> to vector<2x1xf32>
    %219 = vector.broadcast %218 : vector<2x1xf32> to vector<2x50xf32>
    %220 = arith.select %217, %219, %197 : vector<2x50xi1>, vector<2x50xf32>
    %c1_i32_65 = arith.constant 1 : i32
    %221 = vector.broadcast %c1_i32_65 : i32 to vector<2x50xi32>
    %222 = arith.cmpi eq, %181, %221 : vector<2x50xi32>
    %223 = vector.shape_cast %215 : vector<2x1xi32> to vector<2x1xi32>
    %224 = vector.broadcast %223 : vector<2x1xi32> to vector<2x50xi32>
    %225 = arith.select %222, %224, %202 : vector<2x50xi1>, vector<2x50xi32>
    %226 = vector.broadcast %215 : vector<2x1xi32> to vector<2x512xi32>
    %227 = arith.cmpi eq, %4, %226 : vector<2x512xi32>
    %cst_66 = arith.constant -3.40282347E+38 : f32
    %228 = vector.broadcast %cst_66 : f32 to vector<2x512xf32>
    %229 = arith.select %227, %228, %206 : vector<2x512xi1>, vector<2x512xf32>
    %cst_67 = arith.constant dense<0xFF800000> : vector<2xf32>
    %230 = vector.multi_reduction <maximumf>, %229, %cst_67 [1] : vector<2x512xf32> to vector<2xf32>
    %231 = vector.shape_cast %230 : vector<2xf32> to vector<2x1xf32>
    %232 = vector.broadcast %231 : vector<2x1xf32> to vector<2x512xf32>
    %233 = arith.cmpf oeq, %229, %232 : vector<2x512xf32>
    %cst_68 = arith.constant 5.120000e+02 : f32
    %234 = vector.broadcast %cst_68 : f32 to vector<2x512xf32>
    %235 = arith.select %233, %6, %234 : vector<2x512xi1>, vector<2x512xf32>
    %cst_69 = arith.constant dense<0x7F800000> : vector<2xf32>
    %236 = vector.multi_reduction <minimumf>, %235, %cst_69 [1] : vector<2x512xf32> to vector<2xf32>
    %237 = vector.shape_cast %236 : vector<2xf32> to vector<2x1xf32>
    %238 = arith.fptosi %237 : vector<2x1xf32> to vector<2x1xi32>
    %c2_i32 = arith.constant 2 : i32
    %239 = vector.broadcast %c2_i32 : i32 to vector<2x50xi32>
    %240 = arith.cmpi eq, %181, %239 : vector<2x50xi32>
    %241 = vector.shape_cast %231 : vector<2x1xf32> to vector<2x1xf32>
    %242 = vector.broadcast %241 : vector<2x1xf32> to vector<2x50xf32>
    %243 = arith.select %240, %242, %220 : vector<2x50xi1>, vector<2x50xf32>
    %c2_i32_70 = arith.constant 2 : i32
    %244 = vector.broadcast %c2_i32_70 : i32 to vector<2x50xi32>
    %245 = arith.cmpi eq, %181, %244 : vector<2x50xi32>
    %246 = vector.shape_cast %238 : vector<2x1xi32> to vector<2x1xi32>
    %247 = vector.broadcast %246 : vector<2x1xi32> to vector<2x50xi32>
    %248 = arith.select %245, %247, %225 : vector<2x50xi1>, vector<2x50xi32>
    %249 = vector.broadcast %238 : vector<2x1xi32> to vector<2x512xi32>
    %250 = arith.cmpi eq, %4, %249 : vector<2x512xi32>
    %cst_71 = arith.constant -3.40282347E+38 : f32
    %251 = vector.broadcast %cst_71 : f32 to vector<2x512xf32>
    %252 = arith.select %250, %251, %229 : vector<2x512xi1>, vector<2x512xf32>
    %cst_72 = arith.constant dense<0xFF800000> : vector<2xf32>
    %253 = vector.multi_reduction <maximumf>, %252, %cst_72 [1] : vector<2x512xf32> to vector<2xf32>
    %254 = vector.shape_cast %253 : vector<2xf32> to vector<2x1xf32>
    %255 = vector.broadcast %254 : vector<2x1xf32> to vector<2x512xf32>
    %256 = arith.cmpf oeq, %252, %255 : vector<2x512xf32>
    %cst_73 = arith.constant 5.120000e+02 : f32
    %257 = vector.broadcast %cst_73 : f32 to vector<2x512xf32>
    %258 = arith.select %256, %6, %257 : vector<2x512xi1>, vector<2x512xf32>
    %cst_74 = arith.constant dense<0x7F800000> : vector<2xf32>
    %259 = vector.multi_reduction <minimumf>, %258, %cst_74 [1] : vector<2x512xf32> to vector<2xf32>
    %260 = vector.shape_cast %259 : vector<2xf32> to vector<2x1xf32>
    %261 = arith.fptosi %260 : vector<2x1xf32> to vector<2x1xi32>
    %c3_i32 = arith.constant 3 : i32
    %262 = vector.broadcast %c3_i32 : i32 to vector<2x50xi32>
    %263 = arith.cmpi eq, %181, %262 : vector<2x50xi32>
    %264 = vector.shape_cast %254 : vector<2x1xf32> to vector<2x1xf32>
    %265 = vector.broadcast %264 : vector<2x1xf32> to vector<2x50xf32>
    %266 = arith.select %263, %265, %243 : vector<2x50xi1>, vector<2x50xf32>
    %c3_i32_75 = arith.constant 3 : i32
    %267 = vector.broadcast %c3_i32_75 : i32 to vector<2x50xi32>
    %268 = arith.cmpi eq, %181, %267 : vector<2x50xi32>
    %269 = vector.shape_cast %261 : vector<2x1xi32> to vector<2x1xi32>
    %270 = vector.broadcast %269 : vector<2x1xi32> to vector<2x50xi32>
    %271 = arith.select %268, %270, %248 : vector<2x50xi1>, vector<2x50xi32>
    %272 = vector.broadcast %261 : vector<2x1xi32> to vector<2x512xi32>
    %273 = arith.cmpi eq, %4, %272 : vector<2x512xi32>
    %cst_76 = arith.constant -3.40282347E+38 : f32
    %274 = vector.broadcast %cst_76 : f32 to vector<2x512xf32>
    %275 = arith.select %273, %274, %252 : vector<2x512xi1>, vector<2x512xf32>
    %cst_77 = arith.constant dense<0xFF800000> : vector<2xf32>
    %276 = vector.multi_reduction <maximumf>, %275, %cst_77 [1] : vector<2x512xf32> to vector<2xf32>
    %277 = vector.shape_cast %276 : vector<2xf32> to vector<2x1xf32>
    %278 = vector.broadcast %277 : vector<2x1xf32> to vector<2x512xf32>
    %279 = arith.cmpf oeq, %275, %278 : vector<2x512xf32>
    %cst_78 = arith.constant 5.120000e+02 : f32
    %280 = vector.broadcast %cst_78 : f32 to vector<2x512xf32>
    %281 = arith.select %279, %6, %280 : vector<2x512xi1>, vector<2x512xf32>
    %cst_79 = arith.constant dense<0x7F800000> : vector<2xf32>
    %282 = vector.multi_reduction <minimumf>, %281, %cst_79 [1] : vector<2x512xf32> to vector<2xf32>
    %283 = vector.shape_cast %282 : vector<2xf32> to vector<2x1xf32>
    %284 = arith.fptosi %283 : vector<2x1xf32> to vector<2x1xi32>
    %c4_i32 = arith.constant 4 : i32
    %285 = vector.broadcast %c4_i32 : i32 to vector<2x50xi32>
    %286 = arith.cmpi eq, %181, %285 : vector<2x50xi32>
    %287 = vector.shape_cast %277 : vector<2x1xf32> to vector<2x1xf32>
    %288 = vector.broadcast %287 : vector<2x1xf32> to vector<2x50xf32>
    %289 = arith.select %286, %288, %266 : vector<2x50xi1>, vector<2x50xf32>
    %c4_i32_80 = arith.constant 4 : i32
    %290 = vector.broadcast %c4_i32_80 : i32 to vector<2x50xi32>
    %291 = arith.cmpi eq, %181, %290 : vector<2x50xi32>
    %292 = vector.shape_cast %284 : vector<2x1xi32> to vector<2x1xi32>
    %293 = vector.broadcast %292 : vector<2x1xi32> to vector<2x50xi32>
    %294 = arith.select %291, %293, %271 : vector<2x50xi1>, vector<2x50xi32>
    %295 = vector.broadcast %284 : vector<2x1xi32> to vector<2x512xi32>
    %296 = arith.cmpi eq, %4, %295 : vector<2x512xi32>
    %cst_81 = arith.constant -3.40282347E+38 : f32
    %297 = vector.broadcast %cst_81 : f32 to vector<2x512xf32>
    %298 = arith.select %296, %297, %275 : vector<2x512xi1>, vector<2x512xf32>
    %cst_82 = arith.constant dense<0xFF800000> : vector<2xf32>
    %299 = vector.multi_reduction <maximumf>, %298, %cst_82 [1] : vector<2x512xf32> to vector<2xf32>
    %300 = vector.shape_cast %299 : vector<2xf32> to vector<2x1xf32>
    %301 = vector.broadcast %300 : vector<2x1xf32> to vector<2x512xf32>
    %302 = arith.cmpf oeq, %298, %301 : vector<2x512xf32>
    %cst_83 = arith.constant 5.120000e+02 : f32
    %303 = vector.broadcast %cst_83 : f32 to vector<2x512xf32>
    %304 = arith.select %302, %6, %303 : vector<2x512xi1>, vector<2x512xf32>
    %cst_84 = arith.constant dense<0x7F800000> : vector<2xf32>
    %305 = vector.multi_reduction <minimumf>, %304, %cst_84 [1] : vector<2x512xf32> to vector<2xf32>
    %306 = vector.shape_cast %305 : vector<2xf32> to vector<2x1xf32>
    %307 = arith.fptosi %306 : vector<2x1xf32> to vector<2x1xi32>
    %c5_i32 = arith.constant 5 : i32
    %308 = vector.broadcast %c5_i32 : i32 to vector<2x50xi32>
    %309 = arith.cmpi eq, %181, %308 : vector<2x50xi32>
    %310 = vector.shape_cast %300 : vector<2x1xf32> to vector<2x1xf32>
    %311 = vector.broadcast %310 : vector<2x1xf32> to vector<2x50xf32>
    %312 = arith.select %309, %311, %289 : vector<2x50xi1>, vector<2x50xf32>
    %c5_i32_85 = arith.constant 5 : i32
    %313 = vector.broadcast %c5_i32_85 : i32 to vector<2x50xi32>
    %314 = arith.cmpi eq, %181, %313 : vector<2x50xi32>
    %315 = vector.shape_cast %307 : vector<2x1xi32> to vector<2x1xi32>
    %316 = vector.broadcast %315 : vector<2x1xi32> to vector<2x50xi32>
    %317 = arith.select %314, %316, %294 : vector<2x50xi1>, vector<2x50xi32>
    %318 = vector.broadcast %307 : vector<2x1xi32> to vector<2x512xi32>
    %319 = arith.cmpi eq, %4, %318 : vector<2x512xi32>
    %cst_86 = arith.constant -3.40282347E+38 : f32
    %320 = vector.broadcast %cst_86 : f32 to vector<2x512xf32>
    %321 = arith.select %319, %320, %298 : vector<2x512xi1>, vector<2x512xf32>
    %cst_87 = arith.constant dense<0xFF800000> : vector<2xf32>
    %322 = vector.multi_reduction <maximumf>, %321, %cst_87 [1] : vector<2x512xf32> to vector<2xf32>
    %323 = vector.shape_cast %322 : vector<2xf32> to vector<2x1xf32>
    %324 = vector.broadcast %323 : vector<2x1xf32> to vector<2x512xf32>
    %325 = arith.cmpf oeq, %321, %324 : vector<2x512xf32>
    %cst_88 = arith.constant 5.120000e+02 : f32
    %326 = vector.broadcast %cst_88 : f32 to vector<2x512xf32>
    %327 = arith.select %325, %6, %326 : vector<2x512xi1>, vector<2x512xf32>
    %cst_89 = arith.constant dense<0x7F800000> : vector<2xf32>
    %328 = vector.multi_reduction <minimumf>, %327, %cst_89 [1] : vector<2x512xf32> to vector<2xf32>
    %329 = vector.shape_cast %328 : vector<2xf32> to vector<2x1xf32>
    %330 = arith.fptosi %329 : vector<2x1xf32> to vector<2x1xi32>
    %c6_i32 = arith.constant 6 : i32
    %331 = vector.broadcast %c6_i32 : i32 to vector<2x50xi32>
    %332 = arith.cmpi eq, %181, %331 : vector<2x50xi32>
    %333 = vector.shape_cast %323 : vector<2x1xf32> to vector<2x1xf32>
    %334 = vector.broadcast %333 : vector<2x1xf32> to vector<2x50xf32>
    %335 = arith.select %332, %334, %312 : vector<2x50xi1>, vector<2x50xf32>
    %c6_i32_90 = arith.constant 6 : i32
    %336 = vector.broadcast %c6_i32_90 : i32 to vector<2x50xi32>
    %337 = arith.cmpi eq, %181, %336 : vector<2x50xi32>
    %338 = vector.shape_cast %330 : vector<2x1xi32> to vector<2x1xi32>
    %339 = vector.broadcast %338 : vector<2x1xi32> to vector<2x50xi32>
    %340 = arith.select %337, %339, %317 : vector<2x50xi1>, vector<2x50xi32>
    %341 = vector.broadcast %330 : vector<2x1xi32> to vector<2x512xi32>
    %342 = arith.cmpi eq, %4, %341 : vector<2x512xi32>
    %cst_91 = arith.constant -3.40282347E+38 : f32
    %343 = vector.broadcast %cst_91 : f32 to vector<2x512xf32>
    %344 = arith.select %342, %343, %321 : vector<2x512xi1>, vector<2x512xf32>
    %cst_92 = arith.constant dense<0xFF800000> : vector<2xf32>
    %345 = vector.multi_reduction <maximumf>, %344, %cst_92 [1] : vector<2x512xf32> to vector<2xf32>
    %346 = vector.shape_cast %345 : vector<2xf32> to vector<2x1xf32>
    %347 = vector.broadcast %346 : vector<2x1xf32> to vector<2x512xf32>
    %348 = arith.cmpf oeq, %344, %347 : vector<2x512xf32>
    %cst_93 = arith.constant 5.120000e+02 : f32
    %349 = vector.broadcast %cst_93 : f32 to vector<2x512xf32>
    %350 = arith.select %348, %6, %349 : vector<2x512xi1>, vector<2x512xf32>
    %cst_94 = arith.constant dense<0x7F800000> : vector<2xf32>
    %351 = vector.multi_reduction <minimumf>, %350, %cst_94 [1] : vector<2x512xf32> to vector<2xf32>
    %352 = vector.shape_cast %351 : vector<2xf32> to vector<2x1xf32>
    %353 = arith.fptosi %352 : vector<2x1xf32> to vector<2x1xi32>
    %c7_i32 = arith.constant 7 : i32
    %354 = vector.broadcast %c7_i32 : i32 to vector<2x50xi32>
    %355 = arith.cmpi eq, %181, %354 : vector<2x50xi32>
    %356 = vector.shape_cast %346 : vector<2x1xf32> to vector<2x1xf32>
    %357 = vector.broadcast %356 : vector<2x1xf32> to vector<2x50xf32>
    %358 = arith.select %355, %357, %335 : vector<2x50xi1>, vector<2x50xf32>
    %c7_i32_95 = arith.constant 7 : i32
    %359 = vector.broadcast %c7_i32_95 : i32 to vector<2x50xi32>
    %360 = arith.cmpi eq, %181, %359 : vector<2x50xi32>
    %361 = vector.shape_cast %353 : vector<2x1xi32> to vector<2x1xi32>
    %362 = vector.broadcast %361 : vector<2x1xi32> to vector<2x50xi32>
    %363 = arith.select %360, %362, %340 : vector<2x50xi1>, vector<2x50xi32>
    %364 = vector.broadcast %353 : vector<2x1xi32> to vector<2x512xi32>
    %365 = arith.cmpi eq, %4, %364 : vector<2x512xi32>
    %cst_96 = arith.constant -3.40282347E+38 : f32
    %366 = vector.broadcast %cst_96 : f32 to vector<2x512xf32>
    %367 = arith.select %365, %366, %344 : vector<2x512xi1>, vector<2x512xf32>
    %cst_97 = arith.constant dense<0xFF800000> : vector<2xf32>
    %368 = vector.multi_reduction <maximumf>, %367, %cst_97 [1] : vector<2x512xf32> to vector<2xf32>
    %369 = vector.shape_cast %368 : vector<2xf32> to vector<2x1xf32>
    %370 = vector.broadcast %369 : vector<2x1xf32> to vector<2x512xf32>
    %371 = arith.cmpf oeq, %367, %370 : vector<2x512xf32>
    %cst_98 = arith.constant 5.120000e+02 : f32
    %372 = vector.broadcast %cst_98 : f32 to vector<2x512xf32>
    %373 = arith.select %371, %6, %372 : vector<2x512xi1>, vector<2x512xf32>
    %cst_99 = arith.constant dense<0x7F800000> : vector<2xf32>
    %374 = vector.multi_reduction <minimumf>, %373, %cst_99 [1] : vector<2x512xf32> to vector<2xf32>
    %375 = vector.shape_cast %374 : vector<2xf32> to vector<2x1xf32>
    %376 = arith.fptosi %375 : vector<2x1xf32> to vector<2x1xi32>
    %c8_i32 = arith.constant 8 : i32
    %377 = vector.broadcast %c8_i32 : i32 to vector<2x50xi32>
    %378 = arith.cmpi eq, %181, %377 : vector<2x50xi32>
    %379 = vector.shape_cast %369 : vector<2x1xf32> to vector<2x1xf32>
    %380 = vector.broadcast %379 : vector<2x1xf32> to vector<2x50xf32>
    %381 = arith.select %378, %380, %358 : vector<2x50xi1>, vector<2x50xf32>
    %c8_i32_100 = arith.constant 8 : i32
    %382 = vector.broadcast %c8_i32_100 : i32 to vector<2x50xi32>
    %383 = arith.cmpi eq, %181, %382 : vector<2x50xi32>
    %384 = vector.shape_cast %376 : vector<2x1xi32> to vector<2x1xi32>
    %385 = vector.broadcast %384 : vector<2x1xi32> to vector<2x50xi32>
    %386 = arith.select %383, %385, %363 : vector<2x50xi1>, vector<2x50xi32>
    %387 = vector.broadcast %376 : vector<2x1xi32> to vector<2x512xi32>
    %388 = arith.cmpi eq, %4, %387 : vector<2x512xi32>
    %cst_101 = arith.constant -3.40282347E+38 : f32
    %389 = vector.broadcast %cst_101 : f32 to vector<2x512xf32>
    %390 = arith.select %388, %389, %367 : vector<2x512xi1>, vector<2x512xf32>
    %cst_102 = arith.constant dense<0xFF800000> : vector<2xf32>
    %391 = vector.multi_reduction <maximumf>, %390, %cst_102 [1] : vector<2x512xf32> to vector<2xf32>
    %392 = vector.shape_cast %391 : vector<2xf32> to vector<2x1xf32>
    %393 = vector.broadcast %392 : vector<2x1xf32> to vector<2x512xf32>
    %394 = arith.cmpf oeq, %390, %393 : vector<2x512xf32>
    %cst_103 = arith.constant 5.120000e+02 : f32
    %395 = vector.broadcast %cst_103 : f32 to vector<2x512xf32>
    %396 = arith.select %394, %6, %395 : vector<2x512xi1>, vector<2x512xf32>
    %cst_104 = arith.constant dense<0x7F800000> : vector<2xf32>
    %397 = vector.multi_reduction <minimumf>, %396, %cst_104 [1] : vector<2x512xf32> to vector<2xf32>
    %398 = vector.shape_cast %397 : vector<2xf32> to vector<2x1xf32>
    %399 = arith.fptosi %398 : vector<2x1xf32> to vector<2x1xi32>
    %c9_i32 = arith.constant 9 : i32
    %400 = vector.broadcast %c9_i32 : i32 to vector<2x50xi32>
    %401 = arith.cmpi eq, %181, %400 : vector<2x50xi32>
    %402 = vector.shape_cast %392 : vector<2x1xf32> to vector<2x1xf32>
    %403 = vector.broadcast %402 : vector<2x1xf32> to vector<2x50xf32>
    %404 = arith.select %401, %403, %381 : vector<2x50xi1>, vector<2x50xf32>
    %c9_i32_105 = arith.constant 9 : i32
    %405 = vector.broadcast %c9_i32_105 : i32 to vector<2x50xi32>
    %406 = arith.cmpi eq, %181, %405 : vector<2x50xi32>
    %407 = vector.shape_cast %399 : vector<2x1xi32> to vector<2x1xi32>
    %408 = vector.broadcast %407 : vector<2x1xi32> to vector<2x50xi32>
    %409 = arith.select %406, %408, %386 : vector<2x50xi1>, vector<2x50xi32>
    %410 = vector.broadcast %399 : vector<2x1xi32> to vector<2x512xi32>
    %411 = arith.cmpi eq, %4, %410 : vector<2x512xi32>
    %cst_106 = arith.constant -3.40282347E+38 : f32
    %412 = vector.broadcast %cst_106 : f32 to vector<2x512xf32>
    %413 = arith.select %411, %412, %390 : vector<2x512xi1>, vector<2x512xf32>
    %cst_107 = arith.constant dense<0xFF800000> : vector<2xf32>
    %414 = vector.multi_reduction <maximumf>, %413, %cst_107 [1] : vector<2x512xf32> to vector<2xf32>
    %415 = vector.shape_cast %414 : vector<2xf32> to vector<2x1xf32>
    %416 = vector.broadcast %415 : vector<2x1xf32> to vector<2x512xf32>
    %417 = arith.cmpf oeq, %413, %416 : vector<2x512xf32>
    %cst_108 = arith.constant 5.120000e+02 : f32
    %418 = vector.broadcast %cst_108 : f32 to vector<2x512xf32>
    %419 = arith.select %417, %6, %418 : vector<2x512xi1>, vector<2x512xf32>
    %cst_109 = arith.constant dense<0x7F800000> : vector<2xf32>
    %420 = vector.multi_reduction <minimumf>, %419, %cst_109 [1] : vector<2x512xf32> to vector<2xf32>
    %421 = vector.shape_cast %420 : vector<2xf32> to vector<2x1xf32>
    %422 = arith.fptosi %421 : vector<2x1xf32> to vector<2x1xi32>
    %c10_i32 = arith.constant 10 : i32
    %423 = vector.broadcast %c10_i32 : i32 to vector<2x50xi32>
    %424 = arith.cmpi eq, %181, %423 : vector<2x50xi32>
    %425 = vector.shape_cast %415 : vector<2x1xf32> to vector<2x1xf32>
    %426 = vector.broadcast %425 : vector<2x1xf32> to vector<2x50xf32>
    %427 = arith.select %424, %426, %404 : vector<2x50xi1>, vector<2x50xf32>
    %c10_i32_110 = arith.constant 10 : i32
    %428 = vector.broadcast %c10_i32_110 : i32 to vector<2x50xi32>
    %429 = arith.cmpi eq, %181, %428 : vector<2x50xi32>
    %430 = vector.shape_cast %422 : vector<2x1xi32> to vector<2x1xi32>
    %431 = vector.broadcast %430 : vector<2x1xi32> to vector<2x50xi32>
    %432 = arith.select %429, %431, %409 : vector<2x50xi1>, vector<2x50xi32>
    %433 = vector.broadcast %422 : vector<2x1xi32> to vector<2x512xi32>
    %434 = arith.cmpi eq, %4, %433 : vector<2x512xi32>
    %cst_111 = arith.constant -3.40282347E+38 : f32
    %435 = vector.broadcast %cst_111 : f32 to vector<2x512xf32>
    %436 = arith.select %434, %435, %413 : vector<2x512xi1>, vector<2x512xf32>
    %cst_112 = arith.constant dense<0xFF800000> : vector<2xf32>
    %437 = vector.multi_reduction <maximumf>, %436, %cst_112 [1] : vector<2x512xf32> to vector<2xf32>
    %438 = vector.shape_cast %437 : vector<2xf32> to vector<2x1xf32>
    %439 = vector.broadcast %438 : vector<2x1xf32> to vector<2x512xf32>
    %440 = arith.cmpf oeq, %436, %439 : vector<2x512xf32>
    %cst_113 = arith.constant 5.120000e+02 : f32
    %441 = vector.broadcast %cst_113 : f32 to vector<2x512xf32>
    %442 = arith.select %440, %6, %441 : vector<2x512xi1>, vector<2x512xf32>
    %cst_114 = arith.constant dense<0x7F800000> : vector<2xf32>
    %443 = vector.multi_reduction <minimumf>, %442, %cst_114 [1] : vector<2x512xf32> to vector<2xf32>
    %444 = vector.shape_cast %443 : vector<2xf32> to vector<2x1xf32>
    %445 = arith.fptosi %444 : vector<2x1xf32> to vector<2x1xi32>
    %c11_i32 = arith.constant 11 : i32
    %446 = vector.broadcast %c11_i32 : i32 to vector<2x50xi32>
    %447 = arith.cmpi eq, %181, %446 : vector<2x50xi32>
    %448 = vector.shape_cast %438 : vector<2x1xf32> to vector<2x1xf32>
    %449 = vector.broadcast %448 : vector<2x1xf32> to vector<2x50xf32>
    %450 = arith.select %447, %449, %427 : vector<2x50xi1>, vector<2x50xf32>
    %c11_i32_115 = arith.constant 11 : i32
    %451 = vector.broadcast %c11_i32_115 : i32 to vector<2x50xi32>
    %452 = arith.cmpi eq, %181, %451 : vector<2x50xi32>
    %453 = vector.shape_cast %445 : vector<2x1xi32> to vector<2x1xi32>
    %454 = vector.broadcast %453 : vector<2x1xi32> to vector<2x50xi32>
    %455 = arith.select %452, %454, %432 : vector<2x50xi1>, vector<2x50xi32>
    %456 = vector.broadcast %445 : vector<2x1xi32> to vector<2x512xi32>
    %457 = arith.cmpi eq, %4, %456 : vector<2x512xi32>
    %cst_116 = arith.constant -3.40282347E+38 : f32
    %458 = vector.broadcast %cst_116 : f32 to vector<2x512xf32>
    %459 = arith.select %457, %458, %436 : vector<2x512xi1>, vector<2x512xf32>
    %cst_117 = arith.constant dense<0xFF800000> : vector<2xf32>
    %460 = vector.multi_reduction <maximumf>, %459, %cst_117 [1] : vector<2x512xf32> to vector<2xf32>
    %461 = vector.shape_cast %460 : vector<2xf32> to vector<2x1xf32>
    %462 = vector.broadcast %461 : vector<2x1xf32> to vector<2x512xf32>
    %463 = arith.cmpf oeq, %459, %462 : vector<2x512xf32>
    %cst_118 = arith.constant 5.120000e+02 : f32
    %464 = vector.broadcast %cst_118 : f32 to vector<2x512xf32>
    %465 = arith.select %463, %6, %464 : vector<2x512xi1>, vector<2x512xf32>
    %cst_119 = arith.constant dense<0x7F800000> : vector<2xf32>
    %466 = vector.multi_reduction <minimumf>, %465, %cst_119 [1] : vector<2x512xf32> to vector<2xf32>
    %467 = vector.shape_cast %466 : vector<2xf32> to vector<2x1xf32>
    %468 = arith.fptosi %467 : vector<2x1xf32> to vector<2x1xi32>
    %c12_i32 = arith.constant 12 : i32
    %469 = vector.broadcast %c12_i32 : i32 to vector<2x50xi32>
    %470 = arith.cmpi eq, %181, %469 : vector<2x50xi32>
    %471 = vector.shape_cast %461 : vector<2x1xf32> to vector<2x1xf32>
    %472 = vector.broadcast %471 : vector<2x1xf32> to vector<2x50xf32>
    %473 = arith.select %470, %472, %450 : vector<2x50xi1>, vector<2x50xf32>
    %c12_i32_120 = arith.constant 12 : i32
    %474 = vector.broadcast %c12_i32_120 : i32 to vector<2x50xi32>
    %475 = arith.cmpi eq, %181, %474 : vector<2x50xi32>
    %476 = vector.shape_cast %468 : vector<2x1xi32> to vector<2x1xi32>
    %477 = vector.broadcast %476 : vector<2x1xi32> to vector<2x50xi32>
    %478 = arith.select %475, %477, %455 : vector<2x50xi1>, vector<2x50xi32>
    %479 = vector.broadcast %468 : vector<2x1xi32> to vector<2x512xi32>
    %480 = arith.cmpi eq, %4, %479 : vector<2x512xi32>
    %cst_121 = arith.constant -3.40282347E+38 : f32
    %481 = vector.broadcast %cst_121 : f32 to vector<2x512xf32>
    %482 = arith.select %480, %481, %459 : vector<2x512xi1>, vector<2x512xf32>
    %cst_122 = arith.constant dense<0xFF800000> : vector<2xf32>
    %483 = vector.multi_reduction <maximumf>, %482, %cst_122 [1] : vector<2x512xf32> to vector<2xf32>
    %484 = vector.shape_cast %483 : vector<2xf32> to vector<2x1xf32>
    %485 = vector.broadcast %484 : vector<2x1xf32> to vector<2x512xf32>
    %486 = arith.cmpf oeq, %482, %485 : vector<2x512xf32>
    %cst_123 = arith.constant 5.120000e+02 : f32
    %487 = vector.broadcast %cst_123 : f32 to vector<2x512xf32>
    %488 = arith.select %486, %6, %487 : vector<2x512xi1>, vector<2x512xf32>
    %cst_124 = arith.constant dense<0x7F800000> : vector<2xf32>
    %489 = vector.multi_reduction <minimumf>, %488, %cst_124 [1] : vector<2x512xf32> to vector<2xf32>
    %490 = vector.shape_cast %489 : vector<2xf32> to vector<2x1xf32>
    %491 = arith.fptosi %490 : vector<2x1xf32> to vector<2x1xi32>
    %c13_i32 = arith.constant 13 : i32
    %492 = vector.broadcast %c13_i32 : i32 to vector<2x50xi32>
    %493 = arith.cmpi eq, %181, %492 : vector<2x50xi32>
    %494 = vector.shape_cast %484 : vector<2x1xf32> to vector<2x1xf32>
    %495 = vector.broadcast %494 : vector<2x1xf32> to vector<2x50xf32>
    %496 = arith.select %493, %495, %473 : vector<2x50xi1>, vector<2x50xf32>
    %c13_i32_125 = arith.constant 13 : i32
    %497 = vector.broadcast %c13_i32_125 : i32 to vector<2x50xi32>
    %498 = arith.cmpi eq, %181, %497 : vector<2x50xi32>
    %499 = vector.shape_cast %491 : vector<2x1xi32> to vector<2x1xi32>
    %500 = vector.broadcast %499 : vector<2x1xi32> to vector<2x50xi32>
    %501 = arith.select %498, %500, %478 : vector<2x50xi1>, vector<2x50xi32>
    %502 = vector.broadcast %491 : vector<2x1xi32> to vector<2x512xi32>
    %503 = arith.cmpi eq, %4, %502 : vector<2x512xi32>
    %cst_126 = arith.constant -3.40282347E+38 : f32
    %504 = vector.broadcast %cst_126 : f32 to vector<2x512xf32>
    %505 = arith.select %503, %504, %482 : vector<2x512xi1>, vector<2x512xf32>
    %cst_127 = arith.constant dense<0xFF800000> : vector<2xf32>
    %506 = vector.multi_reduction <maximumf>, %505, %cst_127 [1] : vector<2x512xf32> to vector<2xf32>
    %507 = vector.shape_cast %506 : vector<2xf32> to vector<2x1xf32>
    %508 = vector.broadcast %507 : vector<2x1xf32> to vector<2x512xf32>
    %509 = arith.cmpf oeq, %505, %508 : vector<2x512xf32>
    %cst_128 = arith.constant 5.120000e+02 : f32
    %510 = vector.broadcast %cst_128 : f32 to vector<2x512xf32>
    %511 = arith.select %509, %6, %510 : vector<2x512xi1>, vector<2x512xf32>
    %cst_129 = arith.constant dense<0x7F800000> : vector<2xf32>
    %512 = vector.multi_reduction <minimumf>, %511, %cst_129 [1] : vector<2x512xf32> to vector<2xf32>
    %513 = vector.shape_cast %512 : vector<2xf32> to vector<2x1xf32>
    %514 = arith.fptosi %513 : vector<2x1xf32> to vector<2x1xi32>
    %c14_i32 = arith.constant 14 : i32
    %515 = vector.broadcast %c14_i32 : i32 to vector<2x50xi32>
    %516 = arith.cmpi eq, %181, %515 : vector<2x50xi32>
    %517 = vector.shape_cast %507 : vector<2x1xf32> to vector<2x1xf32>
    %518 = vector.broadcast %517 : vector<2x1xf32> to vector<2x50xf32>
    %519 = arith.select %516, %518, %496 : vector<2x50xi1>, vector<2x50xf32>
    %c14_i32_130 = arith.constant 14 : i32
    %520 = vector.broadcast %c14_i32_130 : i32 to vector<2x50xi32>
    %521 = arith.cmpi eq, %181, %520 : vector<2x50xi32>
    %522 = vector.shape_cast %514 : vector<2x1xi32> to vector<2x1xi32>
    %523 = vector.broadcast %522 : vector<2x1xi32> to vector<2x50xi32>
    %524 = arith.select %521, %523, %501 : vector<2x50xi1>, vector<2x50xi32>
    %525 = vector.broadcast %514 : vector<2x1xi32> to vector<2x512xi32>
    %526 = arith.cmpi eq, %4, %525 : vector<2x512xi32>
    %cst_131 = arith.constant -3.40282347E+38 : f32
    %527 = vector.broadcast %cst_131 : f32 to vector<2x512xf32>
    %528 = arith.select %526, %527, %505 : vector<2x512xi1>, vector<2x512xf32>
    %cst_132 = arith.constant dense<0xFF800000> : vector<2xf32>
    %529 = vector.multi_reduction <maximumf>, %528, %cst_132 [1] : vector<2x512xf32> to vector<2xf32>
    %530 = vector.shape_cast %529 : vector<2xf32> to vector<2x1xf32>
    %531 = vector.broadcast %530 : vector<2x1xf32> to vector<2x512xf32>
    %532 = arith.cmpf oeq, %528, %531 : vector<2x512xf32>
    %cst_133 = arith.constant 5.120000e+02 : f32
    %533 = vector.broadcast %cst_133 : f32 to vector<2x512xf32>
    %534 = arith.select %532, %6, %533 : vector<2x512xi1>, vector<2x512xf32>
    %cst_134 = arith.constant dense<0x7F800000> : vector<2xf32>
    %535 = vector.multi_reduction <minimumf>, %534, %cst_134 [1] : vector<2x512xf32> to vector<2xf32>
    %536 = vector.shape_cast %535 : vector<2xf32> to vector<2x1xf32>
    %537 = arith.fptosi %536 : vector<2x1xf32> to vector<2x1xi32>
    %c15_i32 = arith.constant 15 : i32
    %538 = vector.broadcast %c15_i32 : i32 to vector<2x50xi32>
    %539 = arith.cmpi eq, %181, %538 : vector<2x50xi32>
    %540 = vector.shape_cast %530 : vector<2x1xf32> to vector<2x1xf32>
    %541 = vector.broadcast %540 : vector<2x1xf32> to vector<2x50xf32>
    %542 = arith.select %539, %541, %519 : vector<2x50xi1>, vector<2x50xf32>
    %c15_i32_135 = arith.constant 15 : i32
    %543 = vector.broadcast %c15_i32_135 : i32 to vector<2x50xi32>
    %544 = arith.cmpi eq, %181, %543 : vector<2x50xi32>
    %545 = vector.shape_cast %537 : vector<2x1xi32> to vector<2x1xi32>
    %546 = vector.broadcast %545 : vector<2x1xi32> to vector<2x50xi32>
    %547 = arith.select %544, %546, %524 : vector<2x50xi1>, vector<2x50xi32>
    %548 = vector.broadcast %537 : vector<2x1xi32> to vector<2x512xi32>
    %549 = arith.cmpi eq, %4, %548 : vector<2x512xi32>
    %cst_136 = arith.constant -3.40282347E+38 : f32
    %550 = vector.broadcast %cst_136 : f32 to vector<2x512xf32>
    %551 = arith.select %549, %550, %528 : vector<2x512xi1>, vector<2x512xf32>
    %cst_137 = arith.constant dense<0xFF800000> : vector<2xf32>
    %552 = vector.multi_reduction <maximumf>, %551, %cst_137 [1] : vector<2x512xf32> to vector<2xf32>
    %553 = vector.shape_cast %552 : vector<2xf32> to vector<2x1xf32>
    %554 = vector.broadcast %553 : vector<2x1xf32> to vector<2x512xf32>
    %555 = arith.cmpf oeq, %551, %554 : vector<2x512xf32>
    %cst_138 = arith.constant 5.120000e+02 : f32
    %556 = vector.broadcast %cst_138 : f32 to vector<2x512xf32>
    %557 = arith.select %555, %6, %556 : vector<2x512xi1>, vector<2x512xf32>
    %cst_139 = arith.constant dense<0x7F800000> : vector<2xf32>
    %558 = vector.multi_reduction <minimumf>, %557, %cst_139 [1] : vector<2x512xf32> to vector<2xf32>
    %559 = vector.shape_cast %558 : vector<2xf32> to vector<2x1xf32>
    %560 = arith.fptosi %559 : vector<2x1xf32> to vector<2x1xi32>
    %c16_i32 = arith.constant 16 : i32
    %561 = vector.broadcast %c16_i32 : i32 to vector<2x50xi32>
    %562 = arith.cmpi eq, %181, %561 : vector<2x50xi32>
    %563 = vector.shape_cast %553 : vector<2x1xf32> to vector<2x1xf32>
    %564 = vector.broadcast %563 : vector<2x1xf32> to vector<2x50xf32>
    %565 = arith.select %562, %564, %542 : vector<2x50xi1>, vector<2x50xf32>
    %c16_i32_140 = arith.constant 16 : i32
    %566 = vector.broadcast %c16_i32_140 : i32 to vector<2x50xi32>
    %567 = arith.cmpi eq, %181, %566 : vector<2x50xi32>
    %568 = vector.shape_cast %560 : vector<2x1xi32> to vector<2x1xi32>
    %569 = vector.broadcast %568 : vector<2x1xi32> to vector<2x50xi32>
    %570 = arith.select %567, %569, %547 : vector<2x50xi1>, vector<2x50xi32>
    %571 = vector.broadcast %560 : vector<2x1xi32> to vector<2x512xi32>
    %572 = arith.cmpi eq, %4, %571 : vector<2x512xi32>
    %cst_141 = arith.constant -3.40282347E+38 : f32
    %573 = vector.broadcast %cst_141 : f32 to vector<2x512xf32>
    %574 = arith.select %572, %573, %551 : vector<2x512xi1>, vector<2x512xf32>
    %cst_142 = arith.constant dense<0xFF800000> : vector<2xf32>
    %575 = vector.multi_reduction <maximumf>, %574, %cst_142 [1] : vector<2x512xf32> to vector<2xf32>
    %576 = vector.shape_cast %575 : vector<2xf32> to vector<2x1xf32>
    %577 = vector.broadcast %576 : vector<2x1xf32> to vector<2x512xf32>
    %578 = arith.cmpf oeq, %574, %577 : vector<2x512xf32>
    %cst_143 = arith.constant 5.120000e+02 : f32
    %579 = vector.broadcast %cst_143 : f32 to vector<2x512xf32>
    %580 = arith.select %578, %6, %579 : vector<2x512xi1>, vector<2x512xf32>
    %cst_144 = arith.constant dense<0x7F800000> : vector<2xf32>
    %581 = vector.multi_reduction <minimumf>, %580, %cst_144 [1] : vector<2x512xf32> to vector<2xf32>
    %582 = vector.shape_cast %581 : vector<2xf32> to vector<2x1xf32>
    %583 = arith.fptosi %582 : vector<2x1xf32> to vector<2x1xi32>
    %c17_i32 = arith.constant 17 : i32
    %584 = vector.broadcast %c17_i32 : i32 to vector<2x50xi32>
    %585 = arith.cmpi eq, %181, %584 : vector<2x50xi32>
    %586 = vector.shape_cast %576 : vector<2x1xf32> to vector<2x1xf32>
    %587 = vector.broadcast %586 : vector<2x1xf32> to vector<2x50xf32>
    %588 = arith.select %585, %587, %565 : vector<2x50xi1>, vector<2x50xf32>
    %c17_i32_145 = arith.constant 17 : i32
    %589 = vector.broadcast %c17_i32_145 : i32 to vector<2x50xi32>
    %590 = arith.cmpi eq, %181, %589 : vector<2x50xi32>
    %591 = vector.shape_cast %583 : vector<2x1xi32> to vector<2x1xi32>
    %592 = vector.broadcast %591 : vector<2x1xi32> to vector<2x50xi32>
    %593 = arith.select %590, %592, %570 : vector<2x50xi1>, vector<2x50xi32>
    %594 = vector.broadcast %583 : vector<2x1xi32> to vector<2x512xi32>
    %595 = arith.cmpi eq, %4, %594 : vector<2x512xi32>
    %cst_146 = arith.constant -3.40282347E+38 : f32
    %596 = vector.broadcast %cst_146 : f32 to vector<2x512xf32>
    %597 = arith.select %595, %596, %574 : vector<2x512xi1>, vector<2x512xf32>
    %cst_147 = arith.constant dense<0xFF800000> : vector<2xf32>
    %598 = vector.multi_reduction <maximumf>, %597, %cst_147 [1] : vector<2x512xf32> to vector<2xf32>
    %599 = vector.shape_cast %598 : vector<2xf32> to vector<2x1xf32>
    %600 = vector.broadcast %599 : vector<2x1xf32> to vector<2x512xf32>
    %601 = arith.cmpf oeq, %597, %600 : vector<2x512xf32>
    %cst_148 = arith.constant 5.120000e+02 : f32
    %602 = vector.broadcast %cst_148 : f32 to vector<2x512xf32>
    %603 = arith.select %601, %6, %602 : vector<2x512xi1>, vector<2x512xf32>
    %cst_149 = arith.constant dense<0x7F800000> : vector<2xf32>
    %604 = vector.multi_reduction <minimumf>, %603, %cst_149 [1] : vector<2x512xf32> to vector<2xf32>
    %605 = vector.shape_cast %604 : vector<2xf32> to vector<2x1xf32>
    %606 = arith.fptosi %605 : vector<2x1xf32> to vector<2x1xi32>
    %c18_i32 = arith.constant 18 : i32
    %607 = vector.broadcast %c18_i32 : i32 to vector<2x50xi32>
    %608 = arith.cmpi eq, %181, %607 : vector<2x50xi32>
    %609 = vector.shape_cast %599 : vector<2x1xf32> to vector<2x1xf32>
    %610 = vector.broadcast %609 : vector<2x1xf32> to vector<2x50xf32>
    %611 = arith.select %608, %610, %588 : vector<2x50xi1>, vector<2x50xf32>
    %c18_i32_150 = arith.constant 18 : i32
    %612 = vector.broadcast %c18_i32_150 : i32 to vector<2x50xi32>
    %613 = arith.cmpi eq, %181, %612 : vector<2x50xi32>
    %614 = vector.shape_cast %606 : vector<2x1xi32> to vector<2x1xi32>
    %615 = vector.broadcast %614 : vector<2x1xi32> to vector<2x50xi32>
    %616 = arith.select %613, %615, %593 : vector<2x50xi1>, vector<2x50xi32>
    %617 = vector.broadcast %606 : vector<2x1xi32> to vector<2x512xi32>
    %618 = arith.cmpi eq, %4, %617 : vector<2x512xi32>
    %cst_151 = arith.constant -3.40282347E+38 : f32
    %619 = vector.broadcast %cst_151 : f32 to vector<2x512xf32>
    %620 = arith.select %618, %619, %597 : vector<2x512xi1>, vector<2x512xf32>
    %cst_152 = arith.constant dense<0xFF800000> : vector<2xf32>
    %621 = vector.multi_reduction <maximumf>, %620, %cst_152 [1] : vector<2x512xf32> to vector<2xf32>
    %622 = vector.shape_cast %621 : vector<2xf32> to vector<2x1xf32>
    %623 = vector.broadcast %622 : vector<2x1xf32> to vector<2x512xf32>
    %624 = arith.cmpf oeq, %620, %623 : vector<2x512xf32>
    %cst_153 = arith.constant 5.120000e+02 : f32
    %625 = vector.broadcast %cst_153 : f32 to vector<2x512xf32>
    %626 = arith.select %624, %6, %625 : vector<2x512xi1>, vector<2x512xf32>
    %cst_154 = arith.constant dense<0x7F800000> : vector<2xf32>
    %627 = vector.multi_reduction <minimumf>, %626, %cst_154 [1] : vector<2x512xf32> to vector<2xf32>
    %628 = vector.shape_cast %627 : vector<2xf32> to vector<2x1xf32>
    %629 = arith.fptosi %628 : vector<2x1xf32> to vector<2x1xi32>
    %c19_i32 = arith.constant 19 : i32
    %630 = vector.broadcast %c19_i32 : i32 to vector<2x50xi32>
    %631 = arith.cmpi eq, %181, %630 : vector<2x50xi32>
    %632 = vector.shape_cast %622 : vector<2x1xf32> to vector<2x1xf32>
    %633 = vector.broadcast %632 : vector<2x1xf32> to vector<2x50xf32>
    %634 = arith.select %631, %633, %611 : vector<2x50xi1>, vector<2x50xf32>
    %c19_i32_155 = arith.constant 19 : i32
    %635 = vector.broadcast %c19_i32_155 : i32 to vector<2x50xi32>
    %636 = arith.cmpi eq, %181, %635 : vector<2x50xi32>
    %637 = vector.shape_cast %629 : vector<2x1xi32> to vector<2x1xi32>
    %638 = vector.broadcast %637 : vector<2x1xi32> to vector<2x50xi32>
    %639 = arith.select %636, %638, %616 : vector<2x50xi1>, vector<2x50xi32>
    %640 = vector.broadcast %629 : vector<2x1xi32> to vector<2x512xi32>
    %641 = arith.cmpi eq, %4, %640 : vector<2x512xi32>
    %cst_156 = arith.constant -3.40282347E+38 : f32
    %642 = vector.broadcast %cst_156 : f32 to vector<2x512xf32>
    %643 = arith.select %641, %642, %620 : vector<2x512xi1>, vector<2x512xf32>
    %cst_157 = arith.constant dense<0xFF800000> : vector<2xf32>
    %644 = vector.multi_reduction <maximumf>, %643, %cst_157 [1] : vector<2x512xf32> to vector<2xf32>
    %645 = vector.shape_cast %644 : vector<2xf32> to vector<2x1xf32>
    %646 = vector.broadcast %645 : vector<2x1xf32> to vector<2x512xf32>
    %647 = arith.cmpf oeq, %643, %646 : vector<2x512xf32>
    %cst_158 = arith.constant 5.120000e+02 : f32
    %648 = vector.broadcast %cst_158 : f32 to vector<2x512xf32>
    %649 = arith.select %647, %6, %648 : vector<2x512xi1>, vector<2x512xf32>
    %cst_159 = arith.constant dense<0x7F800000> : vector<2xf32>
    %650 = vector.multi_reduction <minimumf>, %649, %cst_159 [1] : vector<2x512xf32> to vector<2xf32>
    %651 = vector.shape_cast %650 : vector<2xf32> to vector<2x1xf32>
    %652 = arith.fptosi %651 : vector<2x1xf32> to vector<2x1xi32>
    %c20_i32 = arith.constant 20 : i32
    %653 = vector.broadcast %c20_i32 : i32 to vector<2x50xi32>
    %654 = arith.cmpi eq, %181, %653 : vector<2x50xi32>
    %655 = vector.shape_cast %645 : vector<2x1xf32> to vector<2x1xf32>
    %656 = vector.broadcast %655 : vector<2x1xf32> to vector<2x50xf32>
    %657 = arith.select %654, %656, %634 : vector<2x50xi1>, vector<2x50xf32>
    %c20_i32_160 = arith.constant 20 : i32
    %658 = vector.broadcast %c20_i32_160 : i32 to vector<2x50xi32>
    %659 = arith.cmpi eq, %181, %658 : vector<2x50xi32>
    %660 = vector.shape_cast %652 : vector<2x1xi32> to vector<2x1xi32>
    %661 = vector.broadcast %660 : vector<2x1xi32> to vector<2x50xi32>
    %662 = arith.select %659, %661, %639 : vector<2x50xi1>, vector<2x50xi32>
    %663 = vector.broadcast %652 : vector<2x1xi32> to vector<2x512xi32>
    %664 = arith.cmpi eq, %4, %663 : vector<2x512xi32>
    %cst_161 = arith.constant -3.40282347E+38 : f32
    %665 = vector.broadcast %cst_161 : f32 to vector<2x512xf32>
    %666 = arith.select %664, %665, %643 : vector<2x512xi1>, vector<2x512xf32>
    %cst_162 = arith.constant dense<0xFF800000> : vector<2xf32>
    %667 = vector.multi_reduction <maximumf>, %666, %cst_162 [1] : vector<2x512xf32> to vector<2xf32>
    %668 = vector.shape_cast %667 : vector<2xf32> to vector<2x1xf32>
    %669 = vector.broadcast %668 : vector<2x1xf32> to vector<2x512xf32>
    %670 = arith.cmpf oeq, %666, %669 : vector<2x512xf32>
    %cst_163 = arith.constant 5.120000e+02 : f32
    %671 = vector.broadcast %cst_163 : f32 to vector<2x512xf32>
    %672 = arith.select %670, %6, %671 : vector<2x512xi1>, vector<2x512xf32>
    %cst_164 = arith.constant dense<0x7F800000> : vector<2xf32>
    %673 = vector.multi_reduction <minimumf>, %672, %cst_164 [1] : vector<2x512xf32> to vector<2xf32>
    %674 = vector.shape_cast %673 : vector<2xf32> to vector<2x1xf32>
    %675 = arith.fptosi %674 : vector<2x1xf32> to vector<2x1xi32>
    %c21_i32 = arith.constant 21 : i32
    %676 = vector.broadcast %c21_i32 : i32 to vector<2x50xi32>
    %677 = arith.cmpi eq, %181, %676 : vector<2x50xi32>
    %678 = vector.shape_cast %668 : vector<2x1xf32> to vector<2x1xf32>
    %679 = vector.broadcast %678 : vector<2x1xf32> to vector<2x50xf32>
    %680 = arith.select %677, %679, %657 : vector<2x50xi1>, vector<2x50xf32>
    %c21_i32_165 = arith.constant 21 : i32
    %681 = vector.broadcast %c21_i32_165 : i32 to vector<2x50xi32>
    %682 = arith.cmpi eq, %181, %681 : vector<2x50xi32>
    %683 = vector.shape_cast %675 : vector<2x1xi32> to vector<2x1xi32>
    %684 = vector.broadcast %683 : vector<2x1xi32> to vector<2x50xi32>
    %685 = arith.select %682, %684, %662 : vector<2x50xi1>, vector<2x50xi32>
    %686 = vector.broadcast %675 : vector<2x1xi32> to vector<2x512xi32>
    %687 = arith.cmpi eq, %4, %686 : vector<2x512xi32>
    %cst_166 = arith.constant -3.40282347E+38 : f32
    %688 = vector.broadcast %cst_166 : f32 to vector<2x512xf32>
    %689 = arith.select %687, %688, %666 : vector<2x512xi1>, vector<2x512xf32>
    %cst_167 = arith.constant dense<0xFF800000> : vector<2xf32>
    %690 = vector.multi_reduction <maximumf>, %689, %cst_167 [1] : vector<2x512xf32> to vector<2xf32>
    %691 = vector.shape_cast %690 : vector<2xf32> to vector<2x1xf32>
    %692 = vector.broadcast %691 : vector<2x1xf32> to vector<2x512xf32>
    %693 = arith.cmpf oeq, %689, %692 : vector<2x512xf32>
    %cst_168 = arith.constant 5.120000e+02 : f32
    %694 = vector.broadcast %cst_168 : f32 to vector<2x512xf32>
    %695 = arith.select %693, %6, %694 : vector<2x512xi1>, vector<2x512xf32>
    %cst_169 = arith.constant dense<0x7F800000> : vector<2xf32>
    %696 = vector.multi_reduction <minimumf>, %695, %cst_169 [1] : vector<2x512xf32> to vector<2xf32>
    %697 = vector.shape_cast %696 : vector<2xf32> to vector<2x1xf32>
    %698 = arith.fptosi %697 : vector<2x1xf32> to vector<2x1xi32>
    %c22_i32 = arith.constant 22 : i32
    %699 = vector.broadcast %c22_i32 : i32 to vector<2x50xi32>
    %700 = arith.cmpi eq, %181, %699 : vector<2x50xi32>
    %701 = vector.shape_cast %691 : vector<2x1xf32> to vector<2x1xf32>
    %702 = vector.broadcast %701 : vector<2x1xf32> to vector<2x50xf32>
    %703 = arith.select %700, %702, %680 : vector<2x50xi1>, vector<2x50xf32>
    %c22_i32_170 = arith.constant 22 : i32
    %704 = vector.broadcast %c22_i32_170 : i32 to vector<2x50xi32>
    %705 = arith.cmpi eq, %181, %704 : vector<2x50xi32>
    %706 = vector.shape_cast %698 : vector<2x1xi32> to vector<2x1xi32>
    %707 = vector.broadcast %706 : vector<2x1xi32> to vector<2x50xi32>
    %708 = arith.select %705, %707, %685 : vector<2x50xi1>, vector<2x50xi32>
    %709 = vector.broadcast %698 : vector<2x1xi32> to vector<2x512xi32>
    %710 = arith.cmpi eq, %4, %709 : vector<2x512xi32>
    %cst_171 = arith.constant -3.40282347E+38 : f32
    %711 = vector.broadcast %cst_171 : f32 to vector<2x512xf32>
    %712 = arith.select %710, %711, %689 : vector<2x512xi1>, vector<2x512xf32>
    %cst_172 = arith.constant dense<0xFF800000> : vector<2xf32>
    %713 = vector.multi_reduction <maximumf>, %712, %cst_172 [1] : vector<2x512xf32> to vector<2xf32>
    %714 = vector.shape_cast %713 : vector<2xf32> to vector<2x1xf32>
    %715 = vector.broadcast %714 : vector<2x1xf32> to vector<2x512xf32>
    %716 = arith.cmpf oeq, %712, %715 : vector<2x512xf32>
    %cst_173 = arith.constant 5.120000e+02 : f32
    %717 = vector.broadcast %cst_173 : f32 to vector<2x512xf32>
    %718 = arith.select %716, %6, %717 : vector<2x512xi1>, vector<2x512xf32>
    %cst_174 = arith.constant dense<0x7F800000> : vector<2xf32>
    %719 = vector.multi_reduction <minimumf>, %718, %cst_174 [1] : vector<2x512xf32> to vector<2xf32>
    %720 = vector.shape_cast %719 : vector<2xf32> to vector<2x1xf32>
    %721 = arith.fptosi %720 : vector<2x1xf32> to vector<2x1xi32>
    %c23_i32 = arith.constant 23 : i32
    %722 = vector.broadcast %c23_i32 : i32 to vector<2x50xi32>
    %723 = arith.cmpi eq, %181, %722 : vector<2x50xi32>
    %724 = vector.shape_cast %714 : vector<2x1xf32> to vector<2x1xf32>
    %725 = vector.broadcast %724 : vector<2x1xf32> to vector<2x50xf32>
    %726 = arith.select %723, %725, %703 : vector<2x50xi1>, vector<2x50xf32>
    %c23_i32_175 = arith.constant 23 : i32
    %727 = vector.broadcast %c23_i32_175 : i32 to vector<2x50xi32>
    %728 = arith.cmpi eq, %181, %727 : vector<2x50xi32>
    %729 = vector.shape_cast %721 : vector<2x1xi32> to vector<2x1xi32>
    %730 = vector.broadcast %729 : vector<2x1xi32> to vector<2x50xi32>
    %731 = arith.select %728, %730, %708 : vector<2x50xi1>, vector<2x50xi32>
    %732 = vector.broadcast %721 : vector<2x1xi32> to vector<2x512xi32>
    %733 = arith.cmpi eq, %4, %732 : vector<2x512xi32>
    %cst_176 = arith.constant -3.40282347E+38 : f32
    %734 = vector.broadcast %cst_176 : f32 to vector<2x512xf32>
    %735 = arith.select %733, %734, %712 : vector<2x512xi1>, vector<2x512xf32>
    %cst_177 = arith.constant dense<0xFF800000> : vector<2xf32>
    %736 = vector.multi_reduction <maximumf>, %735, %cst_177 [1] : vector<2x512xf32> to vector<2xf32>
    %737 = vector.shape_cast %736 : vector<2xf32> to vector<2x1xf32>
    %738 = vector.broadcast %737 : vector<2x1xf32> to vector<2x512xf32>
    %739 = arith.cmpf oeq, %735, %738 : vector<2x512xf32>
    %cst_178 = arith.constant 5.120000e+02 : f32
    %740 = vector.broadcast %cst_178 : f32 to vector<2x512xf32>
    %741 = arith.select %739, %6, %740 : vector<2x512xi1>, vector<2x512xf32>
    %cst_179 = arith.constant dense<0x7F800000> : vector<2xf32>
    %742 = vector.multi_reduction <minimumf>, %741, %cst_179 [1] : vector<2x512xf32> to vector<2xf32>
    %743 = vector.shape_cast %742 : vector<2xf32> to vector<2x1xf32>
    %744 = arith.fptosi %743 : vector<2x1xf32> to vector<2x1xi32>
    %c24_i32 = arith.constant 24 : i32
    %745 = vector.broadcast %c24_i32 : i32 to vector<2x50xi32>
    %746 = arith.cmpi eq, %181, %745 : vector<2x50xi32>
    %747 = vector.shape_cast %737 : vector<2x1xf32> to vector<2x1xf32>
    %748 = vector.broadcast %747 : vector<2x1xf32> to vector<2x50xf32>
    %749 = arith.select %746, %748, %726 : vector<2x50xi1>, vector<2x50xf32>
    %c24_i32_180 = arith.constant 24 : i32
    %750 = vector.broadcast %c24_i32_180 : i32 to vector<2x50xi32>
    %751 = arith.cmpi eq, %181, %750 : vector<2x50xi32>
    %752 = vector.shape_cast %744 : vector<2x1xi32> to vector<2x1xi32>
    %753 = vector.broadcast %752 : vector<2x1xi32> to vector<2x50xi32>
    %754 = arith.select %751, %753, %731 : vector<2x50xi1>, vector<2x50xi32>
    %755 = vector.broadcast %744 : vector<2x1xi32> to vector<2x512xi32>
    %756 = arith.cmpi eq, %4, %755 : vector<2x512xi32>
    %cst_181 = arith.constant -3.40282347E+38 : f32
    %757 = vector.broadcast %cst_181 : f32 to vector<2x512xf32>
    %758 = arith.select %756, %757, %735 : vector<2x512xi1>, vector<2x512xf32>
    %cst_182 = arith.constant dense<0xFF800000> : vector<2xf32>
    %759 = vector.multi_reduction <maximumf>, %758, %cst_182 [1] : vector<2x512xf32> to vector<2xf32>
    %760 = vector.shape_cast %759 : vector<2xf32> to vector<2x1xf32>
    %761 = vector.broadcast %760 : vector<2x1xf32> to vector<2x512xf32>
    %762 = arith.cmpf oeq, %758, %761 : vector<2x512xf32>
    %cst_183 = arith.constant 5.120000e+02 : f32
    %763 = vector.broadcast %cst_183 : f32 to vector<2x512xf32>
    %764 = arith.select %762, %6, %763 : vector<2x512xi1>, vector<2x512xf32>
    %cst_184 = arith.constant dense<0x7F800000> : vector<2xf32>
    %765 = vector.multi_reduction <minimumf>, %764, %cst_184 [1] : vector<2x512xf32> to vector<2xf32>
    %766 = vector.shape_cast %765 : vector<2xf32> to vector<2x1xf32>
    %767 = arith.fptosi %766 : vector<2x1xf32> to vector<2x1xi32>
    %c25_i32 = arith.constant 25 : i32
    %768 = vector.broadcast %c25_i32 : i32 to vector<2x50xi32>
    %769 = arith.cmpi eq, %181, %768 : vector<2x50xi32>
    %770 = vector.shape_cast %760 : vector<2x1xf32> to vector<2x1xf32>
    %771 = vector.broadcast %770 : vector<2x1xf32> to vector<2x50xf32>
    %772 = arith.select %769, %771, %749 : vector<2x50xi1>, vector<2x50xf32>
    %c25_i32_185 = arith.constant 25 : i32
    %773 = vector.broadcast %c25_i32_185 : i32 to vector<2x50xi32>
    %774 = arith.cmpi eq, %181, %773 : vector<2x50xi32>
    %775 = vector.shape_cast %767 : vector<2x1xi32> to vector<2x1xi32>
    %776 = vector.broadcast %775 : vector<2x1xi32> to vector<2x50xi32>
    %777 = arith.select %774, %776, %754 : vector<2x50xi1>, vector<2x50xi32>
    %778 = vector.broadcast %767 : vector<2x1xi32> to vector<2x512xi32>
    %779 = arith.cmpi eq, %4, %778 : vector<2x512xi32>
    %cst_186 = arith.constant -3.40282347E+38 : f32
    %780 = vector.broadcast %cst_186 : f32 to vector<2x512xf32>
    %781 = arith.select %779, %780, %758 : vector<2x512xi1>, vector<2x512xf32>
    %cst_187 = arith.constant dense<0xFF800000> : vector<2xf32>
    %782 = vector.multi_reduction <maximumf>, %781, %cst_187 [1] : vector<2x512xf32> to vector<2xf32>
    %783 = vector.shape_cast %782 : vector<2xf32> to vector<2x1xf32>
    %784 = vector.broadcast %783 : vector<2x1xf32> to vector<2x512xf32>
    %785 = arith.cmpf oeq, %781, %784 : vector<2x512xf32>
    %cst_188 = arith.constant 5.120000e+02 : f32
    %786 = vector.broadcast %cst_188 : f32 to vector<2x512xf32>
    %787 = arith.select %785, %6, %786 : vector<2x512xi1>, vector<2x512xf32>
    %cst_189 = arith.constant dense<0x7F800000> : vector<2xf32>
    %788 = vector.multi_reduction <minimumf>, %787, %cst_189 [1] : vector<2x512xf32> to vector<2xf32>
    %789 = vector.shape_cast %788 : vector<2xf32> to vector<2x1xf32>
    %790 = arith.fptosi %789 : vector<2x1xf32> to vector<2x1xi32>
    %c26_i32 = arith.constant 26 : i32
    %791 = vector.broadcast %c26_i32 : i32 to vector<2x50xi32>
    %792 = arith.cmpi eq, %181, %791 : vector<2x50xi32>
    %793 = vector.shape_cast %783 : vector<2x1xf32> to vector<2x1xf32>
    %794 = vector.broadcast %793 : vector<2x1xf32> to vector<2x50xf32>
    %795 = arith.select %792, %794, %772 : vector<2x50xi1>, vector<2x50xf32>
    %c26_i32_190 = arith.constant 26 : i32
    %796 = vector.broadcast %c26_i32_190 : i32 to vector<2x50xi32>
    %797 = arith.cmpi eq, %181, %796 : vector<2x50xi32>
    %798 = vector.shape_cast %790 : vector<2x1xi32> to vector<2x1xi32>
    %799 = vector.broadcast %798 : vector<2x1xi32> to vector<2x50xi32>
    %800 = arith.select %797, %799, %777 : vector<2x50xi1>, vector<2x50xi32>
    %801 = vector.broadcast %790 : vector<2x1xi32> to vector<2x512xi32>
    %802 = arith.cmpi eq, %4, %801 : vector<2x512xi32>
    %cst_191 = arith.constant -3.40282347E+38 : f32
    %803 = vector.broadcast %cst_191 : f32 to vector<2x512xf32>
    %804 = arith.select %802, %803, %781 : vector<2x512xi1>, vector<2x512xf32>
    %cst_192 = arith.constant dense<0xFF800000> : vector<2xf32>
    %805 = vector.multi_reduction <maximumf>, %804, %cst_192 [1] : vector<2x512xf32> to vector<2xf32>
    %806 = vector.shape_cast %805 : vector<2xf32> to vector<2x1xf32>
    %807 = vector.broadcast %806 : vector<2x1xf32> to vector<2x512xf32>
    %808 = arith.cmpf oeq, %804, %807 : vector<2x512xf32>
    %cst_193 = arith.constant 5.120000e+02 : f32
    %809 = vector.broadcast %cst_193 : f32 to vector<2x512xf32>
    %810 = arith.select %808, %6, %809 : vector<2x512xi1>, vector<2x512xf32>
    %cst_194 = arith.constant dense<0x7F800000> : vector<2xf32>
    %811 = vector.multi_reduction <minimumf>, %810, %cst_194 [1] : vector<2x512xf32> to vector<2xf32>
    %812 = vector.shape_cast %811 : vector<2xf32> to vector<2x1xf32>
    %813 = arith.fptosi %812 : vector<2x1xf32> to vector<2x1xi32>
    %c27_i32 = arith.constant 27 : i32
    %814 = vector.broadcast %c27_i32 : i32 to vector<2x50xi32>
    %815 = arith.cmpi eq, %181, %814 : vector<2x50xi32>
    %816 = vector.shape_cast %806 : vector<2x1xf32> to vector<2x1xf32>
    %817 = vector.broadcast %816 : vector<2x1xf32> to vector<2x50xf32>
    %818 = arith.select %815, %817, %795 : vector<2x50xi1>, vector<2x50xf32>
    %c27_i32_195 = arith.constant 27 : i32
    %819 = vector.broadcast %c27_i32_195 : i32 to vector<2x50xi32>
    %820 = arith.cmpi eq, %181, %819 : vector<2x50xi32>
    %821 = vector.shape_cast %813 : vector<2x1xi32> to vector<2x1xi32>
    %822 = vector.broadcast %821 : vector<2x1xi32> to vector<2x50xi32>
    %823 = arith.select %820, %822, %800 : vector<2x50xi1>, vector<2x50xi32>
    %824 = vector.broadcast %813 : vector<2x1xi32> to vector<2x512xi32>
    %825 = arith.cmpi eq, %4, %824 : vector<2x512xi32>
    %cst_196 = arith.constant -3.40282347E+38 : f32
    %826 = vector.broadcast %cst_196 : f32 to vector<2x512xf32>
    %827 = arith.select %825, %826, %804 : vector<2x512xi1>, vector<2x512xf32>
    %cst_197 = arith.constant dense<0xFF800000> : vector<2xf32>
    %828 = vector.multi_reduction <maximumf>, %827, %cst_197 [1] : vector<2x512xf32> to vector<2xf32>
    %829 = vector.shape_cast %828 : vector<2xf32> to vector<2x1xf32>
    %830 = vector.broadcast %829 : vector<2x1xf32> to vector<2x512xf32>
    %831 = arith.cmpf oeq, %827, %830 : vector<2x512xf32>
    %cst_198 = arith.constant 5.120000e+02 : f32
    %832 = vector.broadcast %cst_198 : f32 to vector<2x512xf32>
    %833 = arith.select %831, %6, %832 : vector<2x512xi1>, vector<2x512xf32>
    %cst_199 = arith.constant dense<0x7F800000> : vector<2xf32>
    %834 = vector.multi_reduction <minimumf>, %833, %cst_199 [1] : vector<2x512xf32> to vector<2xf32>
    %835 = vector.shape_cast %834 : vector<2xf32> to vector<2x1xf32>
    %836 = arith.fptosi %835 : vector<2x1xf32> to vector<2x1xi32>
    %c28_i32 = arith.constant 28 : i32
    %837 = vector.broadcast %c28_i32 : i32 to vector<2x50xi32>
    %838 = arith.cmpi eq, %181, %837 : vector<2x50xi32>
    %839 = vector.shape_cast %829 : vector<2x1xf32> to vector<2x1xf32>
    %840 = vector.broadcast %839 : vector<2x1xf32> to vector<2x50xf32>
    %841 = arith.select %838, %840, %818 : vector<2x50xi1>, vector<2x50xf32>
    %c28_i32_200 = arith.constant 28 : i32
    %842 = vector.broadcast %c28_i32_200 : i32 to vector<2x50xi32>
    %843 = arith.cmpi eq, %181, %842 : vector<2x50xi32>
    %844 = vector.shape_cast %836 : vector<2x1xi32> to vector<2x1xi32>
    %845 = vector.broadcast %844 : vector<2x1xi32> to vector<2x50xi32>
    %846 = arith.select %843, %845, %823 : vector<2x50xi1>, vector<2x50xi32>
    %847 = vector.broadcast %836 : vector<2x1xi32> to vector<2x512xi32>
    %848 = arith.cmpi eq, %4, %847 : vector<2x512xi32>
    %cst_201 = arith.constant -3.40282347E+38 : f32
    %849 = vector.broadcast %cst_201 : f32 to vector<2x512xf32>
    %850 = arith.select %848, %849, %827 : vector<2x512xi1>, vector<2x512xf32>
    %cst_202 = arith.constant dense<0xFF800000> : vector<2xf32>
    %851 = vector.multi_reduction <maximumf>, %850, %cst_202 [1] : vector<2x512xf32> to vector<2xf32>
    %852 = vector.shape_cast %851 : vector<2xf32> to vector<2x1xf32>
    %853 = vector.broadcast %852 : vector<2x1xf32> to vector<2x512xf32>
    %854 = arith.cmpf oeq, %850, %853 : vector<2x512xf32>
    %cst_203 = arith.constant 5.120000e+02 : f32
    %855 = vector.broadcast %cst_203 : f32 to vector<2x512xf32>
    %856 = arith.select %854, %6, %855 : vector<2x512xi1>, vector<2x512xf32>
    %cst_204 = arith.constant dense<0x7F800000> : vector<2xf32>
    %857 = vector.multi_reduction <minimumf>, %856, %cst_204 [1] : vector<2x512xf32> to vector<2xf32>
    %858 = vector.shape_cast %857 : vector<2xf32> to vector<2x1xf32>
    %859 = arith.fptosi %858 : vector<2x1xf32> to vector<2x1xi32>
    %c29_i32 = arith.constant 29 : i32
    %860 = vector.broadcast %c29_i32 : i32 to vector<2x50xi32>
    %861 = arith.cmpi eq, %181, %860 : vector<2x50xi32>
    %862 = vector.shape_cast %852 : vector<2x1xf32> to vector<2x1xf32>
    %863 = vector.broadcast %862 : vector<2x1xf32> to vector<2x50xf32>
    %864 = arith.select %861, %863, %841 : vector<2x50xi1>, vector<2x50xf32>
    %c29_i32_205 = arith.constant 29 : i32
    %865 = vector.broadcast %c29_i32_205 : i32 to vector<2x50xi32>
    %866 = arith.cmpi eq, %181, %865 : vector<2x50xi32>
    %867 = vector.shape_cast %859 : vector<2x1xi32> to vector<2x1xi32>
    %868 = vector.broadcast %867 : vector<2x1xi32> to vector<2x50xi32>
    %869 = arith.select %866, %868, %846 : vector<2x50xi1>, vector<2x50xi32>
    %870 = vector.broadcast %859 : vector<2x1xi32> to vector<2x512xi32>
    %871 = arith.cmpi eq, %4, %870 : vector<2x512xi32>
    %cst_206 = arith.constant -3.40282347E+38 : f32
    %872 = vector.broadcast %cst_206 : f32 to vector<2x512xf32>
    %873 = arith.select %871, %872, %850 : vector<2x512xi1>, vector<2x512xf32>
    %cst_207 = arith.constant dense<0xFF800000> : vector<2xf32>
    %874 = vector.multi_reduction <maximumf>, %873, %cst_207 [1] : vector<2x512xf32> to vector<2xf32>
    %875 = vector.shape_cast %874 : vector<2xf32> to vector<2x1xf32>
    %876 = vector.broadcast %875 : vector<2x1xf32> to vector<2x512xf32>
    %877 = arith.cmpf oeq, %873, %876 : vector<2x512xf32>
    %cst_208 = arith.constant 5.120000e+02 : f32
    %878 = vector.broadcast %cst_208 : f32 to vector<2x512xf32>
    %879 = arith.select %877, %6, %878 : vector<2x512xi1>, vector<2x512xf32>
    %cst_209 = arith.constant dense<0x7F800000> : vector<2xf32>
    %880 = vector.multi_reduction <minimumf>, %879, %cst_209 [1] : vector<2x512xf32> to vector<2xf32>
    %881 = vector.shape_cast %880 : vector<2xf32> to vector<2x1xf32>
    %882 = arith.fptosi %881 : vector<2x1xf32> to vector<2x1xi32>
    %c30_i32 = arith.constant 30 : i32
    %883 = vector.broadcast %c30_i32 : i32 to vector<2x50xi32>
    %884 = arith.cmpi eq, %181, %883 : vector<2x50xi32>
    %885 = vector.shape_cast %875 : vector<2x1xf32> to vector<2x1xf32>
    %886 = vector.broadcast %885 : vector<2x1xf32> to vector<2x50xf32>
    %887 = arith.select %884, %886, %864 : vector<2x50xi1>, vector<2x50xf32>
    %c30_i32_210 = arith.constant 30 : i32
    %888 = vector.broadcast %c30_i32_210 : i32 to vector<2x50xi32>
    %889 = arith.cmpi eq, %181, %888 : vector<2x50xi32>
    %890 = vector.shape_cast %882 : vector<2x1xi32> to vector<2x1xi32>
    %891 = vector.broadcast %890 : vector<2x1xi32> to vector<2x50xi32>
    %892 = arith.select %889, %891, %869 : vector<2x50xi1>, vector<2x50xi32>
    %893 = vector.broadcast %882 : vector<2x1xi32> to vector<2x512xi32>
    %894 = arith.cmpi eq, %4, %893 : vector<2x512xi32>
    %cst_211 = arith.constant -3.40282347E+38 : f32
    %895 = vector.broadcast %cst_211 : f32 to vector<2x512xf32>
    %896 = arith.select %894, %895, %873 : vector<2x512xi1>, vector<2x512xf32>
    %cst_212 = arith.constant dense<0xFF800000> : vector<2xf32>
    %897 = vector.multi_reduction <maximumf>, %896, %cst_212 [1] : vector<2x512xf32> to vector<2xf32>
    %898 = vector.shape_cast %897 : vector<2xf32> to vector<2x1xf32>
    %899 = vector.broadcast %898 : vector<2x1xf32> to vector<2x512xf32>
    %900 = arith.cmpf oeq, %896, %899 : vector<2x512xf32>
    %cst_213 = arith.constant 5.120000e+02 : f32
    %901 = vector.broadcast %cst_213 : f32 to vector<2x512xf32>
    %902 = arith.select %900, %6, %901 : vector<2x512xi1>, vector<2x512xf32>
    %cst_214 = arith.constant dense<0x7F800000> : vector<2xf32>
    %903 = vector.multi_reduction <minimumf>, %902, %cst_214 [1] : vector<2x512xf32> to vector<2xf32>
    %904 = vector.shape_cast %903 : vector<2xf32> to vector<2x1xf32>
    %905 = arith.fptosi %904 : vector<2x1xf32> to vector<2x1xi32>
    %c31_i32 = arith.constant 31 : i32
    %906 = vector.broadcast %c31_i32 : i32 to vector<2x50xi32>
    %907 = arith.cmpi eq, %181, %906 : vector<2x50xi32>
    %908 = vector.shape_cast %898 : vector<2x1xf32> to vector<2x1xf32>
    %909 = vector.broadcast %908 : vector<2x1xf32> to vector<2x50xf32>
    %910 = arith.select %907, %909, %887 : vector<2x50xi1>, vector<2x50xf32>
    %c31_i32_215 = arith.constant 31 : i32
    %911 = vector.broadcast %c31_i32_215 : i32 to vector<2x50xi32>
    %912 = arith.cmpi eq, %181, %911 : vector<2x50xi32>
    %913 = vector.shape_cast %905 : vector<2x1xi32> to vector<2x1xi32>
    %914 = vector.broadcast %913 : vector<2x1xi32> to vector<2x50xi32>
    %915 = arith.select %912, %914, %892 : vector<2x50xi1>, vector<2x50xi32>
    %916 = vector.broadcast %905 : vector<2x1xi32> to vector<2x512xi32>
    %917 = arith.cmpi eq, %4, %916 : vector<2x512xi32>
    %cst_216 = arith.constant -3.40282347E+38 : f32
    %918 = vector.broadcast %cst_216 : f32 to vector<2x512xf32>
    %919 = arith.select %917, %918, %896 : vector<2x512xi1>, vector<2x512xf32>
    %cst_217 = arith.constant dense<0xFF800000> : vector<2xf32>
    %920 = vector.multi_reduction <maximumf>, %919, %cst_217 [1] : vector<2x512xf32> to vector<2xf32>
    %921 = vector.shape_cast %920 : vector<2xf32> to vector<2x1xf32>
    %922 = vector.broadcast %921 : vector<2x1xf32> to vector<2x512xf32>
    %923 = arith.cmpf oeq, %919, %922 : vector<2x512xf32>
    %cst_218 = arith.constant 5.120000e+02 : f32
    %924 = vector.broadcast %cst_218 : f32 to vector<2x512xf32>
    %925 = arith.select %923, %6, %924 : vector<2x512xi1>, vector<2x512xf32>
    %cst_219 = arith.constant dense<0x7F800000> : vector<2xf32>
    %926 = vector.multi_reduction <minimumf>, %925, %cst_219 [1] : vector<2x512xf32> to vector<2xf32>
    %927 = vector.shape_cast %926 : vector<2xf32> to vector<2x1xf32>
    %928 = arith.fptosi %927 : vector<2x1xf32> to vector<2x1xi32>
    %c32_i32 = arith.constant 32 : i32
    %929 = vector.broadcast %c32_i32 : i32 to vector<2x50xi32>
    %930 = arith.cmpi eq, %181, %929 : vector<2x50xi32>
    %931 = vector.shape_cast %921 : vector<2x1xf32> to vector<2x1xf32>
    %932 = vector.broadcast %931 : vector<2x1xf32> to vector<2x50xf32>
    %933 = arith.select %930, %932, %910 : vector<2x50xi1>, vector<2x50xf32>
    %c32_i32_220 = arith.constant 32 : i32
    %934 = vector.broadcast %c32_i32_220 : i32 to vector<2x50xi32>
    %935 = arith.cmpi eq, %181, %934 : vector<2x50xi32>
    %936 = vector.shape_cast %928 : vector<2x1xi32> to vector<2x1xi32>
    %937 = vector.broadcast %936 : vector<2x1xi32> to vector<2x50xi32>
    %938 = arith.select %935, %937, %915 : vector<2x50xi1>, vector<2x50xi32>
    %939 = vector.broadcast %928 : vector<2x1xi32> to vector<2x512xi32>
    %940 = arith.cmpi eq, %4, %939 : vector<2x512xi32>
    %cst_221 = arith.constant -3.40282347E+38 : f32
    %941 = vector.broadcast %cst_221 : f32 to vector<2x512xf32>
    %942 = arith.select %940, %941, %919 : vector<2x512xi1>, vector<2x512xf32>
    %cst_222 = arith.constant dense<0xFF800000> : vector<2xf32>
    %943 = vector.multi_reduction <maximumf>, %942, %cst_222 [1] : vector<2x512xf32> to vector<2xf32>
    %944 = vector.shape_cast %943 : vector<2xf32> to vector<2x1xf32>
    %945 = vector.broadcast %944 : vector<2x1xf32> to vector<2x512xf32>
    %946 = arith.cmpf oeq, %942, %945 : vector<2x512xf32>
    %cst_223 = arith.constant 5.120000e+02 : f32
    %947 = vector.broadcast %cst_223 : f32 to vector<2x512xf32>
    %948 = arith.select %946, %6, %947 : vector<2x512xi1>, vector<2x512xf32>
    %cst_224 = arith.constant dense<0x7F800000> : vector<2xf32>
    %949 = vector.multi_reduction <minimumf>, %948, %cst_224 [1] : vector<2x512xf32> to vector<2xf32>
    %950 = vector.shape_cast %949 : vector<2xf32> to vector<2x1xf32>
    %951 = arith.fptosi %950 : vector<2x1xf32> to vector<2x1xi32>
    %c33_i32 = arith.constant 33 : i32
    %952 = vector.broadcast %c33_i32 : i32 to vector<2x50xi32>
    %953 = arith.cmpi eq, %181, %952 : vector<2x50xi32>
    %954 = vector.shape_cast %944 : vector<2x1xf32> to vector<2x1xf32>
    %955 = vector.broadcast %954 : vector<2x1xf32> to vector<2x50xf32>
    %956 = arith.select %953, %955, %933 : vector<2x50xi1>, vector<2x50xf32>
    %c33_i32_225 = arith.constant 33 : i32
    %957 = vector.broadcast %c33_i32_225 : i32 to vector<2x50xi32>
    %958 = arith.cmpi eq, %181, %957 : vector<2x50xi32>
    %959 = vector.shape_cast %951 : vector<2x1xi32> to vector<2x1xi32>
    %960 = vector.broadcast %959 : vector<2x1xi32> to vector<2x50xi32>
    %961 = arith.select %958, %960, %938 : vector<2x50xi1>, vector<2x50xi32>
    %962 = vector.broadcast %951 : vector<2x1xi32> to vector<2x512xi32>
    %963 = arith.cmpi eq, %4, %962 : vector<2x512xi32>
    %cst_226 = arith.constant -3.40282347E+38 : f32
    %964 = vector.broadcast %cst_226 : f32 to vector<2x512xf32>
    %965 = arith.select %963, %964, %942 : vector<2x512xi1>, vector<2x512xf32>
    %cst_227 = arith.constant dense<0xFF800000> : vector<2xf32>
    %966 = vector.multi_reduction <maximumf>, %965, %cst_227 [1] : vector<2x512xf32> to vector<2xf32>
    %967 = vector.shape_cast %966 : vector<2xf32> to vector<2x1xf32>
    %968 = vector.broadcast %967 : vector<2x1xf32> to vector<2x512xf32>
    %969 = arith.cmpf oeq, %965, %968 : vector<2x512xf32>
    %cst_228 = arith.constant 5.120000e+02 : f32
    %970 = vector.broadcast %cst_228 : f32 to vector<2x512xf32>
    %971 = arith.select %969, %6, %970 : vector<2x512xi1>, vector<2x512xf32>
    %cst_229 = arith.constant dense<0x7F800000> : vector<2xf32>
    %972 = vector.multi_reduction <minimumf>, %971, %cst_229 [1] : vector<2x512xf32> to vector<2xf32>
    %973 = vector.shape_cast %972 : vector<2xf32> to vector<2x1xf32>
    %974 = arith.fptosi %973 : vector<2x1xf32> to vector<2x1xi32>
    %c34_i32 = arith.constant 34 : i32
    %975 = vector.broadcast %c34_i32 : i32 to vector<2x50xi32>
    %976 = arith.cmpi eq, %181, %975 : vector<2x50xi32>
    %977 = vector.shape_cast %967 : vector<2x1xf32> to vector<2x1xf32>
    %978 = vector.broadcast %977 : vector<2x1xf32> to vector<2x50xf32>
    %979 = arith.select %976, %978, %956 : vector<2x50xi1>, vector<2x50xf32>
    %c34_i32_230 = arith.constant 34 : i32
    %980 = vector.broadcast %c34_i32_230 : i32 to vector<2x50xi32>
    %981 = arith.cmpi eq, %181, %980 : vector<2x50xi32>
    %982 = vector.shape_cast %974 : vector<2x1xi32> to vector<2x1xi32>
    %983 = vector.broadcast %982 : vector<2x1xi32> to vector<2x50xi32>
    %984 = arith.select %981, %983, %961 : vector<2x50xi1>, vector<2x50xi32>
    %985 = vector.broadcast %974 : vector<2x1xi32> to vector<2x512xi32>
    %986 = arith.cmpi eq, %4, %985 : vector<2x512xi32>
    %cst_231 = arith.constant -3.40282347E+38 : f32
    %987 = vector.broadcast %cst_231 : f32 to vector<2x512xf32>
    %988 = arith.select %986, %987, %965 : vector<2x512xi1>, vector<2x512xf32>
    %cst_232 = arith.constant dense<0xFF800000> : vector<2xf32>
    %989 = vector.multi_reduction <maximumf>, %988, %cst_232 [1] : vector<2x512xf32> to vector<2xf32>
    %990 = vector.shape_cast %989 : vector<2xf32> to vector<2x1xf32>
    %991 = vector.broadcast %990 : vector<2x1xf32> to vector<2x512xf32>
    %992 = arith.cmpf oeq, %988, %991 : vector<2x512xf32>
    %cst_233 = arith.constant 5.120000e+02 : f32
    %993 = vector.broadcast %cst_233 : f32 to vector<2x512xf32>
    %994 = arith.select %992, %6, %993 : vector<2x512xi1>, vector<2x512xf32>
    %cst_234 = arith.constant dense<0x7F800000> : vector<2xf32>
    %995 = vector.multi_reduction <minimumf>, %994, %cst_234 [1] : vector<2x512xf32> to vector<2xf32>
    %996 = vector.shape_cast %995 : vector<2xf32> to vector<2x1xf32>
    %997 = arith.fptosi %996 : vector<2x1xf32> to vector<2x1xi32>
    %c35_i32 = arith.constant 35 : i32
    %998 = vector.broadcast %c35_i32 : i32 to vector<2x50xi32>
    %999 = arith.cmpi eq, %181, %998 : vector<2x50xi32>
    %1000 = vector.shape_cast %990 : vector<2x1xf32> to vector<2x1xf32>
    %1001 = vector.broadcast %1000 : vector<2x1xf32> to vector<2x50xf32>
    %1002 = arith.select %999, %1001, %979 : vector<2x50xi1>, vector<2x50xf32>
    %c35_i32_235 = arith.constant 35 : i32
    %1003 = vector.broadcast %c35_i32_235 : i32 to vector<2x50xi32>
    %1004 = arith.cmpi eq, %181, %1003 : vector<2x50xi32>
    %1005 = vector.shape_cast %997 : vector<2x1xi32> to vector<2x1xi32>
    %1006 = vector.broadcast %1005 : vector<2x1xi32> to vector<2x50xi32>
    %1007 = arith.select %1004, %1006, %984 : vector<2x50xi1>, vector<2x50xi32>
    %1008 = vector.broadcast %997 : vector<2x1xi32> to vector<2x512xi32>
    %1009 = arith.cmpi eq, %4, %1008 : vector<2x512xi32>
    %cst_236 = arith.constant -3.40282347E+38 : f32
    %1010 = vector.broadcast %cst_236 : f32 to vector<2x512xf32>
    %1011 = arith.select %1009, %1010, %988 : vector<2x512xi1>, vector<2x512xf32>
    %cst_237 = arith.constant dense<0xFF800000> : vector<2xf32>
    %1012 = vector.multi_reduction <maximumf>, %1011, %cst_237 [1] : vector<2x512xf32> to vector<2xf32>
    %1013 = vector.shape_cast %1012 : vector<2xf32> to vector<2x1xf32>
    %1014 = vector.broadcast %1013 : vector<2x1xf32> to vector<2x512xf32>
    %1015 = arith.cmpf oeq, %1011, %1014 : vector<2x512xf32>
    %cst_238 = arith.constant 5.120000e+02 : f32
    %1016 = vector.broadcast %cst_238 : f32 to vector<2x512xf32>
    %1017 = arith.select %1015, %6, %1016 : vector<2x512xi1>, vector<2x512xf32>
    %cst_239 = arith.constant dense<0x7F800000> : vector<2xf32>
    %1018 = vector.multi_reduction <minimumf>, %1017, %cst_239 [1] : vector<2x512xf32> to vector<2xf32>
    %1019 = vector.shape_cast %1018 : vector<2xf32> to vector<2x1xf32>
    %1020 = arith.fptosi %1019 : vector<2x1xf32> to vector<2x1xi32>
    %c36_i32 = arith.constant 36 : i32
    %1021 = vector.broadcast %c36_i32 : i32 to vector<2x50xi32>
    %1022 = arith.cmpi eq, %181, %1021 : vector<2x50xi32>
    %1023 = vector.shape_cast %1013 : vector<2x1xf32> to vector<2x1xf32>
    %1024 = vector.broadcast %1023 : vector<2x1xf32> to vector<2x50xf32>
    %1025 = arith.select %1022, %1024, %1002 : vector<2x50xi1>, vector<2x50xf32>
    %c36_i32_240 = arith.constant 36 : i32
    %1026 = vector.broadcast %c36_i32_240 : i32 to vector<2x50xi32>
    %1027 = arith.cmpi eq, %181, %1026 : vector<2x50xi32>
    %1028 = vector.shape_cast %1020 : vector<2x1xi32> to vector<2x1xi32>
    %1029 = vector.broadcast %1028 : vector<2x1xi32> to vector<2x50xi32>
    %1030 = arith.select %1027, %1029, %1007 : vector<2x50xi1>, vector<2x50xi32>
    %1031 = vector.broadcast %1020 : vector<2x1xi32> to vector<2x512xi32>
    %1032 = arith.cmpi eq, %4, %1031 : vector<2x512xi32>
    %cst_241 = arith.constant -3.40282347E+38 : f32
    %1033 = vector.broadcast %cst_241 : f32 to vector<2x512xf32>
    %1034 = arith.select %1032, %1033, %1011 : vector<2x512xi1>, vector<2x512xf32>
    %cst_242 = arith.constant dense<0xFF800000> : vector<2xf32>
    %1035 = vector.multi_reduction <maximumf>, %1034, %cst_242 [1] : vector<2x512xf32> to vector<2xf32>
    %1036 = vector.shape_cast %1035 : vector<2xf32> to vector<2x1xf32>
    %1037 = vector.broadcast %1036 : vector<2x1xf32> to vector<2x512xf32>
    %1038 = arith.cmpf oeq, %1034, %1037 : vector<2x512xf32>
    %cst_243 = arith.constant 5.120000e+02 : f32
    %1039 = vector.broadcast %cst_243 : f32 to vector<2x512xf32>
    %1040 = arith.select %1038, %6, %1039 : vector<2x512xi1>, vector<2x512xf32>
    %cst_244 = arith.constant dense<0x7F800000> : vector<2xf32>
    %1041 = vector.multi_reduction <minimumf>, %1040, %cst_244 [1] : vector<2x512xf32> to vector<2xf32>
    %1042 = vector.shape_cast %1041 : vector<2xf32> to vector<2x1xf32>
    %1043 = arith.fptosi %1042 : vector<2x1xf32> to vector<2x1xi32>
    %c37_i32 = arith.constant 37 : i32
    %1044 = vector.broadcast %c37_i32 : i32 to vector<2x50xi32>
    %1045 = arith.cmpi eq, %181, %1044 : vector<2x50xi32>
    %1046 = vector.shape_cast %1036 : vector<2x1xf32> to vector<2x1xf32>
    %1047 = vector.broadcast %1046 : vector<2x1xf32> to vector<2x50xf32>
    %1048 = arith.select %1045, %1047, %1025 : vector<2x50xi1>, vector<2x50xf32>
    %c37_i32_245 = arith.constant 37 : i32
    %1049 = vector.broadcast %c37_i32_245 : i32 to vector<2x50xi32>
    %1050 = arith.cmpi eq, %181, %1049 : vector<2x50xi32>
    %1051 = vector.shape_cast %1043 : vector<2x1xi32> to vector<2x1xi32>
    %1052 = vector.broadcast %1051 : vector<2x1xi32> to vector<2x50xi32>
    %1053 = arith.select %1050, %1052, %1030 : vector<2x50xi1>, vector<2x50xi32>
    %1054 = vector.broadcast %1043 : vector<2x1xi32> to vector<2x512xi32>
    %1055 = arith.cmpi eq, %4, %1054 : vector<2x512xi32>
    %cst_246 = arith.constant -3.40282347E+38 : f32
    %1056 = vector.broadcast %cst_246 : f32 to vector<2x512xf32>
    %1057 = arith.select %1055, %1056, %1034 : vector<2x512xi1>, vector<2x512xf32>
    %cst_247 = arith.constant dense<0xFF800000> : vector<2xf32>
    %1058 = vector.multi_reduction <maximumf>, %1057, %cst_247 [1] : vector<2x512xf32> to vector<2xf32>
    %1059 = vector.shape_cast %1058 : vector<2xf32> to vector<2x1xf32>
    %1060 = vector.broadcast %1059 : vector<2x1xf32> to vector<2x512xf32>
    %1061 = arith.cmpf oeq, %1057, %1060 : vector<2x512xf32>
    %cst_248 = arith.constant 5.120000e+02 : f32
    %1062 = vector.broadcast %cst_248 : f32 to vector<2x512xf32>
    %1063 = arith.select %1061, %6, %1062 : vector<2x512xi1>, vector<2x512xf32>
    %cst_249 = arith.constant dense<0x7F800000> : vector<2xf32>
    %1064 = vector.multi_reduction <minimumf>, %1063, %cst_249 [1] : vector<2x512xf32> to vector<2xf32>
    %1065 = vector.shape_cast %1064 : vector<2xf32> to vector<2x1xf32>
    %1066 = arith.fptosi %1065 : vector<2x1xf32> to vector<2x1xi32>
    %c38_i32 = arith.constant 38 : i32
    %1067 = vector.broadcast %c38_i32 : i32 to vector<2x50xi32>
    %1068 = arith.cmpi eq, %181, %1067 : vector<2x50xi32>
    %1069 = vector.shape_cast %1059 : vector<2x1xf32> to vector<2x1xf32>
    %1070 = vector.broadcast %1069 : vector<2x1xf32> to vector<2x50xf32>
    %1071 = arith.select %1068, %1070, %1048 : vector<2x50xi1>, vector<2x50xf32>
    %c38_i32_250 = arith.constant 38 : i32
    %1072 = vector.broadcast %c38_i32_250 : i32 to vector<2x50xi32>
    %1073 = arith.cmpi eq, %181, %1072 : vector<2x50xi32>
    %1074 = vector.shape_cast %1066 : vector<2x1xi32> to vector<2x1xi32>
    %1075 = vector.broadcast %1074 : vector<2x1xi32> to vector<2x50xi32>
    %1076 = arith.select %1073, %1075, %1053 : vector<2x50xi1>, vector<2x50xi32>
    %1077 = vector.broadcast %1066 : vector<2x1xi32> to vector<2x512xi32>
    %1078 = arith.cmpi eq, %4, %1077 : vector<2x512xi32>
    %cst_251 = arith.constant -3.40282347E+38 : f32
    %1079 = vector.broadcast %cst_251 : f32 to vector<2x512xf32>
    %1080 = arith.select %1078, %1079, %1057 : vector<2x512xi1>, vector<2x512xf32>
    %cst_252 = arith.constant dense<0xFF800000> : vector<2xf32>
    %1081 = vector.multi_reduction <maximumf>, %1080, %cst_252 [1] : vector<2x512xf32> to vector<2xf32>
    %1082 = vector.shape_cast %1081 : vector<2xf32> to vector<2x1xf32>
    %1083 = vector.broadcast %1082 : vector<2x1xf32> to vector<2x512xf32>
    %1084 = arith.cmpf oeq, %1080, %1083 : vector<2x512xf32>
    %cst_253 = arith.constant 5.120000e+02 : f32
    %1085 = vector.broadcast %cst_253 : f32 to vector<2x512xf32>
    %1086 = arith.select %1084, %6, %1085 : vector<2x512xi1>, vector<2x512xf32>
    %cst_254 = arith.constant dense<0x7F800000> : vector<2xf32>
    %1087 = vector.multi_reduction <minimumf>, %1086, %cst_254 [1] : vector<2x512xf32> to vector<2xf32>
    %1088 = vector.shape_cast %1087 : vector<2xf32> to vector<2x1xf32>
    %1089 = arith.fptosi %1088 : vector<2x1xf32> to vector<2x1xi32>
    %c39_i32 = arith.constant 39 : i32
    %1090 = vector.broadcast %c39_i32 : i32 to vector<2x50xi32>
    %1091 = arith.cmpi eq, %181, %1090 : vector<2x50xi32>
    %1092 = vector.shape_cast %1082 : vector<2x1xf32> to vector<2x1xf32>
    %1093 = vector.broadcast %1092 : vector<2x1xf32> to vector<2x50xf32>
    %1094 = arith.select %1091, %1093, %1071 : vector<2x50xi1>, vector<2x50xf32>
    %c39_i32_255 = arith.constant 39 : i32
    %1095 = vector.broadcast %c39_i32_255 : i32 to vector<2x50xi32>
    %1096 = arith.cmpi eq, %181, %1095 : vector<2x50xi32>
    %1097 = vector.shape_cast %1089 : vector<2x1xi32> to vector<2x1xi32>
    %1098 = vector.broadcast %1097 : vector<2x1xi32> to vector<2x50xi32>
    %1099 = arith.select %1096, %1098, %1076 : vector<2x50xi1>, vector<2x50xi32>
    %1100 = vector.broadcast %1089 : vector<2x1xi32> to vector<2x512xi32>
    %1101 = arith.cmpi eq, %4, %1100 : vector<2x512xi32>
    %cst_256 = arith.constant -3.40282347E+38 : f32
    %1102 = vector.broadcast %cst_256 : f32 to vector<2x512xf32>
    %1103 = arith.select %1101, %1102, %1080 : vector<2x512xi1>, vector<2x512xf32>
    %cst_257 = arith.constant dense<0xFF800000> : vector<2xf32>
    %1104 = vector.multi_reduction <maximumf>, %1103, %cst_257 [1] : vector<2x512xf32> to vector<2xf32>
    %1105 = vector.shape_cast %1104 : vector<2xf32> to vector<2x1xf32>
    %1106 = vector.broadcast %1105 : vector<2x1xf32> to vector<2x512xf32>
    %1107 = arith.cmpf oeq, %1103, %1106 : vector<2x512xf32>
    %cst_258 = arith.constant 5.120000e+02 : f32
    %1108 = vector.broadcast %cst_258 : f32 to vector<2x512xf32>
    %1109 = arith.select %1107, %6, %1108 : vector<2x512xi1>, vector<2x512xf32>
    %cst_259 = arith.constant dense<0x7F800000> : vector<2xf32>
    %1110 = vector.multi_reduction <minimumf>, %1109, %cst_259 [1] : vector<2x512xf32> to vector<2xf32>
    %1111 = vector.shape_cast %1110 : vector<2xf32> to vector<2x1xf32>
    %1112 = arith.fptosi %1111 : vector<2x1xf32> to vector<2x1xi32>
    %c40_i32 = arith.constant 40 : i32
    %1113 = vector.broadcast %c40_i32 : i32 to vector<2x50xi32>
    %1114 = arith.cmpi eq, %181, %1113 : vector<2x50xi32>
    %1115 = vector.shape_cast %1105 : vector<2x1xf32> to vector<2x1xf32>
    %1116 = vector.broadcast %1115 : vector<2x1xf32> to vector<2x50xf32>
    %1117 = arith.select %1114, %1116, %1094 : vector<2x50xi1>, vector<2x50xf32>
    %c40_i32_260 = arith.constant 40 : i32
    %1118 = vector.broadcast %c40_i32_260 : i32 to vector<2x50xi32>
    %1119 = arith.cmpi eq, %181, %1118 : vector<2x50xi32>
    %1120 = vector.shape_cast %1112 : vector<2x1xi32> to vector<2x1xi32>
    %1121 = vector.broadcast %1120 : vector<2x1xi32> to vector<2x50xi32>
    %1122 = arith.select %1119, %1121, %1099 : vector<2x50xi1>, vector<2x50xi32>
    %1123 = vector.broadcast %1112 : vector<2x1xi32> to vector<2x512xi32>
    %1124 = arith.cmpi eq, %4, %1123 : vector<2x512xi32>
    %cst_261 = arith.constant -3.40282347E+38 : f32
    %1125 = vector.broadcast %cst_261 : f32 to vector<2x512xf32>
    %1126 = arith.select %1124, %1125, %1103 : vector<2x512xi1>, vector<2x512xf32>
    %cst_262 = arith.constant dense<0xFF800000> : vector<2xf32>
    %1127 = vector.multi_reduction <maximumf>, %1126, %cst_262 [1] : vector<2x512xf32> to vector<2xf32>
    %1128 = vector.shape_cast %1127 : vector<2xf32> to vector<2x1xf32>
    %1129 = vector.broadcast %1128 : vector<2x1xf32> to vector<2x512xf32>
    %1130 = arith.cmpf oeq, %1126, %1129 : vector<2x512xf32>
    %cst_263 = arith.constant 5.120000e+02 : f32
    %1131 = vector.broadcast %cst_263 : f32 to vector<2x512xf32>
    %1132 = arith.select %1130, %6, %1131 : vector<2x512xi1>, vector<2x512xf32>
    %cst_264 = arith.constant dense<0x7F800000> : vector<2xf32>
    %1133 = vector.multi_reduction <minimumf>, %1132, %cst_264 [1] : vector<2x512xf32> to vector<2xf32>
    %1134 = vector.shape_cast %1133 : vector<2xf32> to vector<2x1xf32>
    %1135 = arith.fptosi %1134 : vector<2x1xf32> to vector<2x1xi32>
    %c41_i32 = arith.constant 41 : i32
    %1136 = vector.broadcast %c41_i32 : i32 to vector<2x50xi32>
    %1137 = arith.cmpi eq, %181, %1136 : vector<2x50xi32>
    %1138 = vector.shape_cast %1128 : vector<2x1xf32> to vector<2x1xf32>
    %1139 = vector.broadcast %1138 : vector<2x1xf32> to vector<2x50xf32>
    %1140 = arith.select %1137, %1139, %1117 : vector<2x50xi1>, vector<2x50xf32>
    %c41_i32_265 = arith.constant 41 : i32
    %1141 = vector.broadcast %c41_i32_265 : i32 to vector<2x50xi32>
    %1142 = arith.cmpi eq, %181, %1141 : vector<2x50xi32>
    %1143 = vector.shape_cast %1135 : vector<2x1xi32> to vector<2x1xi32>
    %1144 = vector.broadcast %1143 : vector<2x1xi32> to vector<2x50xi32>
    %1145 = arith.select %1142, %1144, %1122 : vector<2x50xi1>, vector<2x50xi32>
    %1146 = vector.broadcast %1135 : vector<2x1xi32> to vector<2x512xi32>
    %1147 = arith.cmpi eq, %4, %1146 : vector<2x512xi32>
    %cst_266 = arith.constant -3.40282347E+38 : f32
    %1148 = vector.broadcast %cst_266 : f32 to vector<2x512xf32>
    %1149 = arith.select %1147, %1148, %1126 : vector<2x512xi1>, vector<2x512xf32>
    %cst_267 = arith.constant dense<0xFF800000> : vector<2xf32>
    %1150 = vector.multi_reduction <maximumf>, %1149, %cst_267 [1] : vector<2x512xf32> to vector<2xf32>
    %1151 = vector.shape_cast %1150 : vector<2xf32> to vector<2x1xf32>
    %1152 = vector.broadcast %1151 : vector<2x1xf32> to vector<2x512xf32>
    %1153 = arith.cmpf oeq, %1149, %1152 : vector<2x512xf32>
    %cst_268 = arith.constant 5.120000e+02 : f32
    %1154 = vector.broadcast %cst_268 : f32 to vector<2x512xf32>
    %1155 = arith.select %1153, %6, %1154 : vector<2x512xi1>, vector<2x512xf32>
    %cst_269 = arith.constant dense<0x7F800000> : vector<2xf32>
    %1156 = vector.multi_reduction <minimumf>, %1155, %cst_269 [1] : vector<2x512xf32> to vector<2xf32>
    %1157 = vector.shape_cast %1156 : vector<2xf32> to vector<2x1xf32>
    %1158 = arith.fptosi %1157 : vector<2x1xf32> to vector<2x1xi32>
    %c42_i32 = arith.constant 42 : i32
    %1159 = vector.broadcast %c42_i32 : i32 to vector<2x50xi32>
    %1160 = arith.cmpi eq, %181, %1159 : vector<2x50xi32>
    %1161 = vector.shape_cast %1151 : vector<2x1xf32> to vector<2x1xf32>
    %1162 = vector.broadcast %1161 : vector<2x1xf32> to vector<2x50xf32>
    %1163 = arith.select %1160, %1162, %1140 : vector<2x50xi1>, vector<2x50xf32>
    %c42_i32_270 = arith.constant 42 : i32
    %1164 = vector.broadcast %c42_i32_270 : i32 to vector<2x50xi32>
    %1165 = arith.cmpi eq, %181, %1164 : vector<2x50xi32>
    %1166 = vector.shape_cast %1158 : vector<2x1xi32> to vector<2x1xi32>
    %1167 = vector.broadcast %1166 : vector<2x1xi32> to vector<2x50xi32>
    %1168 = arith.select %1165, %1167, %1145 : vector<2x50xi1>, vector<2x50xi32>
    %1169 = vector.broadcast %1158 : vector<2x1xi32> to vector<2x512xi32>
    %1170 = arith.cmpi eq, %4, %1169 : vector<2x512xi32>
    %cst_271 = arith.constant -3.40282347E+38 : f32
    %1171 = vector.broadcast %cst_271 : f32 to vector<2x512xf32>
    %1172 = arith.select %1170, %1171, %1149 : vector<2x512xi1>, vector<2x512xf32>
    %cst_272 = arith.constant dense<0xFF800000> : vector<2xf32>
    %1173 = vector.multi_reduction <maximumf>, %1172, %cst_272 [1] : vector<2x512xf32> to vector<2xf32>
    %1174 = vector.shape_cast %1173 : vector<2xf32> to vector<2x1xf32>
    %1175 = vector.broadcast %1174 : vector<2x1xf32> to vector<2x512xf32>
    %1176 = arith.cmpf oeq, %1172, %1175 : vector<2x512xf32>
    %cst_273 = arith.constant 5.120000e+02 : f32
    %1177 = vector.broadcast %cst_273 : f32 to vector<2x512xf32>
    %1178 = arith.select %1176, %6, %1177 : vector<2x512xi1>, vector<2x512xf32>
    %cst_274 = arith.constant dense<0x7F800000> : vector<2xf32>
    %1179 = vector.multi_reduction <minimumf>, %1178, %cst_274 [1] : vector<2x512xf32> to vector<2xf32>
    %1180 = vector.shape_cast %1179 : vector<2xf32> to vector<2x1xf32>
    %1181 = arith.fptosi %1180 : vector<2x1xf32> to vector<2x1xi32>
    %c43_i32 = arith.constant 43 : i32
    %1182 = vector.broadcast %c43_i32 : i32 to vector<2x50xi32>
    %1183 = arith.cmpi eq, %181, %1182 : vector<2x50xi32>
    %1184 = vector.shape_cast %1174 : vector<2x1xf32> to vector<2x1xf32>
    %1185 = vector.broadcast %1184 : vector<2x1xf32> to vector<2x50xf32>
    %1186 = arith.select %1183, %1185, %1163 : vector<2x50xi1>, vector<2x50xf32>
    %c43_i32_275 = arith.constant 43 : i32
    %1187 = vector.broadcast %c43_i32_275 : i32 to vector<2x50xi32>
    %1188 = arith.cmpi eq, %181, %1187 : vector<2x50xi32>
    %1189 = vector.shape_cast %1181 : vector<2x1xi32> to vector<2x1xi32>
    %1190 = vector.broadcast %1189 : vector<2x1xi32> to vector<2x50xi32>
    %1191 = arith.select %1188, %1190, %1168 : vector<2x50xi1>, vector<2x50xi32>
    %1192 = vector.broadcast %1181 : vector<2x1xi32> to vector<2x512xi32>
    %1193 = arith.cmpi eq, %4, %1192 : vector<2x512xi32>
    %cst_276 = arith.constant -3.40282347E+38 : f32
    %1194 = vector.broadcast %cst_276 : f32 to vector<2x512xf32>
    %1195 = arith.select %1193, %1194, %1172 : vector<2x512xi1>, vector<2x512xf32>
    %cst_277 = arith.constant dense<0xFF800000> : vector<2xf32>
    %1196 = vector.multi_reduction <maximumf>, %1195, %cst_277 [1] : vector<2x512xf32> to vector<2xf32>
    %1197 = vector.shape_cast %1196 : vector<2xf32> to vector<2x1xf32>
    %1198 = vector.broadcast %1197 : vector<2x1xf32> to vector<2x512xf32>
    %1199 = arith.cmpf oeq, %1195, %1198 : vector<2x512xf32>
    %cst_278 = arith.constant 5.120000e+02 : f32
    %1200 = vector.broadcast %cst_278 : f32 to vector<2x512xf32>
    %1201 = arith.select %1199, %6, %1200 : vector<2x512xi1>, vector<2x512xf32>
    %cst_279 = arith.constant dense<0x7F800000> : vector<2xf32>
    %1202 = vector.multi_reduction <minimumf>, %1201, %cst_279 [1] : vector<2x512xf32> to vector<2xf32>
    %1203 = vector.shape_cast %1202 : vector<2xf32> to vector<2x1xf32>
    %1204 = arith.fptosi %1203 : vector<2x1xf32> to vector<2x1xi32>
    %c44_i32 = arith.constant 44 : i32
    %1205 = vector.broadcast %c44_i32 : i32 to vector<2x50xi32>
    %1206 = arith.cmpi eq, %181, %1205 : vector<2x50xi32>
    %1207 = vector.shape_cast %1197 : vector<2x1xf32> to vector<2x1xf32>
    %1208 = vector.broadcast %1207 : vector<2x1xf32> to vector<2x50xf32>
    %1209 = arith.select %1206, %1208, %1186 : vector<2x50xi1>, vector<2x50xf32>
    %c44_i32_280 = arith.constant 44 : i32
    %1210 = vector.broadcast %c44_i32_280 : i32 to vector<2x50xi32>
    %1211 = arith.cmpi eq, %181, %1210 : vector<2x50xi32>
    %1212 = vector.shape_cast %1204 : vector<2x1xi32> to vector<2x1xi32>
    %1213 = vector.broadcast %1212 : vector<2x1xi32> to vector<2x50xi32>
    %1214 = arith.select %1211, %1213, %1191 : vector<2x50xi1>, vector<2x50xi32>
    %1215 = vector.broadcast %1204 : vector<2x1xi32> to vector<2x512xi32>
    %1216 = arith.cmpi eq, %4, %1215 : vector<2x512xi32>
    %cst_281 = arith.constant -3.40282347E+38 : f32
    %1217 = vector.broadcast %cst_281 : f32 to vector<2x512xf32>
    %1218 = arith.select %1216, %1217, %1195 : vector<2x512xi1>, vector<2x512xf32>
    %cst_282 = arith.constant dense<0xFF800000> : vector<2xf32>
    %1219 = vector.multi_reduction <maximumf>, %1218, %cst_282 [1] : vector<2x512xf32> to vector<2xf32>
    %1220 = vector.shape_cast %1219 : vector<2xf32> to vector<2x1xf32>
    %1221 = vector.broadcast %1220 : vector<2x1xf32> to vector<2x512xf32>
    %1222 = arith.cmpf oeq, %1218, %1221 : vector<2x512xf32>
    %cst_283 = arith.constant 5.120000e+02 : f32
    %1223 = vector.broadcast %cst_283 : f32 to vector<2x512xf32>
    %1224 = arith.select %1222, %6, %1223 : vector<2x512xi1>, vector<2x512xf32>
    %cst_284 = arith.constant dense<0x7F800000> : vector<2xf32>
    %1225 = vector.multi_reduction <minimumf>, %1224, %cst_284 [1] : vector<2x512xf32> to vector<2xf32>
    %1226 = vector.shape_cast %1225 : vector<2xf32> to vector<2x1xf32>
    %1227 = arith.fptosi %1226 : vector<2x1xf32> to vector<2x1xi32>
    %c45_i32 = arith.constant 45 : i32
    %1228 = vector.broadcast %c45_i32 : i32 to vector<2x50xi32>
    %1229 = arith.cmpi eq, %181, %1228 : vector<2x50xi32>
    %1230 = vector.shape_cast %1220 : vector<2x1xf32> to vector<2x1xf32>
    %1231 = vector.broadcast %1230 : vector<2x1xf32> to vector<2x50xf32>
    %1232 = arith.select %1229, %1231, %1209 : vector<2x50xi1>, vector<2x50xf32>
    %c45_i32_285 = arith.constant 45 : i32
    %1233 = vector.broadcast %c45_i32_285 : i32 to vector<2x50xi32>
    %1234 = arith.cmpi eq, %181, %1233 : vector<2x50xi32>
    %1235 = vector.shape_cast %1227 : vector<2x1xi32> to vector<2x1xi32>
    %1236 = vector.broadcast %1235 : vector<2x1xi32> to vector<2x50xi32>
    %1237 = arith.select %1234, %1236, %1214 : vector<2x50xi1>, vector<2x50xi32>
    %1238 = vector.broadcast %1227 : vector<2x1xi32> to vector<2x512xi32>
    %1239 = arith.cmpi eq, %4, %1238 : vector<2x512xi32>
    %cst_286 = arith.constant -3.40282347E+38 : f32
    %1240 = vector.broadcast %cst_286 : f32 to vector<2x512xf32>
    %1241 = arith.select %1239, %1240, %1218 : vector<2x512xi1>, vector<2x512xf32>
    %cst_287 = arith.constant dense<0xFF800000> : vector<2xf32>
    %1242 = vector.multi_reduction <maximumf>, %1241, %cst_287 [1] : vector<2x512xf32> to vector<2xf32>
    %1243 = vector.shape_cast %1242 : vector<2xf32> to vector<2x1xf32>
    %1244 = vector.broadcast %1243 : vector<2x1xf32> to vector<2x512xf32>
    %1245 = arith.cmpf oeq, %1241, %1244 : vector<2x512xf32>
    %cst_288 = arith.constant 5.120000e+02 : f32
    %1246 = vector.broadcast %cst_288 : f32 to vector<2x512xf32>
    %1247 = arith.select %1245, %6, %1246 : vector<2x512xi1>, vector<2x512xf32>
    %cst_289 = arith.constant dense<0x7F800000> : vector<2xf32>
    %1248 = vector.multi_reduction <minimumf>, %1247, %cst_289 [1] : vector<2x512xf32> to vector<2xf32>
    %1249 = vector.shape_cast %1248 : vector<2xf32> to vector<2x1xf32>
    %1250 = arith.fptosi %1249 : vector<2x1xf32> to vector<2x1xi32>
    %c46_i32 = arith.constant 46 : i32
    %1251 = vector.broadcast %c46_i32 : i32 to vector<2x50xi32>
    %1252 = arith.cmpi eq, %181, %1251 : vector<2x50xi32>
    %1253 = vector.shape_cast %1243 : vector<2x1xf32> to vector<2x1xf32>
    %1254 = vector.broadcast %1253 : vector<2x1xf32> to vector<2x50xf32>
    %1255 = arith.select %1252, %1254, %1232 : vector<2x50xi1>, vector<2x50xf32>
    %c46_i32_290 = arith.constant 46 : i32
    %1256 = vector.broadcast %c46_i32_290 : i32 to vector<2x50xi32>
    %1257 = arith.cmpi eq, %181, %1256 : vector<2x50xi32>
    %1258 = vector.shape_cast %1250 : vector<2x1xi32> to vector<2x1xi32>
    %1259 = vector.broadcast %1258 : vector<2x1xi32> to vector<2x50xi32>
    %1260 = arith.select %1257, %1259, %1237 : vector<2x50xi1>, vector<2x50xi32>
    %1261 = vector.broadcast %1250 : vector<2x1xi32> to vector<2x512xi32>
    %1262 = arith.cmpi eq, %4, %1261 : vector<2x512xi32>
    %cst_291 = arith.constant -3.40282347E+38 : f32
    %1263 = vector.broadcast %cst_291 : f32 to vector<2x512xf32>
    %1264 = arith.select %1262, %1263, %1241 : vector<2x512xi1>, vector<2x512xf32>
    %cst_292 = arith.constant dense<0xFF800000> : vector<2xf32>
    %1265 = vector.multi_reduction <maximumf>, %1264, %cst_292 [1] : vector<2x512xf32> to vector<2xf32>
    %1266 = vector.shape_cast %1265 : vector<2xf32> to vector<2x1xf32>
    %1267 = vector.broadcast %1266 : vector<2x1xf32> to vector<2x512xf32>
    %1268 = arith.cmpf oeq, %1264, %1267 : vector<2x512xf32>
    %cst_293 = arith.constant 5.120000e+02 : f32
    %1269 = vector.broadcast %cst_293 : f32 to vector<2x512xf32>
    %1270 = arith.select %1268, %6, %1269 : vector<2x512xi1>, vector<2x512xf32>
    %cst_294 = arith.constant dense<0x7F800000> : vector<2xf32>
    %1271 = vector.multi_reduction <minimumf>, %1270, %cst_294 [1] : vector<2x512xf32> to vector<2xf32>
    %1272 = vector.shape_cast %1271 : vector<2xf32> to vector<2x1xf32>
    %1273 = arith.fptosi %1272 : vector<2x1xf32> to vector<2x1xi32>
    %c47_i32 = arith.constant 47 : i32
    %1274 = vector.broadcast %c47_i32 : i32 to vector<2x50xi32>
    %1275 = arith.cmpi eq, %181, %1274 : vector<2x50xi32>
    %1276 = vector.shape_cast %1266 : vector<2x1xf32> to vector<2x1xf32>
    %1277 = vector.broadcast %1276 : vector<2x1xf32> to vector<2x50xf32>
    %1278 = arith.select %1275, %1277, %1255 : vector<2x50xi1>, vector<2x50xf32>
    %c47_i32_295 = arith.constant 47 : i32
    %1279 = vector.broadcast %c47_i32_295 : i32 to vector<2x50xi32>
    %1280 = arith.cmpi eq, %181, %1279 : vector<2x50xi32>
    %1281 = vector.shape_cast %1273 : vector<2x1xi32> to vector<2x1xi32>
    %1282 = vector.broadcast %1281 : vector<2x1xi32> to vector<2x50xi32>
    %1283 = arith.select %1280, %1282, %1260 : vector<2x50xi1>, vector<2x50xi32>
    %1284 = vector.broadcast %1273 : vector<2x1xi32> to vector<2x512xi32>
    %1285 = arith.cmpi eq, %4, %1284 : vector<2x512xi32>
    %cst_296 = arith.constant -3.40282347E+38 : f32
    %1286 = vector.broadcast %cst_296 : f32 to vector<2x512xf32>
    %1287 = arith.select %1285, %1286, %1264 : vector<2x512xi1>, vector<2x512xf32>
    %cst_297 = arith.constant dense<0xFF800000> : vector<2xf32>
    %1288 = vector.multi_reduction <maximumf>, %1287, %cst_297 [1] : vector<2x512xf32> to vector<2xf32>
    %1289 = vector.shape_cast %1288 : vector<2xf32> to vector<2x1xf32>
    %1290 = vector.broadcast %1289 : vector<2x1xf32> to vector<2x512xf32>
    %1291 = arith.cmpf oeq, %1287, %1290 : vector<2x512xf32>
    %cst_298 = arith.constant 5.120000e+02 : f32
    %1292 = vector.broadcast %cst_298 : f32 to vector<2x512xf32>
    %1293 = arith.select %1291, %6, %1292 : vector<2x512xi1>, vector<2x512xf32>
    %cst_299 = arith.constant dense<0x7F800000> : vector<2xf32>
    %1294 = vector.multi_reduction <minimumf>, %1293, %cst_299 [1] : vector<2x512xf32> to vector<2xf32>
    %1295 = vector.shape_cast %1294 : vector<2xf32> to vector<2x1xf32>
    %1296 = arith.fptosi %1295 : vector<2x1xf32> to vector<2x1xi32>
    %c48_i32 = arith.constant 48 : i32
    %1297 = vector.broadcast %c48_i32 : i32 to vector<2x50xi32>
    %1298 = arith.cmpi eq, %181, %1297 : vector<2x50xi32>
    %1299 = vector.shape_cast %1289 : vector<2x1xf32> to vector<2x1xf32>
    %1300 = vector.broadcast %1299 : vector<2x1xf32> to vector<2x50xf32>
    %1301 = arith.select %1298, %1300, %1278 : vector<2x50xi1>, vector<2x50xf32>
    %c48_i32_300 = arith.constant 48 : i32
    %1302 = vector.broadcast %c48_i32_300 : i32 to vector<2x50xi32>
    %1303 = arith.cmpi eq, %181, %1302 : vector<2x50xi32>
    %1304 = vector.shape_cast %1296 : vector<2x1xi32> to vector<2x1xi32>
    %1305 = vector.broadcast %1304 : vector<2x1xi32> to vector<2x50xi32>
    %1306 = arith.select %1303, %1305, %1283 : vector<2x50xi1>, vector<2x50xi32>
    %1307 = vector.broadcast %1296 : vector<2x1xi32> to vector<2x512xi32>
    %1308 = arith.cmpi eq, %4, %1307 : vector<2x512xi32>
    %cst_301 = arith.constant -3.40282347E+38 : f32
    %1309 = vector.broadcast %cst_301 : f32 to vector<2x512xf32>
    %1310 = arith.select %1308, %1309, %1287 : vector<2x512xi1>, vector<2x512xf32>
    %cst_302 = arith.constant dense<0xFF800000> : vector<2xf32>
    %1311 = vector.multi_reduction <maximumf>, %1310, %cst_302 [1] : vector<2x512xf32> to vector<2xf32>
    %1312 = vector.shape_cast %1311 : vector<2xf32> to vector<2x1xf32>
    %1313 = vector.broadcast %1312 : vector<2x1xf32> to vector<2x512xf32>
    %1314 = arith.cmpf oeq, %1310, %1313 : vector<2x512xf32>
    %cst_303 = arith.constant 5.120000e+02 : f32
    %1315 = vector.broadcast %cst_303 : f32 to vector<2x512xf32>
    %1316 = arith.select %1314, %6, %1315 : vector<2x512xi1>, vector<2x512xf32>
    %cst_304 = arith.constant dense<0x7F800000> : vector<2xf32>
    %1317 = vector.multi_reduction <minimumf>, %1316, %cst_304 [1] : vector<2x512xf32> to vector<2xf32>
    %1318 = vector.shape_cast %1317 : vector<2xf32> to vector<2x1xf32>
    %1319 = arith.fptosi %1318 : vector<2x1xf32> to vector<2x1xi32>
    %c49_i32 = arith.constant 49 : i32
    %1320 = vector.broadcast %c49_i32 : i32 to vector<2x50xi32>
    %1321 = arith.cmpi eq, %181, %1320 : vector<2x50xi32>
    %1322 = vector.shape_cast %1312 : vector<2x1xf32> to vector<2x1xf32>
    %1323 = vector.broadcast %1322 : vector<2x1xf32> to vector<2x50xf32>
    %1324 = arith.select %1321, %1323, %1301 : vector<2x50xi1>, vector<2x50xf32>
    %c49_i32_305 = arith.constant 49 : i32
    %1325 = vector.broadcast %c49_i32_305 : i32 to vector<2x50xi32>
    %1326 = arith.cmpi eq, %181, %1325 : vector<2x50xi32>
    %1327 = vector.shape_cast %1319 : vector<2x1xi32> to vector<2x1xi32>
    %1328 = vector.broadcast %1327 : vector<2x1xi32> to vector<2x50xi32>
    %1329 = arith.select %1326, %1328, %1306 : vector<2x50xi1>, vector<2x50xi32>
    %1330 = vector.broadcast %3 : f32 to vector<2x50xf32>
    %1331 = arith.divf %1324, %1330 : vector<2x50xf32>
    %cst_306 = arith.constant dense<0xFF800000> : vector<2xf32>
    %1332 = vector.multi_reduction <maximumf>, %1331, %cst_306 [1] : vector<2x50xf32> to vector<2xf32>
    %1333 = vector.shape_cast %1332 : vector<2xf32> to vector<2x1xf32>
    %1334 = vector.broadcast %1333 : vector<2x1xf32> to vector<2x50xf32>
    %1335 = arith.subf %1331, %1334 : vector<2x50xf32>
    %1336 = math.exp %1335 : vector<2x50xf32>
    %cst_307 = arith.constant dense<0.000000e+00> : vector<2xf32>
    %1337 = vector.multi_reduction <add>, %1336, %cst_307 [1] : vector<2x50xf32> to vector<2xf32>
    %1338 = vector.shape_cast %1337 : vector<2xf32> to vector<2x1xf32>
    %1339 = vector.broadcast %1338 : vector<2x1xf32> to vector<2x50xf32>
    %1340 = arith.divf %1336, %1339 : vector<2x50xf32>
    %1341 = tpu.iota {dimensions = array<i32: 0>} : vector<50x50xi32>
    %1342 = tpu.iota {dimensions = array<i32: 1>} : vector<50x50xi32>
    %1343 = arith.cmpi sle, %1341, %1342 : vector<50x50xi32>
    %1344 = arith.extui %1343 : vector<50x50xi1> to vector<50x50xi32>
    %1345 = arith.sitofp %1344 : vector<50x50xi32> to vector<50x50xf32>
    %cst_308 = arith.constant dense<0.000000e+00> : vector<2x50xf32>
    %1346 = tpu.matmul %1340, %1345, %cst_308 {dimension_numbers = #tpu.dot_dimension_numbers<[1], [0], [0], [1], [0, 0, 1, 1], [], []>} : vector<2x50xf32>, vector<50x50xf32>, vector<2x50xf32> -> vector<2x50xf32>
    %c5_i32_309 = arith.constant 5 : i32
    %1347 = vector.broadcast %c5_i32_309 : i32 to vector<2x50xi32>
    %1348 = arith.cmpi slt, %181, %1347 : vector<2x50xi32>
    %1349 = vector.broadcast %2 : f32 to vector<2x50xf32>
    %1350 = arith.cmpf olt, %1346, %1349 : vector<2x50xf32>
    %1351 = arith.ori %1350, %1348 : vector<2x50xi1>
    %cst_310 = arith.constant -1.000000e+03 : f32
    %1352 = vector.broadcast %cst_310 : f32 to vector<2x50xf32>
    %1353 = arith.select %1351, %1331, %1352 : vector<2x50xi1>, vector<2x50xf32>
    %cst_311 = arith.constant dense<0xFF800000> : vector<2xf32>
    %1354 = vector.multi_reduction <maximumf>, %1353, %cst_311 [1] : vector<2x50xf32> to vector<2xf32>
    %1355 = vector.shape_cast %1354 : vector<2xf32> to vector<2x1xf32>
    %1356 = vector.broadcast %1355 : vector<2x1xf32> to vector<2x50xf32>
    %1357 = arith.subf %1353, %1356 : vector<2x50xf32>
    %1358 = math.exp %1357 : vector<2x50xf32>
    %cst_312 = arith.constant dense<0.000000e+00> : vector<2xf32>
    %1359 = vector.multi_reduction <add>, %1358, %cst_312 [1] : vector<2x50xf32> to vector<2xf32>
    %1360 = vector.shape_cast %1359 : vector<2xf32> to vector<2x1xf32>
    %1361 = vector.broadcast %1360 : vector<2x1xf32> to vector<2x50xf32>
    %1362 = arith.divf %1358, %1361 : vector<2x50xf32>
    %c0_313 = arith.constant 0 : index
    %c0_314 = arith.constant 0 : index
    %1363 = vector.load %arg5[%c0_313, %c0_314] : memref<2x50xf32, #tpu.memory_space<vmem>>, vector<2x50xf32>
    tpu.vector_store %arg5[%c0_313, %c0_314], %1362 {strides = array<i32>} : memref<2x50xf32, #tpu.memory_space<vmem>>, vector<2x50xf32>,
    %c0_315 = arith.constant 0 : index
    %c0_316 = arith.constant 0 : index
    %1364 = vector.load %arg6[%c0_315, %c0_316] : memref<2x50xi32, #tpu.memory_space<vmem>>, vector<2x50xi32>
    tpu.vector_store %arg6[%c0_315, %c0_316], %1329 {strides = array<i32>} : memref<2x50xi32, #tpu.memory_space<vmem>>, vector<2x50xi32>,
    return
  }
}

</mosaic_0001>

<llo_original>
// kernel: penalty_sample_head.1
$region0: #{penalty_sample_head.1}
  #allocation0 [shape = 'u32[]', space=smem, size = 0x4, offset = 0x4, fixed_abs, tag = 'smem constant byte address 0x4 - core index']
  #allocation1 [shape = 'u32[144,128]{1,0:T(1,128)}', space=vmem, size = 0x12000, scoped, tag = 'internal scratch']
  #allocation2 [shape = 'f32[1]{0:T(128)S(6)}', space=smem, size = 0x200, scoped, tag = 'scoped memory for penalty_sample_head.1']
  #allocation3 [shape = 'f32[1]{0:T(128)S(6)}', space=smem, size = 0x200, scoped, tag = 'scoped memory for penalty_sample_head.1']
  #allocation4 [shape = 'f32[1]{0:T(128)S(6)}', space=smem, size = 0x200, scoped, tag = 'scoped memory for penalty_sample_head.1']
  %s0 = inlined_call_operand.vmem [shape: f32[2,512], index: 0, kind: input, shape index: {}]
  %s1 = inlined_call_operand.vmem [shape: s32[2,16], index: 1, kind: input, shape index: {}]
  %s2 = inlined_call_operand.<no memory space> [shape: f32[1], index: 2, kind: input, shape index: {}]
  %s3 = inlined_call_operand.<no memory space> [shape: f32[1], index: 3, kind: input, shape index: {}]
  %s4 = inlined_call_operand.<no memory space> [shape: f32[1], index: 4, kind: input, shape index: {}]
  %s5 = inlined_call_operand.hbm [shape: f32[2,50], index: 5, kind: output, shape index: {0}]
  %s6 = inlined_call_operand.hbm [shape: s32[2,50], index: 6, kind: output, shape index: {1}]
  %7 = xla_tuple %s5, %s6
  %s8 = sld [smem:[#allocation0]]
  $region42: #{penalty_sample_head.1} parent=0
    _
  %s10 = ssub.s32 1, %s8
  %s11 = scalar_select 0, %s10, %s8
  %12 = sst [smem:[#allocation2]] %s2
  %13 = sst [smem:[#allocation3]] %s3
  %14 = sst [smem:[#allocation4]] %s4
  $region1: #{penalty_sample_head.1} parent=0
    #allocation5 [shape = 'u8[1024]{0}', space=smem, size = 0x400, scoped, tag = 'input window, operand 1, single buffered']
    #allocation6 [shape = 's32[1]{0}', space=sflag, size = 0x4, scoped, tag = 'scoped memory for penalty_sample_head.1']
    #allocation7 [shape = 's32[1]{0}', space=sflag, size = 0x4, scoped, tag = 'scoped memory for penalty_sample_head.1']
    #allocation8 [shape = 'u8[1024]{0}', space=vmem, size = 0x400, scoped, tag = 'output window, operand 0, single buffered']
    #allocation9 [shape = 'u8[1024]{0}', space=vmem, size = 0x400, scoped, tag = 'output window, operand 1, single buffered']
    #allocation10 [shape = 's32[1]{0}', space=sflag, size = 0x4, scoped, tag = 'scoped memory for penalty_sample_head.1']
    %15 = vsyncpa [#allocation7], 0
    %16 = vsyncpa [#allocation6], 0
    %17 = vsyncpa [#allocation10], 0
    // Predicated region
    $region2: #{penalty_sample_head.1} parent=1 // pred_check
      _
    $region3: #{penalty_sample_head.1} parent=1 // pred_check_branch
      %19 = sbr.rel (0) target = $region5
    $region4: #{penalty_sample_head.1} parent=1 // pred_region
      _
    $region5: #{penalty_sample_head.1} parent=1 // pred_fallthru
      _
    // Predicated region
    $region6: #{penalty_sample_head.1} parent=1 // pred_check
      _
    $region7: #{penalty_sample_head.1} parent=1 // pred_check_branch
      %21 = sbr.rel (0) target = $region9
    $region8: #{penalty_sample_head.1} parent=1 // pred_region
      %s23 = ssub.s32 32, 32
      %24 = vsyncadd [#allocation7], %s23
      %s26 = sshll.u32 %s1, 4
      %s27 = int_to_ptr.vmem [resolvable:$true] %s26
      %29 = dma.vmem_to_smem %s27, 32, [#allocation5], [#allocation7]
    $region9: #{penalty_sample_head.1} parent=1 // pred_fallthru
      _
    // Predicated region
    $region10: #{penalty_sample_head.1} parent=1 // pred_check
      _
    $region11: #{penalty_sample_head.1} parent=1 // pred_check_branch
      %31 = sbr.rel (0) target = $region13
    $region12: #{penalty_sample_head.1} parent=1 // pred_region
      _
    $region13: #{penalty_sample_head.1} parent=1 // pred_fallthru
      _
    // Predicated region
    $region14: #{penalty_sample_head.1} parent=1 // pred_check
      _
    $region15: #{penalty_sample_head.1} parent=1 // pred_check_branch
      %33 = sbr.rel (0) target = $region17
    $region16: #{penalty_sample_head.1} parent=1 // pred_region
      _
    $region17: #{penalty_sample_head.1} parent=1 // pred_fallthru
      _
    // Predicated region
    $region18: #{penalty_sample_head.1} parent=1 // pred_check
      _
    $region19: #{penalty_sample_head.1} parent=1 // pred_check_branch
      %35 = sbr.rel (0) target = $region21
    $region20: #{penalty_sample_head.1} parent=1 // pred_region
      _
    $region21: #{penalty_sample_head.1} parent=1 // pred_fallthru
      _
    // Predicated region
    $region22: #{penalty_sample_head.1} parent=1 // pred_check
      _
    $region23: #{penalty_sample_head.1} parent=1 // pred_check_branch
      %37 = sbr.rel (0) target = $region25
    $region24: #{penalty_sample_head.1} parent=1 // pred_region
      %38 = dma.done [#allocation7], 32
    $region25: #{penalty_sample_head.1} parent=1 // pred_fallthru
      _
    %39 = sfence
    %v40 = vld [vmem:[%s0] sm:$0xff]
    %s41 = sld [smem:[#allocation4]]
    %s42 = sld [smem:[#allocation2]]
    %s43 = sld [smem:[#allocation3]]
    %v44 = vlaneseq
    %v45 = vand.u32 %v44, 127
    %v46 = vadd.s32 %v45, 128
    %v47 = vadd.s32 %v45, 256
    %v48 = vadd.s32 %v45, 384
    %v49 = vlaneseq
    %v50 = vshrl.u32 %v49, 7
    %v51 = vcvt.s32.f32 %v45
    %v52 = vcvt.s32.f32 %v46
    %v53 = vcvt.s32.f32 %v47
    %v54 = vcvt.s32.f32 %v48
    %vm55 = vcmp.eq.s32.totalorder %v45, 4294967295
    %vm56 = vcmp.eq.s32.totalorder %v46, 4294967295
    %vm57 = vcmp.eq.s32.totalorder %v47, 4294967295
    %vm58 = vcmp.eq.s32.totalorder %v48, 4294967295
    %vm59 = vcmp.eq.s32.totalorder %v50, 0
    %s60 = sld [smem:[#allocation5]]
    %v61 = vstv %s60
    %vm62 = vcmp.eq.s32.totalorder %v45, %v61
    %vm63 = vcmp.eq.s32.totalorder %v46, %v61
    %vm64 = vcmp.eq.s32.totalorder %v47, %v61
    %vm65 = vcmp.eq.s32.totalorder %v48, %v61
    %vm66 = vmand %vm59, %vm62
    %vm67 = vmand %vm59, %vm63
    %vm68 = vmand %vm59, %vm64
    %vm69 = vmand %vm59, %vm65
    %vm70 = vmor %vm55, %vm66
    %vm71 = vmor %vm56, %vm67
    %vm72 = vmor %vm57, %vm68
    %vm73 = vmor %vm58, %vm69
    %s74 = sld [smem:[#allocation5 + $0x1]]
    %v75 = vstv %s74
    %vm76 = vcmp.eq.s32.totalorder %v45, %v75
    %vm77 = vcmp.eq.s32.totalorder %v46, %v75
    %vm78 = vcmp.eq.s32.totalorder %v47, %v75
    %vm79 = vcmp.eq.s32.totalorder %v48, %v75
    %vm80 = vmand %vm59, %vm76
    %vm81 = vmand %vm59, %vm77
    %vm82 = vmand %vm59, %vm78
    %vm83 = vmand %vm59, %vm79
    %vm84 = vmor %vm70, %vm80
    %vm85 = vmor %vm71, %vm81
    %vm86 = vmor %vm72, %vm82
    %vm87 = vmor %vm73, %vm83
    %s88 = sld [smem:[#allocation5 + $0x2]]
    %v89 = vstv %s88
    %vm90 = vcmp.eq.s32.totalorder %v45, %v89
    %vm91 = vcmp.eq.s32.totalorder %v46, %v89
    %vm92 = vcmp.eq.s32.totalorder %v47, %v89
    %vm93 = vcmp.eq.s32.totalorder %v48, %v89
    %vm94 = vmand %vm59, %vm90
    %vm95 = vmand %vm59, %vm91
    %vm96 = vmand %vm59, %vm92
    %vm97 = vmand %vm59, %vm93
    %vm98 = vmor %vm84, %vm94
    %vm99 = vmor %vm85, %vm95
    %vm100 = vmor %vm86, %vm96
    %vm101 = vmor %vm87, %vm97
    %s102 = sld [smem:[#allocation5 + $0x3]]
    %v103 = vstv %s102
    %vm104 = vcmp.eq.s32.totalorder %v45, %v103
    %vm105 = vcmp.eq.s32.totalorder %v46, %v103
    %vm106 = vcmp.eq.s32.totalorder %v47, %v103
    %vm107 = vcmp.eq.s32.totalorder %v48, %v103
    %vm108 = vmand %vm59, %vm104
    %vm109 = vmand %vm59, %vm105
    %vm110 = vmand %vm59, %vm106
    %vm111 = vmand %vm59, %vm107
    %vm112 = vmor %vm98, %vm108
    %vm113 = vmor %vm99, %vm109
    %vm114 = vmor %vm100, %vm110
    %vm115 = vmor %vm101, %vm111
    %s116 = sld [smem:[#allocation5 + $0x4]]
    %v117 = vstv %s116
    %vm118 = vcmp.eq.s32.totalorder %v45, %v117
    %vm119 = vcmp.eq.s32.totalorder %v46, %v117
    %vm120 = vcmp.eq.s32.totalorder %v47, %v117
    %vm121 = vcmp.eq.s32.totalorder %v48, %v117
    %vm122 = vmand %vm59, %vm118
    %vm123 = vmand %vm59, %vm119
    %vm124 = vmand %vm59, %vm120
    %vm125 = vmand %vm59, %vm121
    %vm126 = vmor %vm112, %vm122
    %vm127 = vmor %vm113, %vm123
    %vm128 = vmor %vm114, %vm124
    %vm129 = vmor %vm115, %vm125
    %s130 = sld [smem:[#allocation5 + $0x5]]
    %v131 = vstv %s130
    %vm132 = vcmp.eq.s32.totalorder %v45, %v131
    %vm133 = vcmp.eq.s32.totalorder %v46, %v131
    %vm134 = vcmp.eq.s32.totalorder %v47, %v131
    %vm135 = vcmp.eq.s32.totalorder %v48, %v131
    %vm136 = vmand %vm59, %vm132
    %vm137 = vmand %vm59, %vm133
    %vm138 = vmand %vm59, %vm134
    %vm139 = vmand %vm59, %vm135
    %vm140 = vmor %vm126, %vm136
    %vm141 = vmor %vm127, %vm137
    %vm142 = vmor %vm128, %vm138
    %vm143 = vmor %vm129, %vm139
    %s144 = sld [smem:[#allocation5 + $0x6]]
    %v145 = vstv %s144
    %vm146 = vcmp.eq.s32.totalorder %v45, %v145
    %vm147 = vcmp.eq.s32.totalorder %v46, %v145
    %vm148 = vcmp.eq.s32.totalorder %v47, %v145
    %vm149 = vcmp.eq.s32.totalorder %v48, %v145
    %vm150 = vmand %vm59, %vm146
    %vm151 = vmand %vm59, %vm147
    %vm152 = vmand %vm59, %vm148
    %vm153 = vmand %vm59, %vm149
    %vm154 = vmor %vm140, %vm150
    %vm155 = vmor %vm141, %vm151
    %vm156 = vmor %vm142, %vm152
    %vm157 = vmor %vm143, %vm153
    %s158 = sld [smem:[#allocation5 + $0x7]]
    %v159 = vstv %s158
    %vm160 = vcmp.eq.s32.totalorder %v45, %v159
    %vm161 = vcmp.eq.s32.totalorder %v46, %v159
    %vm162 = vcmp.eq.s32.totalorder %v47, %v159
    %vm163 = vcmp.eq.s32.totalorder %v48, %v159
    %vm164 = vmand %vm59, %vm160
    %vm165 = vmand %vm59, %vm161
    %vm166 = vmand %vm59, %vm162
    %vm167 = vmand %vm59, %vm163
    %vm168 = vmor %vm154, %vm164
    %vm169 = vmor %vm155, %vm165
    %vm170 = vmor %vm156, %vm166
    %vm171 = vmor %vm157, %vm167
    %s172 = sld [smem:[#allocation5 + $0x8]]
    %v173 = vstv %s172
    %vm174 = vcmp.eq.s32.totalorder %v45, %v173
    %vm175 = vcmp.eq.s32.totalorder %v46, %v173
    %vm176 = vcmp.eq.s32.totalorder %v47, %v173
    %vm177 = vcmp.eq.s32.totalorder %v48, %v173
    %vm178 = vmand %vm59, %vm174
    %vm179 = vmand %vm59, %vm175
    %vm180 = vmand %vm59, %vm176
    %vm181 = vmand %vm59, %vm177
    %vm182 = vmor %vm168, %vm178
    %vm183 = vmor %vm169, %vm179
    %vm184 = vmor %vm170, %vm180
    %vm185 = vmor %vm171, %vm181
    %s186 = sld [smem:[#allocation5 + $0x9]]
    %v187 = vstv %s186
    %vm188 = vcmp.eq.s32.totalorder %v45, %v187
    %vm189 = vcmp.eq.s32.totalorder %v46, %v187
    %vm190 = vcmp.eq.s32.totalorder %v47, %v187
    %vm191 = vcmp.eq.s32.totalorder %v48, %v187
    %vm192 = vmand %vm59, %vm188
    %vm193 = vmand %vm59, %vm189
    %vm194 = vmand %vm59, %vm190
    %vm195 = vmand %vm59, %vm191
    %vm196 = vmor %vm182, %vm192
    %vm197 = vmor %vm183, %vm193
    %vm198 = vmor %vm184, %vm194
    %vm199 = vmor %vm185, %vm195
    %s200 = sld [smem:[#allocation5 + $0xa]]
    %v201 = vstv %s200
    %vm202 = vcmp.eq.s32.totalorder %v45, %v201
    %vm203 = vcmp.eq.s32.totalorder %v46, %v201
    %vm204 = vcmp.eq.s32.totalorder %v47, %v201
    %vm205 = vcmp.eq.s32.totalorder %v48, %v201
    %vm206 = vmand %vm59, %vm202
    %vm207 = vmand %vm59, %vm203
    %vm208 = vmand %vm59, %vm204
    %vm209 = vmand %vm59, %vm205
    %vm210 = vmor %vm196, %vm206
    %vm211 = vmor %vm197, %vm207
    %vm212 = vmor %vm198, %vm208
    %vm213 = vmor %vm199, %vm209
    %s214 = sld [smem:[#allocation5 + $0xb]]
    %v215 = vstv %s214
    %vm216 = vcmp.eq.s32.totalorder %v45, %v215
    %vm217 = vcmp.eq.s32.totalorder %v46, %v215
    %vm218 = vcmp.eq.s32.totalorder %v47, %v215
    %vm219 = vcmp.eq.s32.totalorder %v48, %v215
    %vm220 = vmand %vm59, %vm216
    %vm221 = vmand %vm59, %vm217
    %vm222 = vmand %vm59, %vm218
    %vm223 = vmand %vm59, %vm219
    %vm224 = vmor %vm210, %vm220
    %vm225 = vmor %vm211, %vm221
    %vm226 = vmor %vm212, %vm222
    %vm227 = vmor %vm213, %vm223
    %s228 = sld [smem:[#allocation5 + $0xc]]
    %v229 = vstv %s228
    %vm230 = vcmp.eq.s32.totalorder %v45, %v229
    %vm231 = vcmp.eq.s32.totalorder %v46, %v229
    %vm232 = vcmp.eq.s32.totalorder %v47, %v229
    %vm233 = vcmp.eq.s32.totalorder %v48, %v229
    %vm234 = vmand %vm59, %vm230
    %vm235 = vmand %vm59, %vm231
    %vm236 = vmand %vm59, %vm232
    %vm237 = vmand %vm59, %vm233
    %vm238 = vmor %vm224, %vm234
    %vm239 = vmor %vm225, %vm235
    %vm240 = vmor %vm226, %vm236
    %vm241 = vmor %vm227, %vm237
    %s242 = sld [smem:[#allocation5 + $0xd]]
    %v243 = vstv %s242
    %vm244 = vcmp.eq.s32.totalorder %v45, %v243
    %vm245 = vcmp.eq.s32.totalorder %v46, %v243
    %vm246 = vcmp.eq.s32.totalorder %v47, %v243
    %vm247 = vcmp.eq.s32.totalorder %v48, %v243
    %vm248 = vmand %vm59, %vm244
    %vm249 = vmand %vm59, %vm245
    %vm250 = vmand %vm59, %vm246
    %vm251 = vmand %vm59, %vm247
    %vm252 = vmor %vm238, %vm248
    %vm253 = vmor %vm239, %vm249
    %vm254 = vmor %vm240, %vm250
    %vm255 = vmor %vm241, %vm251
    %s256 = sld [smem:[#allocation5 + $0xe]]
    %v257 = vstv %s256
    %vm258 = vcmp.eq.s32.totalorder %v45, %v257
    %vm259 = vcmp.eq.s32.totalorder %v46, %v257
    %vm260 = vcmp.eq.s32.totalorder %v47, %v257
    %vm261 = vcmp.eq.s32.totalorder %v48, %v257
    %vm262 = vmand %vm59, %vm258
    %vm263 = vmand %vm59, %vm259
    %vm264 = vmand %vm59, %vm260
    %vm265 = vmand %vm59, %vm261
    %vm266 = vmor %vm252, %vm262
    %vm267 = vmor %vm253, %vm263
    %vm268 = vmor %vm254, %vm264
    %vm269 = vmor %vm255, %vm265
    %s270 = sld [smem:[#allocation5 + $0xf]]
    %v271 = vstv %s270
    %vm272 = vcmp.eq.s32.totalorder %v45, %v271
    %vm273 = vcmp.eq.s32.totalorder %v46, %v271
    %vm274 = vcmp.eq.s32.totalorder %v47, %v271
    %vm275 = vcmp.eq.s32.totalorder %v48, %v271
    %vm276 = vmand %vm59, %vm272
    %vm277 = vmand %vm59, %vm273
    %vm278 = vmand %vm59, %vm274
    %vm279 = vmand %vm59, %vm275
    %vm280 = vmor %vm266, %vm276
    %vm281 = vmor %vm267, %vm277
    %vm282 = vmor %vm268, %vm278
    %vm283 = vmor %vm269, %vm279
    %vm284 = vcmp.eq.s32.totalorder %v50, 1
    %s285 = sld [smem:[#allocation5 + $0x80]]
    %v286 = vstv %s285
    %vm287 = vcmp.eq.s32.totalorder %v45, %v286
    %vm288 = vcmp.eq.s32.totalorder %v46, %v286
    %vm289 = vcmp.eq.s32.totalorder %v47, %v286
    %vm290 = vcmp.eq.s32.totalorder %v48, %v286
    %vm291 = vmand %vm284, %vm287
    %vm292 = vmand %vm284, %vm288
    %vm293 = vmand %vm284, %vm289
    %vm294 = vmand %vm284, %vm290
    %vm295 = vmor %vm280, %vm291
    %vm296 = vmor %vm281, %vm292
    %vm297 = vmor %vm282, %vm293
    %vm298 = vmor %vm283, %vm294
    %s299 = sld [smem:[#allocation5 + $0x81]]
    %v300 = vstv %s299
    %vm301 = vcmp.eq.s32.totalorder %v45, %v300
    %vm302 = vcmp.eq.s32.totalorder %v46, %v300
    %vm303 = vcmp.eq.s32.totalorder %v47, %v300
    %vm304 = vcmp.eq.s32.totalorder %v48, %v300
    %vm305 = vmand %vm284, %vm301
    %vm306 = vmand %vm284, %vm302
    %vm307 = vmand %vm284, %vm303
    %vm308 = vmand %vm284, %vm304
    %vm309 = vmor %vm295, %vm305
    %vm310 = vmor %vm296, %vm306
    %vm311 = vmor %vm297, %vm307
    %vm312 = vmor %vm298, %vm308
    %s313 = sld [smem:[#allocation5 + $0x82]]
    %v314 = vstv %s313
    %vm315 = vcmp.eq.s32.totalorder %v45, %v314
    %vm316 = vcmp.eq.s32.totalorder %v46, %v314
    %vm317 = vcmp.eq.s32.totalorder %v47, %v314
    %vm318 = vcmp.eq.s32.totalorder %v48, %v314
    %vm319 = vmand %vm284, %vm315
    %vm320 = vmand %vm284, %vm316
    %vm321 = vmand %vm284, %vm317
    %vm322 = vmand %vm284, %vm318
    %vm323 = vmor %vm309, %vm319
    %vm324 = vmor %vm310, %vm320
    %vm325 = vmor %vm311, %vm321
    %vm326 = vmor %vm312, %vm322
    %s327 = sld [smem:[#allocation5 + $0x83]]
    %v328 = vstv %s327
    %vm329 = vcmp.eq.s32.totalorder %v45, %v328
    %vm330 = vcmp.eq.s32.totalorder %v46, %v328
    %vm331 = vcmp.eq.s32.totalorder %v47, %v328
    %vm332 = vcmp.eq.s32.totalorder %v48, %v328
    %vm333 = vmand %vm284, %vm329
    %vm334 = vmand %vm284, %vm330
    %vm335 = vmand %vm284, %vm331
    %vm336 = vmand %vm284, %vm332
    %vm337 = vmor %vm323, %vm333
    %vm338 = vmor %vm324, %vm334
    %vm339 = vmor %vm325, %vm335
    %vm340 = vmor %vm326, %vm336
    %s341 = sld [smem:[#allocation5 + $0x84]]
    %v342 = vstv %s341
    %vm343 = vcmp.eq.s32.totalorder %v45, %v342
    %vm344 = vcmp.eq.s32.totalorder %v46, %v342
    %vm345 = vcmp.eq.s32.totalorder %v47, %v342
    %vm346 = vcmp.eq.s32.totalorder %v48, %v342
    %vm347 = vmand %vm284, %vm343
    %vm348 = vmand %vm284, %vm344
    %vm349 = vmand %vm284, %vm345
    %vm350 = vmand %vm284, %vm346
    %vm351 = vmor %vm337, %vm347
    %vm352 = vmor %vm338, %vm348
    %vm353 = vmor %vm339, %vm349
    %vm354 = vmor %vm340, %vm350
    %s355 = sld [smem:[#allocation5 + $0x85]]
    %v356 = vstv %s355
    %vm357 = vcmp.eq.s32.totalorder %v45, %v356
    %vm358 = vcmp.eq.s32.totalorder %v46, %v356
    %vm359 = vcmp.eq.s32.totalorder %v47, %v356
    %vm360 = vcmp.eq.s32.totalorder %v48, %v356
    %vm361 = vmand %vm284, %vm357
    %vm362 = vmand %vm284, %vm358
    %vm363 = vmand %vm284, %vm359
    %vm364 = vmand %vm284, %vm360
    %vm365 = vmor %vm351, %vm361
    %vm366 = vmor %vm352, %vm362
    %vm367 = vmor %vm353, %vm363
    %vm368 = vmor %vm354, %vm364
    %s369 = sld [smem:[#allocation5 + $0x86]]
    %v370 = vstv %s369
    %vm371 = vcmp.eq.s32.totalorder %v45, %v370
    %vm372 = vcmp.eq.s32.totalorder %v46, %v370
    %vm373 = vcmp.eq.s32.totalorder %v47, %v370
    %vm374 = vcmp.eq.s32.totalorder %v48, %v370
    %vm375 = vmand %vm284, %vm371
    %vm376 = vmand %vm284, %vm372
    %vm377 = vmand %vm284, %vm373
    %vm378 = vmand %vm284, %vm374
    %vm379 = vmor %vm365, %vm375
    %vm380 = vmor %vm366, %vm376
    %vm381 = vmor %vm367, %vm377
    %vm382 = vmor %vm368, %vm378
    %s383 = sld [smem:[#allocation5 + $0x87]]
    %v384 = vstv %s383
    %vm385 = vcmp.eq.s32.totalorder %v45, %v384
    %vm386 = vcmp.eq.s32.totalorder %v46, %v384
    %vm387 = vcmp.eq.s32.totalorder %v47, %v384
    %vm388 = vcmp.eq.s32.totalorder %v48, %v384
    %vm389 = vmand %vm284, %vm385
    %vm390 = vmand %vm284, %vm386
    %vm391 = vmand %vm284, %vm387
    %vm392 = vmand %vm284, %vm388
    %vm393 = vmor %vm379, %vm389
    %vm394 = vmor %vm380, %vm390
    %vm395 = vmor %vm381, %vm391
    %vm396 = vmor %vm382, %vm392
    %s397 = sld [smem:[#allocation5 + $0x88]]
    %v398 = vstv %s397
    %vm399 = vcmp.eq.s32.totalorder %v45, %v398
    %vm400 = vcmp.eq.s32.totalorder %v46, %v398
    %vm401 = vcmp.eq.s32.totalorder %v47, %v398
    %vm402 = vcmp.eq.s32.totalorder %v48, %v398
    %vm403 = vmand %vm284, %vm399
    %vm404 = vmand %vm284, %vm400
    %vm405 = vmand %vm284, %vm401
    %vm406 = vmand %vm284, %vm402
    %vm407 = vmor %vm393, %vm403
    %vm408 = vmor %vm394, %vm404
    %vm409 = vmor %vm395, %vm405
    %vm410 = vmor %vm396, %vm406
    %s411 = sld [smem:[#allocation5 + $0x89]]
    %v412 = vstv %s411
    %vm413 = vcmp.eq.s32.totalorder %v45, %v412
    %vm414 = vcmp.eq.s32.totalorder %v46, %v412
    %vm415 = vcmp.eq.s32.totalorder %v47, %v412
    %vm416 = vcmp.eq.s32.totalorder %v48, %v412
    %vm417 = vmand %vm284, %vm413
    %vm418 = vmand %vm284, %vm414
    %vm419 = vmand %vm284, %vm415
    %vm420 = vmand %vm284, %vm416
    %vm421 = vmor %vm407, %vm417
    %vm422 = vmor %vm408, %vm418
    %vm423 = vmor %vm409, %vm419
    %vm424 = vmor %vm410, %vm420
    %s425 = sld [smem:[#allocation5 + $0x8a]]
    %v426 = vstv %s425
    %vm427 = vcmp.eq.s32.totalorder %v45, %v426
    %vm428 = vcmp.eq.s32.totalorder %v46, %v426
    %vm429 = vcmp.eq.s32.totalorder %v47, %v426
    %vm430 = vcmp.eq.s32.totalorder %v48, %v426
    %vm431 = vmand %vm284, %vm427
    %vm432 = vmand %vm284, %vm428
    %vm433 = vmand %vm284, %vm429
    %vm434 = vmand %vm284, %vm430
    %vm435 = vmor %vm421, %vm431
    %vm436 = vmor %vm422, %vm432
    %vm437 = vmor %vm423, %vm433
    %vm438 = vmor %vm424, %vm434
    %s439 = sld [smem:[#allocation5 + $0x8b]]
    %v440 = vstv %s439
    %vm441 = vcmp.eq.s32.totalorder %v45, %v440
    %vm442 = vcmp.eq.s32.totalorder %v46, %v440
    %vm443 = vcmp.eq.s32.totalorder %v47, %v440
    %vm444 = vcmp.eq.s32.totalorder %v48, %v440
    %vm445 = vmand %vm284, %vm441
    %vm446 = vmand %vm284, %vm442
    %vm447 = vmand %vm284, %vm443
    %vm448 = vmand %vm284, %vm444
    %vm449 = vmor %vm435, %vm445
    %vm450 = vmor %vm436, %vm446
    %vm451 = vmor %vm437, %vm447
    %vm452 = vmor %vm438, %vm448
    %s453 = sld [smem:[#allocation5 + $0x8c]]
    %v454 = vstv %s453
    %vm455 = vcmp.eq.s32.totalorder %v45, %v454
    %vm456 = vcmp.eq.s32.totalorder %v46, %v454
    %vm457 = vcmp.eq.s32.totalorder %v47, %v454
    %vm458 = vcmp.eq.s32.totalorder %v48, %v454
    %vm459 = vmand %vm284, %vm455
    %vm460 = vmand %vm284, %vm456
    %vm461 = vmand %vm284, %vm457
    %vm462 = vmand %vm284, %vm458
    %vm463 = vmor %vm449, %vm459
    %vm464 = vmor %vm450, %vm460
    %vm465 = vmor %vm451, %vm461
    %vm466 = vmor %vm452, %vm462
    %s467 = sld [smem:[#allocation5 + $0x8d]]
    %v468 = vstv %s467
    %vm469 = vcmp.eq.s32.totalorder %v45, %v468
    %vm470 = vcmp.eq.s32.totalorder %v46, %v468
    %vm471 = vcmp.eq.s32.totalorder %v47, %v468
    %vm472 = vcmp.eq.s32.totalorder %v48, %v468
    %vm473 = vmand %vm284, %vm469
    %vm474 = vmand %vm284, %vm470
    %vm475 = vmand %vm284, %vm471
    %vm476 = vmand %vm284, %vm472
    %vm477 = vmor %vm463, %vm473
    %vm478 = vmor %vm464, %vm474
    %vm479 = vmor %vm465, %vm475
    %vm480 = vmor %vm466, %vm476
    %s481 = sld [smem:[#allocation5 + $0x8e]]
    %v482 = vstv %s481
    %vm483 = vcmp.eq.s32.totalorder %v45, %v482
    %vm484 = vcmp.eq.s32.totalorder %v46, %v482
    %vm485 = vcmp.eq.s32.totalorder %v47, %v482
    %vm486 = vcmp.eq.s32.totalorder %v48, %v482
    %vm487 = vmand %vm284, %vm483
    %vm488 = vmand %vm284, %vm484
    %vm489 = vmand %vm284, %vm485
    %vm490 = vmand %vm284, %vm486
    %vm491 = vmor %vm477, %vm487
    %vm492 = vmor %vm478, %vm488
    %vm493 = vmor %vm479, %vm489
    %vm494 = vmor %vm480, %vm490
    %s495 = sld [smem:[#allocation5 + $0x8f]]
    %v496 = vstv %s495
    %vm497 = vcmp.eq.s32.totalorder %v45, %v496
    %vm498 = vcmp.eq.s32.totalorder %v46, %v496
    %vm499 = vcmp.eq.s32.totalorder %v47, %v496
    %vm500 = vcmp.eq.s32.totalorder %v48, %v496
    %vm501 = vmand %vm284, %vm497
    %vm502 = vmand %vm284, %vm498
    %vm503 = vmand %vm284, %vm499
    %vm504 = vmand %vm284, %vm500
    %vm505 = vmor %vm491, %vm501
    %vm506 = vmor %vm492, %vm502
    %vm507 = vmor %vm493, %vm503
    %vm508 = vmor %vm494, %vm504
    %vm509 = vcmp.lt.f32.partialorder %v40, 0.0
    %v510 = vstv %s41
    %v511 = vmul.f32 %v40, %v510
    %v512 = vrcp.pop %v510
    %v513 = vmul.f32 %v40, %v512
    %v514 = vsel %vm509, %v511, %v513
    %v516 = vcombine.high %v514, %v514
    %v518 = vunpack.c.l.s4 1983009808
    %v519 = vunpack.c.0.s8 %v518
    %v520 = vlaneseq
    %v521 = vshrl.u32 %v520, 7
    %v522 = vsub.s32 %v519, %v521
    %v523 = vrot.slane %v514, %v522
    %v525 = vunpack.c.l.s4 1983009808
    %v526 = vunpack.c.0.s8 %v525
    %v527 = vlaneseq
    %v528 = vshrl.u32 %v527, 7
    %v529 = vsub.s32 %v526, %v528
    %v530 = vrot.slane %v516, %v529
    %v531 = vcombine.high %v523, %v523
    %v532 = vcombine.high %v530, %v530
    %v538 = vcombine.high %v40, %v40
    %v540 = vunpack.c.l.s4 1983009808
    %v541 = vunpack.c.0.s8 %v540
    %v542 = vlaneseq
    %v543 = vshrl.u32 %v542, 7
    %v544 = vsub.s32 %v541, %v543
    %v545 = vrot.slane %v40, %v544
    %v547 = vunpack.c.l.s4 1983009808
    %v548 = vunpack.c.0.s8 %v547
    %v549 = vlaneseq
    %v550 = vshrl.u32 %v549, 7
    %v551 = vsub.s32 %v548, %v550
    %v552 = vrot.slane %v538, %v551
    %v553 = vcombine.high %v545, %v545
    %v554 = vcombine.high %v552, %v552
    %v559 = vsel %vm505, %v523, %v545
    %v560 = vsel %vm506, %v531, %v553
    %v561 = vsel %vm507, %v530, %v552
    %v562 = vsel %vm508, %v532, %v554
    %vm563 = vcmask 1041408
    %v564 = vsel %vm563, %v559, -inf
    %v565 = vsel %vm563, %v560, -inf
    %v566 = vsel %vm563, %v561, -inf
    %v567 = vsel %vm563, %v562, -inf
    %v568 = vmax.f32 %v564, %v565
    %v569 = vmax.f32 %v566, %v567
    %v570 = vmax.f32 %v568, %v569
    %571 = vmax.xlane.f32.xlu0 %v570
    %v572 = vpop.xlane.xlu0 %571
    %vm573 = vcmp.eq.f32.partialorder %v559, %v572
    %vm574 = vcmp.eq.f32.partialorder %v560, %v572
    %vm575 = vcmp.eq.f32.partialorder %v561, %v572
    %vm576 = vcmp.eq.f32.partialorder %v562, %v572
    %v577 = vsel %vm573, %v51, 512.0
    %v578 = vsel %vm574, %v52, 512.0
    %v579 = vsel %vm575, %v53, 512.0
    %v580 = vsel %vm576, %v54, 512.0
    %v581 = vsel %vm563, %v577, inf
    %v582 = vsel %vm563, %v578, inf
    %v583 = vsel %vm563, %v579, inf
    %v584 = vsel %vm563, %v580, inf
    %v585 = vmin.f32 %v581, %v582
    %v586 = vmin.f32 %v583, %v584
    %v587 = vmin.f32 %v585, %v586
    %588 = vmin.xlane.f32.xlu0 %v587
    %v589 = vpop.xlane.xlu0 %588
    %v590 = vcvt.f32.s32.to.zero.pseudo %v589
    %vm591 = vcmp.eq.s32.totalorder %v45, 0
    %v592 = vsel %vm591, %v572, -3.4028235e+38
    %v593 = vsel %vm591, %v590, 0
    %vm594 = vcmp.eq.s32.totalorder %v45, %v590
    %vm595 = vcmp.eq.s32.totalorder %v46, %v590
    %vm596 = vcmp.eq.s32.totalorder %v47, %v590
    %vm597 = vcmp.eq.s32.totalorder %v48, %v590
    %v598 = vsel %vm594, -3.4028235e+38, %v559
    %v599 = vsel %vm595, -3.4028235e+38, %v560
    %v600 = vsel %vm596, -3.4028235e+38, %v561
    %v601 = vsel %vm597, -3.4028235e+38, %v562
    %v602 = vsel %vm563, %v598, -inf
    %v603 = vsel %vm563, %v599, -inf
    %v604 = vsel %vm563, %v600, -inf
    %v605 = vsel %vm563, %v601, -inf
    %v606 = vmax.f32 %v602, %v603
    %v607 = vmax.f32 %v604, %v605
    %v608 = vmax.f32 %v606, %v607
    %609 = vmax.xlane.f32.xlu0 %v608
    %v610 = vpop.xlane.xlu0 %609
    %vm611 = vcmp.eq.f32.partialorder %v598, %v610
    %vm612 = vcmp.eq.f32.partialorder %v599, %v610
    %vm613 = vcmp.eq.f32.partialorder %v600, %v610
    %vm614 = vcmp.eq.f32.partialorder %v601, %v610
    %v615 = vsel %vm611, %v51, 512.0
    %v616 = vsel %vm612, %v52, 512.0
    %v617 = vsel %vm613, %v53, 512.0
    %v618 = vsel %vm614, %v54, 512.0
    %v619 = vsel %vm563, %v615, inf
    %v620 = vsel %vm563, %v616, inf
    %v621 = vsel %vm563, %v617, inf
    %v622 = vsel %vm563, %v618, inf
    %v623 = vmin.f32 %v619, %v620
    %v624 = vmin.f32 %v621, %v622
    %v625 = vmin.f32 %v623, %v624
    %626 = vmin.xlane.f32.xlu0 %v625
    %v627 = vpop.xlane.xlu0 %626
    %v628 = vcvt.f32.s32.to.zero.pseudo %v627
    %vm629 = vcmp.eq.s32.totalorder %v45, 1
    %v630 = vsel %vm629, %v610, %v592
    %v631 = vsel %vm629, %v628, %v593
    %vm632 = vcmp.eq.s32.totalorder %v45, %v628
    %vm633 = vcmp.eq.s32.totalorder %v46, %v628
    %vm634 = vcmp.eq.s32.totalorder %v47, %v628
    %vm635 = vcmp.eq.s32.totalorder %v48, %v628
    %v636 = vsel %vm632, -3.4028235e+38, %v598
    %v637 = vsel %vm633, -3.4028235e+38, %v599
    %v638 = vsel %vm634, -3.4028235e+38, %v600
    %v639 = vsel %vm635, -3.4028235e+38, %v601
    %v640 = vsel %vm563, %v636, -inf
    %v641 = vsel %vm563, %v637, -inf
    %v642 = vsel %vm563, %v638, -inf
    %v643 = vsel %vm563, %v639, -inf
    %v644 = vmax.f32 %v640, %v641
    %v645 = vmax.f32 %v642, %v643
    %v646 = vmax.f32 %v644, %v645
    %647 = vmax.xlane.f32.xlu0 %v646
    %v648 = vpop.xlane.xlu0 %647
    %vm649 = vcmp.eq.f32.partialorder %v636, %v648
    %vm650 = vcmp.eq.f32.partialorder %v637, %v648
    %vm651 = vcmp.eq.f32.partialorder %v638, %v648
    %vm652 = vcmp.eq.f32.partialorder %v639, %v648
    %v653 = vsel %vm649, %v51, 512.0
    %v654 = vsel %vm650, %v52, 512.0
    %v655 = vsel %vm651, %v53, 512.0
    %v656 = vsel %vm652, %v54, 512.0
    %v657 = vsel %vm563, %v653, inf
    %v658 = vsel %vm563, %v654, inf
    %v659 = vsel %vm563, %v655, inf
    %v660 = vsel %vm563, %v656, inf
    %v661 = vmin.f32 %v657, %v658
    %v662 = vmin.f32 %v659, %v660
    %v663 = vmin.f32 %v661, %v662
    %664 = vmin.xlane.f32.xlu0 %v663
    %v665 = vpop.xlane.xlu0 %664
    %v666 = vcvt.f32.s32.to.zero.pseudo %v665
    %vm667 = vcmp.eq.s32.totalorder %v45, 2
    %v668 = vsel %vm667, %v648, %v630
    %v669 = vsel %vm667, %v666, %v631
    %vm670 = vcmp.eq.s32.totalorder %v45, %v666
    %vm671 = vcmp.eq.s32.totalorder %v46, %v666
    %vm672 = vcmp.eq.s32.totalorder %v47, %v666
    %vm673 = vcmp.eq.s32.totalorder %v48, %v666
    %v674 = vsel %vm670, -3.4028235e+38, %v636
    %v675 = vsel %vm671, -3.4028235e+38, %v637
    %v676 = vsel %vm672, -3.4028235e+38, %v638
    %v677 = vsel %vm673, -3.4028235e+38, %v639
    %v678 = vsel %vm563, %v674, -inf
    %v679 = vsel %vm563, %v675, -inf
    %v680 = vsel %vm563, %v676, -inf
    %v681 = vsel %vm563, %v677, -inf
    %v682 = vmax.f32 %v678, %v679
    %v683 = vmax.f32 %v680, %v681
    %v684 = vmax.f32 %v682, %v683
    %685 = vmax.xlane.f32.xlu0 %v684
    %v686 = vpop.xlane.xlu0 %685
    %vm687 = vcmp.eq.f32.partialorder %v674, %v686
    %vm688 = vcmp.eq.f32.partialorder %v675, %v686
    %vm689 = vcmp.eq.f32.partialorder %v676, %v686
    %vm690 = vcmp.eq.f32.partialorder %v677, %v686
    %v691 = vsel %vm687, %v51, 512.0
    %v692 = vsel %vm688, %v52, 512.0
    %v693 = vsel %vm689, %v53, 512.0
    %v694 = vsel %vm690, %v54, 512.0
    %v695 = vsel %vm563, %v691, inf
    %v696 = vsel %vm563, %v692, inf
    %v697 = vsel %vm563, %v693, inf
    %v698 = vsel %vm563, %v694, inf
    %v699 = vmin.f32 %v695, %v696
    %v700 = vmin.f32 %v697, %v698
    %v701 = vmin.f32 %v699, %v700
    %702 = vmin.xlane.f32.xlu0 %v701
    %v703 = vpop.xlane.xlu0 %702
    %v704 = vcvt.f32.s32.to.zero.pseudo %v703
    %vm705 = vcmp.eq.s32.totalorder %v45, 3
    %v706 = vsel %vm705, %v686, %v668
    %v707 = vsel %vm705, %v704, %v669
    %vm708 = vcmp.eq.s32.totalorder %v45, %v704
    %vm709 = vcmp.eq.s32.totalorder %v46, %v704
    %vm710 = vcmp.eq.s32.totalorder %v47, %v704
    %vm711 = vcmp.eq.s32.totalorder %v48, %v704
    %v712 = vsel %vm708, -3.4028235e+38, %v674
    %v713 = vsel %vm709, -3.4028235e+38, %v675
    %v714 = vsel %vm710, -3.4028235e+38, %v676
    %v715 = vsel %vm711, -3.4028235e+38, %v677
    %v716 = vsel %vm563, %v712, -inf
    %v717 = vsel %vm563, %v713, -inf
    %v718 = vsel %vm563, %v714, -inf
    %v719 = vsel %vm563, %v715, -inf
    %v720 = vmax.f32 %v716, %v717
    %v721 = vmax.f32 %v718, %v719
    %v722 = vmax.f32 %v720, %v721
    %723 = vmax.xlane.f32.xlu0 %v722
    %v724 = vpop.xlane.xlu0 %723
    %vm725 = vcmp.eq.f32.partialorder %v712, %v724
    %vm726 = vcmp.eq.f32.partialorder %v713, %v724
    %vm727 = vcmp.eq.f32.partialorder %v714, %v724
    %vm728 = vcmp.eq.f32.partialorder %v715, %v724
    %v729 = vsel %vm725, %v51, 512.0
    %v730 = vsel %vm726, %v52, 512.0
    %v731 = vsel %vm727, %v53, 512.0
    %v732 = vsel %vm728, %v54, 512.0
    %v733 = vsel %vm563, %v729, inf
    %v734 = vsel %vm563, %v730, inf
    %v735 = vsel %vm563, %v731, inf
    %v736 = vsel %vm563, %v732, inf
    %v737 = vmin.f32 %v733, %v734
    %v738 = vmin.f32 %v735, %v736
    %v739 = vmin.f32 %v737, %v738
    %740 = vmin.xlane.f32.xlu0 %v739
    %v741 = vpop.xlane.xlu0 %740
    %v742 = vcvt.f32.s32.to.zero.pseudo %v741
    %vm743 = vcmp.eq.s32.totalorder %v45, 4
    %v744 = vsel %vm743, %v724, %v706
    %v745 = vsel %vm743, %v742, %v707
    %vm746 = vcmp.eq.s32.totalorder %v45, %v742
    %vm747 = vcmp.eq.s32.totalorder %v46, %v742
    %vm748 = vcmp.eq.s32.totalorder %v47, %v742
    %vm749 = vcmp.eq.s32.totalorder %v48, %v742
    %v750 = vsel %vm746, -3.4028235e+38, %v712
    %v751 = vsel %vm747, -3.4028235e+38, %v713
    %v752 = vsel %vm748, -3.4028235e+38, %v714
    %v753 = vsel %vm749, -3.4028235e+38, %v715
    %v754 = vsel %vm563, %v750, -inf
    %v755 = vsel %vm563, %v751, -inf
    %v756 = vsel %vm563, %v752, -inf
    %v757 = vsel %vm563, %v753, -inf
    %v758 = vmax.f32 %v754, %v755
    %v759 = vmax.f32 %v756, %v757
    %v760 = vmax.f32 %v758, %v759
    %761 = vmax.xlane.f32.xlu0 %v760
    %v762 = vpop.xlane.xlu0 %761
    %vm763 = vcmp.eq.f32.partialorder %v750, %v762
    %vm764 = vcmp.eq.f32.partialorder %v751, %v762
    %vm765 = vcmp.eq.f32.partialorder %v752, %v762
    %vm766 = vcmp.eq.f32.partialorder %v753, %v762
    %v767 = vsel %vm763, %v51, 512.0
    %v768 = vsel %vm764, %v52, 512.0
    %v769 = vsel %vm765, %v53, 512.0
    %v770 = vsel %vm766, %v54, 512.0
    %v771 = vsel %vm563, %v767, inf
    %v772 = vsel %vm563, %v768, inf
    %v773 = vsel %vm563, %v769, inf
    %v774 = vsel %vm563, %v770, inf
    %v775 = vmin.f32 %v771, %v772
    %v776 = vmin.f32 %v773, %v774
    %v777 = vmin.f32 %v775, %v776
    %778 = vmin.xlane.f32.xlu0 %v777
    %v779 = vpop.xlane.xlu0 %778
    %v780 = vcvt.f32.s32.to.zero.pseudo %v779
    %vm781 = vcmp.eq.s32.totalorder %v45, 5
    %v782 = vsel %vm781, %v762, %v744
    %v783 = vsel %vm781, %v780, %v745
    %vm784 = vcmp.eq.s32.totalorder %v45, %v780
    %vm785 = vcmp.eq.s32.totalorder %v46, %v780
    %vm786 = vcmp.eq.s32.totalorder %v47, %v780
    %vm787 = vcmp.eq.s32.totalorder %v48, %v780
    %v788 = vsel %vm784, -3.4028235e+38, %v750
    %v789 = vsel %vm785, -3.4028235e+38, %v751
    %v790 = vsel %vm786, -3.4028235e+38, %v752
    %v791 = vsel %vm787, -3.4028235e+38, %v753
    %v792 = vsel %vm563, %v788, -inf
    %v793 = vsel %vm563, %v789, -inf
    %v794 = vsel %vm563, %v790, -inf
    %v795 = vsel %vm563, %v791, -inf
    %v796 = vmax.f32 %v792, %v793
    %v797 = vmax.f32 %v794, %v795
    %v798 = vmax.f32 %v796, %v797
    %799 = vmax.xlane.f32.xlu0 %v798
    %v800 = vpop.xlane.xlu0 %799
    %vm801 = vcmp.eq.f32.partialorder %v788, %v800
    %vm802 = vcmp.eq.f32.partialorder %v789, %v800
    %vm803 = vcmp.eq.f32.partialorder %v790, %v800
    %vm804 = vcmp.eq.f32.partialorder %v791, %v800
    %v805 = vsel %vm801, %v51, 512.0
    %v806 = vsel %vm802, %v52, 512.0
    %v807 = vsel %vm803, %v53, 512.0
    %v808 = vsel %vm804, %v54, 512.0
    %v809 = vsel %vm563, %v805, inf
    %v810 = vsel %vm563, %v806, inf
    %v811 = vsel %vm563, %v807, inf
    %v812 = vsel %vm563, %v808, inf
    %v813 = vmin.f32 %v809, %v810
    %v814 = vmin.f32 %v811, %v812
    %v815 = vmin.f32 %v813, %v814
    %816 = vmin.xlane.f32.xlu0 %v815
    %v817 = vpop.xlane.xlu0 %816
    %v818 = vcvt.f32.s32.to.zero.pseudo %v817
    %vm819 = vcmp.eq.s32.totalorder %v45, 6
    %v820 = vsel %vm819, %v800, %v782
    %v821 = vsel %vm819, %v818, %v783
    %vm822 = vcmp.eq.s32.totalorder %v45, %v818
    %vm823 = vcmp.eq.s32.totalorder %v46, %v818
    %vm824 = vcmp.eq.s32.totalorder %v47, %v818
    %vm825 = vcmp.eq.s32.totalorder %v48, %v818
    %v826 = vsel %vm822, -3.4028235e+38, %v788
    %v827 = vsel %vm823, -3.4028235e+38, %v789
    %v828 = vsel %vm824, -3.4028235e+38, %v790
    %v829 = vsel %vm825, -3.4028235e+38, %v791
    %v830 = vsel %vm563, %v826, -inf
    %v831 = vsel %vm563, %v827, -inf
    %v832 = vsel %vm563, %v828, -inf
    %v833 = vsel %vm563, %v829, -inf
    %v834 = vmax.f32 %v830, %v831
    %v835 = vmax.f32 %v832, %v833
    %v836 = vmax.f32 %v834, %v835
    %837 = vmax.xlane.f32.xlu0 %v836
    %v838 = vpop.xlane.xlu0 %837
    %vm839 = vcmp.eq.f32.partialorder %v826, %v838
    %vm840 = vcmp.eq.f32.partialorder %v827, %v838
    %vm841 = vcmp.eq.f32.partialorder %v828, %v838
    %vm842 = vcmp.eq.f32.partialorder %v829, %v838
    %v843 = vsel %vm839, %v51, 512.0
    %v844 = vsel %vm840, %v52, 512.0
    %v845 = vsel %vm841, %v53, 512.0
    %v846 = vsel %vm842, %v54, 512.0
    %v847 = vsel %vm563, %v843, inf
    %v848 = vsel %vm563, %v844, inf
    %v849 = vsel %vm563, %v845, inf
    %v850 = vsel %vm563, %v846, inf
    %v851 = vmin.f32 %v847, %v848
    %v852 = vmin.f32 %v849, %v850
    %v853 = vmin.f32 %v851, %v852
    %854 = vmin.xlane.f32.xlu0 %v853
    %v855 = vpop.xlane.xlu0 %854
    %v856 = vcvt.f32.s32.to.zero.pseudo %v855
    %vm857 = vcmp.eq.s32.totalorder %v45, 7
    %v858 = vsel %vm857, %v838, %v820
    %v859 = vsel %vm857, %v856, %v821
    %vm860 = vcmp.eq.s32.totalorder %v45, %v856
    %vm861 = vcmp.eq.s32.totalorder %v46, %v856
    %vm862 = vcmp.eq.s32.totalorder %v47, %v856
    %vm863 = vcmp.eq.s32.totalorder %v48, %v856
    %v864 = vsel %vm860, -3.4028235e+38, %v826
    %v865 = vsel %vm861, -3.4028235e+38, %v827
    %v866 = vsel %vm862, -3.4028235e+38, %v828
    %v867 = vsel %vm863, -3.4028235e+38, %v829
    %v868 = vsel %vm563, %v864, -inf
    %v869 = vsel %vm563, %v865, -inf
    %v870 = vsel %vm563, %v866, -inf
    %v871 = vsel %vm563, %v867, -inf
    %v872 = vmax.f32 %v868, %v869
    %v873 = vmax.f32 %v870, %v871
    %v874 = vmax.f32 %v872, %v873
    %875 = vmax.xlane.f32.xlu0 %v874
    %v876 = vpop.xlane.xlu0 %875
    %vm877 = vcmp.eq.f32.partialorder %v864, %v876
    %vm878 = vcmp.eq.f32.partialorder %v865, %v876
    %vm879 = vcmp.eq.f32.partialorder %v866, %v876
    %vm880 = vcmp.eq.f32.partialorder %v867, %v876
    %v881 = vsel %vm877, %v51, 512.0
    %v882 = vsel %vm878, %v52, 512.0
    %v883 = vsel %vm879, %v53, 512.0
    %v884 = vsel %vm880, %v54, 512.0
    %v885 = vsel %vm563, %v881, inf
    %v886 = vsel %vm563, %v882, inf
    %v887 = vsel %vm563, %v883, inf
    %v888 = vsel %vm563, %v884, inf
    %v889 = vmin.f32 %v885, %v886
    %v890 = vmin.f32 %v887, %v888
    %v891 = vmin.f32 %v889, %v890
    %892 = vmin.xlane.f32.xlu0 %v891
    %v893 = vpop.xlane.xlu0 %892
    %v894 = vcvt.f32.s32.to.zero.pseudo %v893
    %vm895 = vcmp.eq.s32.totalorder %v45, 8
    %v896 = vsel %vm895, %v876, %v858
    %v897 = vsel %vm895, %v894, %v859
    %vm898 = vcmp.eq.s32.totalorder %v45, %v894
    %vm899 = vcmp.eq.s32.totalorder %v46, %v894
    %vm900 = vcmp.eq.s32.totalorder %v47, %v894
    %vm901 = vcmp.eq.s32.totalorder %v48, %v894
    %v902 = vsel %vm898, -3.4028235e+38, %v864
    %v903 = vsel %vm899, -3.4028235e+38, %v865
    %v904 = vsel %vm900, -3.4028235e+38, %v866
    %v905 = vsel %vm901, -3.4028235e+38, %v867
    %v906 = vsel %vm563, %v902, -inf
    %v907 = vsel %vm563, %v903, -inf
    %v908 = vsel %vm563, %v904, -inf
    %v909 = vsel %vm563, %v905, -inf
    %v910 = vmax.f32 %v906, %v907
    %v911 = vmax.f32 %v908, %v909
    %v912 = vmax.f32 %v910, %v911
    %913 = vmax.xlane.f32.xlu0 %v912
    %v914 = vpop.xlane.xlu0 %913
    %vm915 = vcmp.eq.f32.partialorder %v902, %v914
    %vm916 = vcmp.eq.f32.partialorder %v903, %v914
    %vm917 = vcmp.eq.f32.partialorder %v904, %v914
    %vm918 = vcmp.eq.f32.partialorder %v905, %v914
    %v919 = vsel %vm915, %v51, 512.0
    %v920 = vsel %vm916, %v52, 512.0
    %v921 = vsel %vm917, %v53, 512.0
    %v922 = vsel %vm918, %v54, 512.0
    %v923 = vsel %vm563, %v919, inf
    %v924 = vsel %vm563, %v920, inf
    %v925 = vsel %vm563, %v921, inf
    %v926 = vsel %vm563, %v922, inf
    %v927 = vmin.f32 %v923, %v924
    %v928 = vmin.f32 %v925, %v926
    %v929 = vmin.f32 %v927, %v928
    %930 = vmin.xlane.f32.xlu0 %v929
    %v931 = vpop.xlane.xlu0 %930
    %v932 = vcvt.f32.s32.to.zero.pseudo %v931
    %vm933 = vcmp.eq.s32.totalorder %v45, 9
    %v934 = vsel %vm933, %v914, %v896
    %v935 = vsel %vm933, %v932, %v897
    %vm936 = vcmp.eq.s32.totalorder %v45, %v932
    %vm937 = vcmp.eq.s32.totalorder %v46, %v932
    %vm938 = vcmp.eq.s32.totalorder %v47, %v932
    %vm939 = vcmp.eq.s32.totalorder %v48, %v932
    %v940 = vsel %vm936, -3.4028235e+38, %v902
    %v941 = vsel %vm937, -3.4028235e+38, %v903
    %v942 = vsel %vm938, -3.4028235e+38, %v904
    %v943 = vsel %vm939, -3.4028235e+38, %v905
    %v944 = vsel %vm563, %v940, -inf
    %v945 = vsel %vm563, %v941, -inf
    %v946 = vsel %vm563, %v942, -inf
    %v947 = vsel %vm563, %v943, -inf
    %v948 = vmax.f32 %v944, %v945
    %v949 = vmax.f32 %v946, %v947
    %v950 = vmax.f32 %v948, %v949
    %951 = vmax.xlane.f32.xlu0 %v950
    %v952 = vpop.xlane.xlu0 %951
    %vm953 = vcmp.eq.f32.partialorder %v940, %v952
    %vm954 = vcmp.eq.f32.partialorder %v941, %v952
    %vm955 = vcmp.eq.f32.partialorder %v942, %v952
    %vm956 = vcmp.eq.f32.partialorder %v943, %v952
    %v957 = vsel %vm953, %v51, 512.0
    %v958 = vsel %vm954, %v52, 512.0
    %v959 = vsel %vm955, %v53, 512.0
    %v960 = vsel %vm956, %v54, 512.0
    %v961 = vsel %vm563, %v957, inf
    %v962 = vsel %vm563, %v958, inf
    %v963 = vsel %vm563, %v959, inf
    %v964 = vsel %vm563, %v960, inf
    %v965 = vmin.f32 %v961, %v962
    %v966 = vmin.f32 %v963, %v964
    %v967 = vmin.f32 %v965, %v966
    %968 = vmin.xlane.f32.xlu0 %v967
    %v969 = vpop.xlane.xlu0 %968
    %v970 = vcvt.f32.s32.to.zero.pseudo %v969
    %vm971 = vcmp.eq.s32.totalorder %v45, 10
    %v972 = vsel %vm971, %v952, %v934
    %v973 = vsel %vm971, %v970, %v935
    %vm974 = vcmp.eq.s32.totalorder %v45, %v970
    %vm975 = vcmp.eq.s32.totalorder %v46, %v970
    %vm976 = vcmp.eq.s32.totalorder %v47, %v970
    %vm977 = vcmp.eq.s32.totalorder %v48, %v970
    %v978 = vsel %vm974, -3.4028235e+38, %v940
    %v979 = vsel %vm975, -3.4028235e+38, %v941
    %v980 = vsel %vm976, -3.4028235e+38, %v942
    %v981 = vsel %vm977, -3.4028235e+38, %v943
    %v982 = vsel %vm563, %v978, -inf
    %v983 = vsel %vm563, %v979, -inf
    %v984 = vsel %vm563, %v980, -inf
    %v985 = vsel %vm563, %v981, -inf
    %v986 = vmax.f32 %v982, %v983
    %v987 = vmax.f32 %v984, %v985
    %v988 = vmax.f32 %v986, %v987
    %989 = vmax.xlane.f32.xlu0 %v988
    %v990 = vpop.xlane.xlu0 %989
    %vm991 = vcmp.eq.f32.partialorder %v978, %v990
    %vm992 = vcmp.eq.f32.partialorder %v979, %v990
    %vm993 = vcmp.eq.f32.partialorder %v980, %v990
    %vm994 = vcmp.eq.f32.partialorder %v981, %v990
    %v995 = vsel %vm991, %v51, 512.0
    %v996 = vsel %vm992, %v52, 512.0
    %v997 = vsel %vm993, %v53, 512.0
    %v998 = vsel %vm994, %v54, 512.0
    %v999 = vsel %vm563, %v995, inf
    %v1000 = vsel %vm563, %v996, inf
    %v1001 = vsel %vm563, %v997, inf
    %v1002 = vsel %vm563, %v998, inf
    %v1003 = vmin.f32 %v999, %v1000
    %v1004 = vmin.f32 %v1001, %v1002
    %v1005 = vmin.f32 %v1003, %v1004
    %1006 = vmin.xlane.f32.xlu0 %v1005
    %v1007 = vpop.xlane.xlu0 %1006
    %v1008 = vcvt.f32.s32.to.zero.pseudo %v1007
    %vm1009 = vcmp.eq.s32.totalorder %v45, 11
    %v1010 = vsel %vm1009, %v990, %v972
    %v1011 = vsel %vm1009, %v1008, %v973
    %vm1012 = vcmp.eq.s32.totalorder %v45, %v1008
    %vm1013 = vcmp.eq.s32.totalorder %v46, %v1008
    %vm1014 = vcmp.eq.s32.totalorder %v47, %v1008
    %vm1015 = vcmp.eq.s32.totalorder %v48, %v1008
    %v1016 = vsel %vm1012, -3.4028235e+38, %v978
    %v1017 = vsel %vm1013, -3.4028235e+38, %v979
    %v1018 = vsel %vm1014, -3.4028235e+38, %v980
    %v1019 = vsel %vm1015, -3.4028235e+38, %v981
    %v1020 = vsel %vm563, %v1016, -inf
    %v1021 = vsel %vm563, %v1017, -inf
    %v1022 = vsel %vm563, %v1018, -inf
    %v1023 = vsel %vm563, %v1019, -inf
    %v1024 = vmax.f32 %v1020, %v1021
    %v1025 = vmax.f32 %v1022, %v1023
    %v1026 = vmax.f32 %v1024, %v1025
    %1027 = vmax.xlane.f32.xlu0 %v1026
    %v1028 = vpop.xlane.xlu0 %1027
    %vm1029 = vcmp.eq.f32.partialorder %v1016, %v1028
    %vm1030 = vcmp.eq.f32.partialorder %v1017, %v1028
    %vm1031 = vcmp.eq.f32.partialorder %v1018, %v1028
    %vm1032 = vcmp.eq.f32.partialorder %v1019, %v1028
    %v1033 = vsel %vm1029, %v51, 512.0
    %v1034 = vsel %vm1030, %v52, 512.0
    %v1035 = vsel %vm1031, %v53, 512.0
    %v1036 = vsel %vm1032, %v54, 512.0
    %v1037 = vsel %vm563, %v1033, inf
    %v1038 = vsel %vm563, %v1034, inf
    %v1039 = vsel %vm563, %v1035, inf
    %v1040 = vsel %vm563, %v1036, inf
    %v1041 = vmin.f32 %v1037, %v1038
    %v1042 = vmin.f32 %v1039, %v1040
    %v1043 = vmin.f32 %v1041, %v1042
    %1044 = vmin.xlane.f32.xlu0 %v1043
    %v1045 = vpop.xlane.xlu0 %1044
    %v1046 = vcvt.f32.s32.to.zero.pseudo %v1045
    %vm1047 = vcmp.eq.s32.totalorder %v45, 12
    %v1048 = vsel %vm1047, %v1028, %v1010
    %v1049 = vsel %vm1047, %v1046, %v1011
    %vm1050 = vcmp.eq.s32.totalorder %v45, %v1046
    %vm1051 = vcmp.eq.s32.totalorder %v46, %v1046
    %vm1052 = vcmp.eq.s32.totalorder %v47, %v1046
    %vm1053 = vcmp.eq.s32.totalorder %v48, %v1046
    %v1054 = vsel %vm1050, -3.4028235e+38, %v1016
    %v1055 = vsel %vm1051, -3.4028235e+38, %v1017
    %v1056 = vsel %vm1052, -3.4028235e+38, %v1018
    %v1057 = vsel %vm1053, -3.4028235e+38, %v1019
    %v1058 = vsel %vm563, %v1054, -inf
    %v1059 = vsel %vm563, %v1055, -inf
    %v1060 = vsel %vm563, %v1056, -inf
    %v1061 = vsel %vm563, %v1057, -inf
    %v1062 = vmax.f32 %v1058, %v1059
    %v1063 = vmax.f32 %v1060, %v1061
    %v1064 = vmax.f32 %v1062, %v1063
    %1065 = vmax.xlane.f32.xlu0 %v1064
    %v1066 = vpop.xlane.xlu0 %1065
    %vm1067 = vcmp.eq.f32.partialorder %v1054, %v1066
    %vm1068 = vcmp.eq.f32.partialorder %v1055, %v1066
    %vm1069 = vcmp.eq.f32.partialorder %v1056, %v1066
    %vm1070 = vcmp.eq.f32.partialorder %v1057, %v1066
    %v1071 = vsel %vm1067, %v51, 512.0
    %v1072 = vsel %vm1068, %v52, 512.0
    %v1073 = vsel %vm1069, %v53, 512.0
    %v1074 = vsel %vm1070, %v54, 512.0
    %v1075 = vsel %vm563, %v1071, inf
    %v1076 = vsel %vm563, %v1072, inf
    %v1077 = vsel %vm563, %v1073, inf
    %v1078 = vsel %vm563, %v1074, inf
    %v1079 = vmin.f32 %v1075, %v1076
    %v1080 = vmin.f32 %v1077, %v1078
    %v1081 = vmin.f32 %v1079, %v1080
    %1082 = vmin.xlane.f32.xlu0 %v1081
    %v1083 = vpop.xlane.xlu0 %1082
    %v1084 = vcvt.f32.s32.to.zero.pseudo %v1083
    %vm1085 = vcmp.eq.s32.totalorder %v45, 13
    %v1086 = vsel %vm1085, %v1066, %v1048
    %v1087 = vsel %vm1085, %v1084, %v1049
    %vm1088 = vcmp.eq.s32.totalorder %v45, %v1084
    %vm1089 = vcmp.eq.s32.totalorder %v46, %v1084
    %vm1090 = vcmp.eq.s32.totalorder %v47, %v1084
    %vm1091 = vcmp.eq.s32.totalorder %v48, %v1084
    %v1092 = vsel %vm1088, -3.4028235e+38, %v1054
    %v1093 = vsel %vm1089, -3.4028235e+38, %v1055
    %v1094 = vsel %vm1090, -3.4028235e+38, %v1056
    %v1095 = vsel %vm1091, -3.4028235e+38, %v1057
    %v1096 = vsel %vm563, %v1092, -inf
    %v1097 = vsel %vm563, %v1093, -inf
    %v1098 = vsel %vm563, %v1094, -inf
    %v1099 = vsel %vm563, %v1095, -inf
    %v1100 = vmax.f32 %v1096, %v1097
    %v1101 = vmax.f32 %v1098, %v1099
    %v1102 = vmax.f32 %v1100, %v1101
    %1103 = vmax.xlane.f32.xlu0 %v1102
    %v1104 = vpop.xlane.xlu0 %1103
    %vm1105 = vcmp.eq.f32.partialorder %v1092, %v1104
    %vm1106 = vcmp.eq.f32.partialorder %v1093, %v1104
    %vm1107 = vcmp.eq.f32.partialorder %v1094, %v1104
    %vm1108 = vcmp.eq.f32.partialorder %v1095, %v1104
    %v1109 = vsel %vm1105, %v51, 512.0
    %v1110 = vsel %vm1106, %v52, 512.0
    %v1111 = vsel %vm1107, %v53, 512.0
    %v1112 = vsel %vm1108, %v54, 512.0
    %v1113 = vsel %vm563, %v1109, inf
    %v1114 = vsel %vm563, %v1110, inf
    %v1115 = vsel %vm563, %v1111, inf
    %v1116 = vsel %vm563, %v1112, inf
    %v1117 = vmin.f32 %v1113, %v1114
    %v1118 = vmin.f32 %v1115, %v1116
    %v1119 = vmin.f32 %v1117, %v1118
    %1120 = vmin.xlane.f32.xlu0 %v1119
    %v1121 = vpop.xlane.xlu0 %1120
    %v1122 = vcvt.f32.s32.to.zero.pseudo %v1121
    %vm1123 = vcmp.eq.s32.totalorder %v45, 14
    %v1124 = vsel %vm1123, %v1104, %v1086
    %v1125 = vsel %vm1123, %v1122, %v1087
    %vm1126 = vcmp.eq.s32.totalorder %v45, %v1122
    %vm1127 = vcmp.eq.s32.totalorder %v46, %v1122
    %vm1128 = vcmp.eq.s32.totalorder %v47, %v1122
    %vm1129 = vcmp.eq.s32.totalorder %v48, %v1122
    %v1130 = vsel %vm1126, -3.4028235e+38, %v1092
    %v1131 = vsel %vm1127, -3.4028235e+38, %v1093
    %v1132 = vsel %vm1128, -3.4028235e+38, %v1094
    %v1133 = vsel %vm1129, -3.4028235e+38, %v1095
    %v1134 = vsel %vm563, %v1130, -inf
    %v1135 = vsel %vm563, %v1131, -inf
    %v1136 = vsel %vm563, %v1132, -inf
    %v1137 = vsel %vm563, %v1133, -inf
    %v1138 = vmax.f32 %v1134, %v1135
    %v1139 = vmax.f32 %v1136, %v1137
    %v1140 = vmax.f32 %v1138, %v1139
    %1141 = vmax.xlane.f32.xlu0 %v1140
    %v1142 = vpop.xlane.xlu0 %1141
    %vm1143 = vcmp.eq.f32.partialorder %v1130, %v1142
    %vm1144 = vcmp.eq.f32.partialorder %v1131, %v1142
    %vm1145 = vcmp.eq.f32.partialorder %v1132, %v1142
    %vm1146 = vcmp.eq.f32.partialorder %v1133, %v1142
    %v1147 = vsel %vm1143, %v51, 512.0
    %v1148 = vsel %vm1144, %v52, 512.0
    %v1149 = vsel %vm1145, %v53, 512.0
    %v1150 = vsel %vm1146, %v54, 512.0
    %v1151 = vsel %vm563, %v1147, inf
    %v1152 = vsel %vm563, %v1148, inf
    %v1153 = vsel %vm563, %v1149, inf
    %v1154 = vsel %vm563, %v1150, inf
    %v1155 = vmin.f32 %v1151, %v1152
    %v1156 = vmin.f32 %v1153, %v1154
    %v1157 = vmin.f32 %v1155, %v1156
    %1158 = vmin.xlane.f32.xlu0 %v1157
    %v1159 = vpop.xlane.xlu0 %1158
    %v1160 = vcvt.f32.s32.to.zero.pseudo %v1159
    %vm1161 = vcmp.eq.s32.totalorder %v45, 15
    %v1162 = vsel %vm1161, %v1142, %v1124
    %v1163 = vsel %vm1161, %v1160, %v1125
    %vm1164 = vcmp.eq.s32.totalorder %v45, %v1160
    %vm1165 = vcmp.eq.s32.totalorder %v46, %v1160
    %vm1166 = vcmp.eq.s32.totalorder %v47, %v1160
    %vm1167 = vcmp.eq.s32.totalorder %v48, %v1160
    %v1168 = vsel %vm1164, -3.4028235e+38, %v1130
    %v1169 = vsel %vm1165, -3.4028235e+38, %v1131
    %v1170 = vsel %vm1166, -3.4028235e+38, %v1132
    %v1171 = vsel %vm1167, -3.4028235e+38, %v1133
    %v1172 = vsel %vm563, %v1168, -inf
    %v1173 = vsel %vm563, %v1169, -inf
    %v1174 = vsel %vm563, %v1170, -inf
    %v1175 = vsel %vm563, %v1171, -inf
    %v1176 = vmax.f32 %v1172, %v1173
    %v1177 = vmax.f32 %v1174, %v1175
    %v1178 = vmax.f32 %v1176, %v1177
    %1179 = vmax.xlane.f32.xlu0 %v1178
    %v1180 = vpop.xlane.xlu0 %1179
    %vm1181 = vcmp.eq.f32.partialorder %v1168, %v1180
    %vm1182 = vcmp.eq.f32.partialorder %v1169, %v1180
    %vm1183 = vcmp.eq.f32.partialorder %v1170, %v1180
    %vm1184 = vcmp.eq.f32.partialorder %v1171, %v1180
    %v1185 = vsel %vm1181, %v51, 512.0
    %v1186 = vsel %vm1182, %v52, 512.0
    %v1187 = vsel %vm1183, %v53, 512.0
    %v1188 = vsel %vm1184, %v54, 512.0
    %v1189 = vsel %vm563, %v1185, inf
    %v1190 = vsel %vm563, %v1186, inf
    %v1191 = vsel %vm563, %v1187, inf
    %v1192 = vsel %vm563, %v1188, inf
    %v1193 = vmin.f32 %v1189, %v1190
    %v1194 = vmin.f32 %v1191, %v1192
    %v1195 = vmin.f32 %v1193, %v1194
    %1196 = vmin.xlane.f32.xlu0 %v1195
    %v1197 = vpop.xlane.xlu0 %1196
    %v1198 = vcvt.f32.s32.to.zero.pseudo %v1197
    %vm1199 = vcmp.eq.s32.totalorder %v45, 16
    %v1200 = vsel %vm1199, %v1180, %v1162
    %v1201 = vsel %vm1199, %v1198, %v1163
    %vm1202 = vcmp.eq.s32.totalorder %v45, %v1198
    %vm1203 = vcmp.eq.s32.totalorder %v46, %v1198
    %vm1204 = vcmp.eq.s32.totalorder %v47, %v1198
    %vm1205 = vcmp.eq.s32.totalorder %v48, %v1198
    %v1206 = vsel %vm1202, -3.4028235e+38, %v1168
    %v1207 = vsel %vm1203, -3.4028235e+38, %v1169
    %v1208 = vsel %vm1204, -3.4028235e+38, %v1170
    %v1209 = vsel %vm1205, -3.4028235e+38, %v1171
    %v1210 = vsel %vm563, %v1206, -inf
    %v1211 = vsel %vm563, %v1207, -inf
    %v1212 = vsel %vm563, %v1208, -inf
    %v1213 = vsel %vm563, %v1209, -inf
    %v1214 = vmax.f32 %v1210, %v1211
    %v1215 = vmax.f32 %v1212, %v1213
    %v1216 = vmax.f32 %v1214, %v1215
    %1217 = vmax.xlane.f32.xlu0 %v1216
    %v1218 = vpop.xlane.xlu0 %1217
    %vm1219 = vcmp.eq.f32.partialorder %v1206, %v1218
    %vm1220 = vcmp.eq.f32.partialorder %v1207, %v1218
    %vm1221 = vcmp.eq.f32.partialorder %v1208, %v1218
    %vm1222 = vcmp.eq.f32.partialorder %v1209, %v1218
    %v1223 = vsel %vm1219, %v51, 512.0
    %v1224 = vsel %vm1220, %v52, 512.0
    %v1225 = vsel %vm1221, %v53, 512.0
    %v1226 = vsel %vm1222, %v54, 512.0
    %v1227 = vsel %vm563, %v1223, inf
    %v1228 = vsel %vm563, %v1224, inf
    %v1229 = vsel %vm563, %v1225, inf
    %v1230 = vsel %vm563, %v1226, inf
    %v1231 = vmin.f32 %v1227, %v1228
    %v1232 = vmin.f32 %v1229, %v1230
    %v1233 = vmin.f32 %v1231, %v1232
    %1234 = vmin.xlane.f32.xlu0 %v1233
    %v1235 = vpop.xlane.xlu0 %1234
    %v1236 = vcvt.f32.s32.to.zero.pseudo %v1235
    %vm1237 = vcmp.eq.s32.totalorder %v45, 17
    %v1238 = vsel %vm1237, %v1218, %v1200
    %v1239 = vsel %vm1237, %v1236, %v1201
    %vm1240 = vcmp.eq.s32.totalorder %v45, %v1236
    %vm1241 = vcmp.eq.s32.totalorder %v46, %v1236
    %vm1242 = vcmp.eq.s32.totalorder %v47, %v1236
    %vm1243 = vcmp.eq.s32.totalorder %v48, %v1236
    %v1244 = vsel %vm1240, -3.4028235e+38, %v1206
    %v1245 = vsel %vm1241, -3.4028235e+38, %v1207
    %v1246 = vsel %vm1242, -3.4028235e+38, %v1208
    %v1247 = vsel %vm1243, -3.4028235e+38, %v1209
    %v1248 = vsel %vm563, %v1244, -inf
    %v1249 = vsel %vm563, %v1245, -inf
    %v1250 = vsel %vm563, %v1246, -inf
    %v1251 = vsel %vm563, %v1247, -inf
    %v1252 = vmax.f32 %v1248, %v1249
    %v1253 = vmax.f32 %v1250, %v1251
    %v1254 = vmax.f32 %v1252, %v1253
    %1255 = vmax.xlane.f32.xlu0 %v1254
    %v1256 = vpop.xlane.xlu0 %1255
    %vm1257 = vcmp.eq.f32.partialorder %v1244, %v1256
    %vm1258 = vcmp.eq.f32.partialorder %v1245, %v1256
    %vm1259 = vcmp.eq.f32.partialorder %v1246, %v1256
    %vm1260 = vcmp.eq.f32.partialorder %v1247, %v1256
    %v1261 = vsel %vm1257, %v51, 512.0
    %v1262 = vsel %vm1258, %v52, 512.0
    %v1263 = vsel %vm1259, %v53, 512.0
    %v1264 = vsel %vm1260, %v54, 512.0
    %v1265 = vsel %vm563, %v1261, inf
    %v1266 = vsel %vm563, %v1262, inf
    %v1267 = vsel %vm563, %v1263, inf
    %v1268 = vsel %vm563, %v1264, inf
    %v1269 = vmin.f32 %v1265, %v1266
    %v1270 = vmin.f32 %v1267, %v1268
    %v1271 = vmin.f32 %v1269, %v1270
    %1272 = vmin.xlane.f32.xlu0 %v1271
    %v1273 = vpop.xlane.xlu0 %1272
    %v1274 = vcvt.f32.s32.to.zero.pseudo %v1273
    %vm1275 = vcmp.eq.s32.totalorder %v45, 18
    %v1276 = vsel %vm1275, %v1256, %v1238
    %v1277 = vsel %vm1275, %v1274, %v1239
    %vm1278 = vcmp.eq.s32.totalorder %v45, %v1274
    %vm1279 = vcmp.eq.s32.totalorder %v46, %v1274
    %vm1280 = vcmp.eq.s32.totalorder %v47, %v1274
    %vm1281 = vcmp.eq.s32.totalorder %v48, %v1274
    %v1282 = vsel %vm1278, -3.4028235e+38, %v1244
    %v1283 = vsel %vm1279, -3.4028235e+38, %v1245
    %v1284 = vsel %vm1280, -3.4028235e+38, %v1246
    %v1285 = vsel %vm1281, -3.4028235e+38, %v1247
    %v1286 = vsel %vm563, %v1282, -inf
    %v1287 = vsel %vm563, %v1283, -inf
    %v1288 = vsel %vm563, %v1284, -inf
    %v1289 = vsel %vm563, %v1285, -inf
    %v1290 = vmax.f32 %v1286, %v1287
    %v1291 = vmax.f32 %v1288, %v1289
    %v1292 = vmax.f32 %v1290, %v1291
    %1293 = vmax.xlane.f32.xlu0 %v1292
    %v1294 = vpop.xlane.xlu0 %1293
    %vm1295 = vcmp.eq.f32.partialorder %v1282, %v1294
    %vm1296 = vcmp.eq.f32.partialorder %v1283, %v1294
    %vm1297 = vcmp.eq.f32.partialorder %v1284, %v1294
    %vm1298 = vcmp.eq.f32.partialorder %v1285, %v1294
    %v1299 = vsel %vm1295, %v51, 512.0
    %v1300 = vsel %vm1296, %v52, 512.0
    %v1301 = vsel %vm1297, %v53, 512.0
    %v1302 = vsel %vm1298, %v54, 512.0
    %v1303 = vsel %vm563, %v1299, inf
    %v1304 = vsel %vm563, %v1300, inf
    %v1305 = vsel %vm563, %v1301, inf
    %v1306 = vsel %vm563, %v1302, inf
    %v1307 = vmin.f32 %v1303, %v1304
    %v1308 = vmin.f32 %v1305, %v1306
    %v1309 = vmin.f32 %v1307, %v1308
    %1310 = vmin.xlane.f32.xlu0 %v1309
    %v1311 = vpop.xlane.xlu0 %1310
    %v1312 = vcvt.f32.s32.to.zero.pseudo %v1311
    %vm1313 = vcmp.eq.s32.totalorder %v45, 19
    %v1314 = vsel %vm1313, %v1294, %v1276
    %v1315 = vsel %vm1313, %v1312, %v1277
    %vm1316 = vcmp.eq.s32.totalorder %v45, %v1312
    %vm1317 = vcmp.eq.s32.totalorder %v46, %v1312
    %vm1318 = vcmp.eq.s32.totalorder %v47, %v1312
    %vm1319 = vcmp.eq.s32.totalorder %v48, %v1312
    %v1320 = vsel %vm1316, -3.4028235e+38, %v1282
    %v1321 = vsel %vm1317, -3.4028235e+38, %v1283
    %v1322 = vsel %vm1318, -3.4028235e+38, %v1284
    %v1323 = vsel %vm1319, -3.4028235e+38, %v1285
    %v1324 = vsel %vm563, %v1320, -inf
    %v1325 = vsel %vm563, %v1321, -inf
    %v1326 = vsel %vm563, %v1322, -inf
    %v1327 = vsel %vm563, %v1323, -inf
    %v1328 = vmax.f32 %v1324, %v1325
    %v1329 = vmax.f32 %v1326, %v1327
    %v1330 = vmax.f32 %v1328, %v1329
    %1331 = vmax.xlane.f32.xlu0 %v1330
    %v1332 = vpop.xlane.xlu0 %1331
    %vm1333 = vcmp.eq.f32.partialorder %v1320, %v1332
    %vm1334 = vcmp.eq.f32.partialorder %v1321, %v1332
    %vm1335 = vcmp.eq.f32.partialorder %v1322, %v1332
    %vm1336 = vcmp.eq.f32.partialorder %v1323, %v1332
    %v1337 = vsel %vm1333, %v51, 512.0
    %v1338 = vsel %vm1334, %v52, 512.0
    %v1339 = vsel %vm1335, %v53, 512.0
    %v1340 = vsel %vm1336, %v54, 512.0
    %v1341 = vsel %vm563, %v1337, inf
    %v1342 = vsel %vm563, %v1338, inf
    %v1343 = vsel %vm563, %v1339, inf
    %v1344 = vsel %vm563, %v1340, inf
    %v1345 = vmin.f32 %v1341, %v1342
    %v1346 = vmin.f32 %v1343, %v1344
    %v1347 = vmin.f32 %v1345, %v1346
    %1348 = vmin.xlane.f32.xlu0 %v1347
    %v1349 = vpop.xlane.xlu0 %1348
    %v1350 = vcvt.f32.s32.to.zero.pseudo %v1349
    %vm1351 = vcmp.eq.s32.totalorder %v45, 20
    %v1352 = vsel %vm1351, %v1332, %v1314
    %v1353 = vsel %vm1351, %v1350, %v1315
    %vm1354 = vcmp.eq.s32.totalorder %v45, %v1350
    %vm1355 = vcmp.eq.s32.totalorder %v46, %v1350
    %vm1356 = vcmp.eq.s32.totalorder %v47, %v1350
    %vm1357 = vcmp.eq.s32.totalorder %v48, %v1350
    %v1358 = vsel %vm1354, -3.4028235e+38, %v1320
    %v1359 = vsel %vm1355, -3.4028235e+38, %v1321
    %v1360 = vsel %vm1356, -3.4028235e+38, %v1322
    %v1361 = vsel %vm1357, -3.4028235e+38, %v1323
    %v1362 = vsel %vm563, %v1358, -inf
    %v1363 = vsel %vm563, %v1359, -inf
    %v1364 = vsel %vm563, %v1360, -inf
    %v1365 = vsel %vm563, %v1361, -inf
    %v1366 = vmax.f32 %v1362, %v1363
    %v1367 = vmax.f32 %v1364, %v1365
    %v1368 = vmax.f32 %v1366, %v1367
    %1369 = vmax.xlane.f32.xlu0 %v1368
    %v1370 = vpop.xlane.xlu0 %1369
    %vm1371 = vcmp.eq.f32.partialorder %v1358, %v1370
    %vm1372 = vcmp.eq.f32.partialorder %v1359, %v1370
    %vm1373 = vcmp.eq.f32.partialorder %v1360, %v1370
    %vm1374 = vcmp.eq.f32.partialorder %v1361, %v1370
    %v1375 = vsel %vm1371, %v51, 512.0
    %v1376 = vsel %vm1372, %v52, 512.0
    %v1377 = vsel %vm1373, %v53, 512.0
    %v1378 = vsel %vm1374, %v54, 512.0
    %v1379 = vsel %vm563, %v1375, inf
    %v1380 = vsel %vm563, %v1376, inf
    %v1381 = vsel %vm563, %v1377, inf
    %v1382 = vsel %vm563, %v1378, inf
    %v1383 = vmin.f32 %v1379, %v1380
    %v1384 = vmin.f32 %v1381, %v1382
    %v1385 = vmin.f32 %v1383, %v1384
    %1386 = vmin.xlane.f32.xlu0 %v1385
    %v1387 = vpop.xlane.xlu0 %1386
    %v1388 = vcvt.f32.s32.to.zero.pseudo %v1387
    %vm1389 = vcmp.eq.s32.totalorder %v45, 21
    %v1390 = vsel %vm1389, %v1370, %v1352
    %v1391 = vsel %vm1389, %v1388, %v1353
    %vm1392 = vcmp.eq.s32.totalorder %v45, %v1388
    %vm1393 = vcmp.eq.s32.totalorder %v46, %v1388
    %vm1394 = vcmp.eq.s32.totalorder %v47, %v1388
    %vm1395 = vcmp.eq.s32.totalorder %v48, %v1388
    %v1396 = vsel %vm1392, -3.4028235e+38, %v1358
    %v1397 = vsel %vm1393, -3.4028235e+38, %v1359
    %v1398 = vsel %vm1394, -3.4028235e+38, %v1360
    %v1399 = vsel %vm1395, -3.4028235e+38, %v1361
    %v1400 = vsel %vm563, %v1396, -inf
    %v1401 = vsel %vm563, %v1397, -inf
    %v1402 = vsel %vm563, %v1398, -inf
    %v1403 = vsel %vm563, %v1399, -inf
    %v1404 = vmax.f32 %v1400, %v1401
    %v1405 = vmax.f32 %v1402, %v1403
    %v1406 = vmax.f32 %v1404, %v1405
    %1407 = vmax.xlane.f32.xlu0 %v1406
    %v1408 = vpop.xlane.xlu0 %1407
    %vm1409 = vcmp.eq.f32.partialorder %v1396, %v1408
    %vm1410 = vcmp.eq.f32.partialorder %v1397, %v1408
    %vm1411 = vcmp.eq.f32.partialorder %v1398, %v1408
    %vm1412 = vcmp.eq.f32.partialorder %v1399, %v1408
    %v1413 = vsel %vm1409, %v51, 512.0
    %v1414 = vsel %vm1410, %v52, 512.0
    %v1415 = vsel %vm1411, %v53, 512.0
    %v1416 = vsel %vm1412, %v54, 512.0
    %v1417 = vsel %vm563, %v1413, inf
    %v1418 = vsel %vm563, %v1414, inf
    %v1419 = vsel %vm563, %v1415, inf
    %v1420 = vsel %vm563, %v1416, inf
    %v1421 = vmin.f32 %v1417, %v1418
    %v1422 = vmin.f32 %v1419, %v1420
    %v1423 = vmin.f32 %v1421, %v1422
    %1424 = vmin.xlane.f32.xlu0 %v1423
    %v1425 = vpop.xlane.xlu0 %1424
    %v1426 = vcvt.f32.s32.to.zero.pseudo %v1425
    %vm1427 = vcmp.eq.s32.totalorder %v45, 22
    %v1428 = vsel %vm1427, %v1408, %v1390
    %v1429 = vsel %vm1427, %v1426, %v1391
    %vm1430 = vcmp.eq.s32.totalorder %v45, %v1426
    %vm1431 = vcmp.eq.s32.totalorder %v46, %v1426
    %vm1432 = vcmp.eq.s32.totalorder %v47, %v1426
    %vm1433 = vcmp.eq.s32.totalorder %v48, %v1426
    %v1434 = vsel %vm1430, -3.4028235e+38, %v1396
    %v1435 = vsel %vm1431, -3.4028235e+38, %v1397
    %v1436 = vsel %vm1432, -3.4028235e+38, %v1398
    %v1437 = vsel %vm1433, -3.4028235e+38, %v1399
    %v1438 = vsel %vm563, %v1434, -inf
    %v1439 = vsel %vm563, %v1435, -inf
    %v1440 = vsel %vm563, %v1436, -inf
    %v1441 = vsel %vm563, %v1437, -inf
    %v1442 = vmax.f32 %v1438, %v1439
    %v1443 = vmax.f32 %v1440, %v1441
    %v1444 = vmax.f32 %v1442, %v1443
    %1445 = vmax.xlane.f32.xlu0 %v1444
    %v1446 = vpop.xlane.xlu0 %1445
    %vm1447 = vcmp.eq.f32.partialorder %v1434, %v1446
    %vm1448 = vcmp.eq.f32.partialorder %v1435, %v1446
    %vm1449 = vcmp.eq.f32.partialorder %v1436, %v1446
    %vm1450 = vcmp.eq.f32.partialorder %v1437, %v1446
    %v1451 = vsel %vm1447, %v51, 512.0
    %v1452 = vsel %vm1448, %v52, 512.0
    %v1453 = vsel %vm1449, %v53, 512.0
    %v1454 = vsel %vm1450, %v54, 512.0
    %v1455 = vsel %vm563, %v1451, inf
    %v1456 = vsel %vm563, %v1452, inf
    %v1457 = vsel %vm563, %v1453, inf
    %v1458 = vsel %vm563, %v1454, inf
    %v1459 = vmin.f32 %v1455, %v1456
    %v1460 = vmin.f32 %v1457, %v1458
    %v1461 = vmin.f32 %v1459, %v1460
    %1462 = vmin.xlane.f32.xlu0 %v1461
    %v1463 = vpop.xlane.xlu0 %1462
    %v1464 = vcvt.f32.s32.to.zero.pseudo %v1463
    %vm1465 = vcmp.eq.s32.totalorder %v45, 23
    %v1466 = vsel %vm1465, %v1446, %v1428
    %v1467 = vsel %vm1465, %v1464, %v1429
    %vm1468 = vcmp.eq.s32.totalorder %v45, %v1464
    %vm1469 = vcmp.eq.s32.totalorder %v46, %v1464
    %vm1470 = vcmp.eq.s32.totalorder %v47, %v1464
    %vm1471 = vcmp.eq.s32.totalorder %v48, %v1464
    %v1472 = vsel %vm1468, -3.4028235e+38, %v1434
    %v1473 = vsel %vm1469, -3.4028235e+38, %v1435
    %v1474 = vsel %vm1470, -3.4028235e+38, %v1436
    %v1475 = vsel %vm1471, -3.4028235e+38, %v1437
    %v1476 = vsel %vm563, %v1472, -inf
    %v1477 = vsel %vm563, %v1473, -inf
    %v1478 = vsel %vm563, %v1474, -inf
    %v1479 = vsel %vm563, %v1475, -inf
    %v1480 = vmax.f32 %v1476, %v1477
    %v1481 = vmax.f32 %v1478, %v1479
    %v1482 = vmax.f32 %v1480, %v1481
    %1483 = vmax.xlane.f32.xlu0 %v1482
    %v1484 = vpop.xlane.xlu0 %1483
    %vm1485 = vcmp.eq.f32.partialorder %v1472, %v1484
    %vm1486 = vcmp.eq.f32.partialorder %v1473, %v1484
    %vm1487 = vcmp.eq.f32.partialorder %v1474, %v1484
    %vm1488 = vcmp.eq.f32.partialorder %v1475, %v1484
    %v1489 = vsel %vm1485, %v51, 512.0
    %v1490 = vsel %vm1486, %v52, 512.0
    %v1491 = vsel %vm1487, %v53, 512.0
    %v1492 = vsel %vm1488, %v54, 512.0
    %v1493 = vsel %vm563, %v1489, inf
    %v1494 = vsel %vm563, %v1490, inf
    %v1495 = vsel %vm563, %v1491, inf
    %v1496 = vsel %vm563, %v1492, inf
    %v1497 = vmin.f32 %v1493, %v1494
    %v1498 = vmin.f32 %v1495, %v1496
    %v1499 = vmin.f32 %v1497, %v1498
    %1500 = vmin.xlane.f32.xlu0 %v1499
    %v1501 = vpop.xlane.xlu0 %1500
    %v1502 = vcvt.f32.s32.to.zero.pseudo %v1501
    %vm1503 = vcmp.eq.s32.totalorder %v45, 24
    %v1504 = vsel %vm1503, %v1484, %v1466
    %v1505 = vsel %vm1503, %v1502, %v1467
    %vm1506 = vcmp.eq.s32.totalorder %v45, %v1502
    %vm1507 = vcmp.eq.s32.totalorder %v46, %v1502
    %vm1508 = vcmp.eq.s32.totalorder %v47, %v1502
    %vm1509 = vcmp.eq.s32.totalorder %v48, %v1502
    %v1510 = vsel %vm1506, -3.4028235e+38, %v1472
    %v1511 = vsel %vm1507, -3.4028235e+38, %v1473
    %v1512 = vsel %vm1508, -3.4028235e+38, %v1474
    %v1513 = vsel %vm1509, -3.4028235e+38, %v1475
    %v1514 = vsel %vm563, %v1510, -inf
    %v1515 = vsel %vm563, %v1511, -inf
    %v1516 = vsel %vm563, %v1512, -inf
    %v1517 = vsel %vm563, %v1513, -inf
    %v1518 = vmax.f32 %v1514, %v1515
    %v1519 = vmax.f32 %v1516, %v1517
    %v1520 = vmax.f32 %v1518, %v1519
    %1521 = vmax.xlane.f32.xlu0 %v1520
    %v1522 = vpop.xlane.xlu0 %1521
    %vm1523 = vcmp.eq.f32.partialorder %v1510, %v1522
    %vm1524 = vcmp.eq.f32.partialorder %v1511, %v1522
    %vm1525 = vcmp.eq.f32.partialorder %v1512, %v1522
    %vm1526 = vcmp.eq.f32.partialorder %v1513, %v1522
    %v1527 = vsel %vm1523, %v51, 512.0
    %v1528 = vsel %vm1524, %v52, 512.0
    %v1529 = vsel %vm1525, %v53, 512.0
    %v1530 = vsel %vm1526, %v54, 512.0
    %v1531 = vsel %vm563, %v1527, inf
    %v1532 = vsel %vm563, %v1528, inf
    %v1533 = vsel %vm563, %v1529, inf
    %v1534 = vsel %vm563, %v1530, inf
    %v1535 = vmin.f32 %v1531, %v1532
    %v1536 = vmin.f32 %v1533, %v1534
    %v1537 = vmin.f32 %v1535, %v1536
    %1538 = vmin.xlane.f32.xlu0 %v1537
    %v1539 = vpop.xlane.xlu0 %1538
    %v1540 = vcvt.f32.s32.to.zero.pseudo %v1539
    %vm1541 = vcmp.eq.s32.totalorder %v45, 25
    %v1542 = vsel %vm1541, %v1522, %v1504
    %v1543 = vsel %vm1541, %v1540, %v1505
    %vm1544 = vcmp.eq.s32.totalorder %v45, %v1540
    %vm1545 = vcmp.eq.s32.totalorder %v46, %v1540
    %vm1546 = vcmp.eq.s32.totalorder %v47, %v1540
    %vm1547 = vcmp.eq.s32.totalorder %v48, %v1540
    %v1548 = vsel %vm1544, -3.4028235e+38, %v1510
    %v1549 = vsel %vm1545, -3.4028235e+38, %v1511
    %v1550 = vsel %vm1546, -3.4028235e+38, %v1512
    %v1551 = vsel %vm1547, -3.4028235e+38, %v1513
    %v1552 = vsel %vm563, %v1548, -inf
    %v1553 = vsel %vm563, %v1549, -inf
    %v1554 = vsel %vm563, %v1550, -inf
    %v1555 = vsel %vm563, %v1551, -inf
    %v1556 = vmax.f32 %v1552, %v1553
    %v1557 = vmax.f32 %v1554, %v1555
    %v1558 = vmax.f32 %v1556, %v1557
    %1559 = vmax.xlane.f32.xlu0 %v1558
    %v1560 = vpop.xlane.xlu0 %1559
    %vm1561 = vcmp.eq.f32.partialorder %v1548, %v1560
    %vm1562 = vcmp.eq.f32.partialorder %v1549, %v1560
    %vm1563 = vcmp.eq.f32.partialorder %v1550, %v1560
    %vm1564 = vcmp.eq.f32.partialorder %v1551, %v1560
    %v1565 = vsel %vm1561, %v51, 512.0
    %v1566 = vsel %vm1562, %v52, 512.0
    %v1567 = vsel %vm1563, %v53, 512.0
    %v1568 = vsel %vm1564, %v54, 512.0
    %v1569 = vsel %vm563, %v1565, inf
    %v1570 = vsel %vm563, %v1566, inf
    %v1571 = vsel %vm563, %v1567, inf
    %v1572 = vsel %vm563, %v1568, inf
    %v1573 = vmin.f32 %v1569, %v1570
    %v1574 = vmin.f32 %v1571, %v1572
    %v1575 = vmin.f32 %v1573, %v1574
    %1576 = vmin.xlane.f32.xlu0 %v1575
    %v1577 = vpop.xlane.xlu0 %1576
    %v1578 = vcvt.f32.s32.to.zero.pseudo %v1577
    %vm1579 = vcmp.eq.s32.totalorder %v45, 26
    %v1580 = vsel %vm1579, %v1560, %v1542
    %v1581 = vsel %vm1579, %v1578, %v1543
    %vm1582 = vcmp.eq.s32.totalorder %v45, %v1578
    %vm1583 = vcmp.eq.s32.totalorder %v46, %v1578
    %vm1584 = vcmp.eq.s32.totalorder %v47, %v1578
    %vm1585 = vcmp.eq.s32.totalorder %v48, %v1578
    %v1586 = vsel %vm1582, -3.4028235e+38, %v1548
    %v1587 = vsel %vm1583, -3.4028235e+38, %v1549
    %v1588 = vsel %vm1584, -3.4028235e+38, %v1550
    %v1589 = vsel %vm1585, -3.4028235e+38, %v1551
    %v1590 = vsel %vm563, %v1586, -inf
    %v1591 = vsel %vm563, %v1587, -inf
    %v1592 = vsel %vm563, %v1588, -inf
    %v1593 = vsel %vm563, %v1589, -inf
    %v1594 = vmax.f32 %v1590, %v1591
    %v1595 = vmax.f32 %v1592, %v1593
    %v1596 = vmax.f32 %v1594, %v1595
    %1597 = vmax.xlane.f32.xlu0 %v1596
    %v1598 = vpop.xlane.xlu0 %1597
    %vm1599 = vcmp.eq.f32.partialorder %v1586, %v1598
    %vm1600 = vcmp.eq.f32.partialorder %v1587, %v1598
    %vm1601 = vcmp.eq.f32.partialorder %v1588, %v1598
    %vm1602 = vcmp.eq.f32.partialorder %v1589, %v1598
    %v1603 = vsel %vm1599, %v51, 512.0
    %v1604 = vsel %vm1600, %v52, 512.0
    %v1605 = vsel %vm1601, %v53, 512.0
    %v1606 = vsel %vm1602, %v54, 512.0
    %v1607 = vsel %vm563, %v1603, inf
    %v1608 = vsel %vm563, %v1604, inf
    %v1609 = vsel %vm563, %v1605, inf
    %v1610 = vsel %vm563, %v1606, inf
    %v1611 = vmin.f32 %v1607, %v1608
    %v1612 = vmin.f32 %v1609, %v1610
    %v1613 = vmin.f32 %v1611, %v1612
    %1614 = vmin.xlane.f32.xlu0 %v1613
    %v1615 = vpop.xlane.xlu0 %1614
    %v1616 = vcvt.f32.s32.to.zero.pseudo %v1615
    %vm1617 = vcmp.eq.s32.totalorder %v45, 27
    %v1618 = vsel %vm1617, %v1598, %v1580
    %v1619 = vsel %vm1617, %v1616, %v1581
    %vm1620 = vcmp.eq.s32.totalorder %v45, %v1616
    %vm1621 = vcmp.eq.s32.totalorder %v46, %v1616
    %vm1622 = vcmp.eq.s32.totalorder %v47, %v1616
    %vm1623 = vcmp.eq.s32.totalorder %v48, %v1616
    %v1624 = vsel %vm1620, -3.4028235e+38, %v1586
    %v1625 = vsel %vm1621, -3.4028235e+38, %v1587
    %v1626 = vsel %vm1622, -3.4028235e+38, %v1588
    %v1627 = vsel %vm1623, -3.4028235e+38, %v1589
    %v1628 = vsel %vm563, %v1624, -inf
    %v1629 = vsel %vm563, %v1625, -inf
    %v1630 = vsel %vm563, %v1626, -inf
    %v1631 = vsel %vm563, %v1627, -inf
    %v1632 = vmax.f32 %v1628, %v1629
    %v1633 = vmax.f32 %v1630, %v1631
    %v1634 = vmax.f32 %v1632, %v1633
    %1635 = vmax.xlane.f32.xlu0 %v1634
    %v1636 = vpop.xlane.xlu0 %1635
    %vm1637 = vcmp.eq.f32.partialorder %v1624, %v1636
    %vm1638 = vcmp.eq.f32.partialorder %v1625, %v1636
    %vm1639 = vcmp.eq.f32.partialorder %v1626, %v1636
    %vm1640 = vcmp.eq.f32.partialorder %v1627, %v1636
    %v1641 = vsel %vm1637, %v51, 512.0
    %v1642 = vsel %vm1638, %v52, 512.0
    %v1643 = vsel %vm1639, %v53, 512.0
    %v1644 = vsel %vm1640, %v54, 512.0
    %v1645 = vsel %vm563, %v1641, inf
    %v1646 = vsel %vm563, %v1642, inf
    %v1647 = vsel %vm563, %v1643, inf
    %v1648 = vsel %vm563, %v1644, inf
    %v1649 = vmin.f32 %v1645, %v1646
    %v1650 = vmin.f32 %v1647, %v1648
    %v1651 = vmin.f32 %v1649, %v1650
    %1652 = vmin.xlane.f32.xlu0 %v1651
    %v1653 = vpop.xlane.xlu0 %1652
    %v1654 = vcvt.f32.s32.to.zero.pseudo %v1653
    %vm1655 = vcmp.eq.s32.totalorder %v45, 28
    %v1656 = vsel %vm1655, %v1636, %v1618
    %v1657 = vsel %vm1655, %v1654, %v1619
    %vm1658 = vcmp.eq.s32.totalorder %v45, %v1654
    %vm1659 = vcmp.eq.s32.totalorder %v46, %v1654
    %vm1660 = vcmp.eq.s32.totalorder %v47, %v1654
    %vm1661 = vcmp.eq.s32.totalorder %v48, %v1654
    %v1662 = vsel %vm1658, -3.4028235e+38, %v1624
    %v1663 = vsel %vm1659, -3.4028235e+38, %v1625
    %v1664 = vsel %vm1660, -3.4028235e+38, %v1626
    %v1665 = vsel %vm1661, -3.4028235e+38, %v1627
    %v1666 = vsel %vm563, %v1662, -inf
    %v1667 = vsel %vm563, %v1663, -inf
    %v1668 = vsel %vm563, %v1664, -inf
    %v1669 = vsel %vm563, %v1665, -inf
    %v1670 = vmax.f32 %v1666, %v1667
    %v1671 = vmax.f32 %v1668, %v1669
    %v1672 = vmax.f32 %v1670, %v1671
    %1673 = vmax.xlane.f32.xlu0 %v1672
    %v1674 = vpop.xlane.xlu0 %1673
    %vm1675 = vcmp.eq.f32.partialorder %v1662, %v1674
    %vm1676 = vcmp.eq.f32.partialorder %v1663, %v1674
    %vm1677 = vcmp.eq.f32.partialorder %v1664, %v1674
    %vm1678 = vcmp.eq.f32.partialorder %v1665, %v1674
    %v1679 = vsel %vm1675, %v51, 512.0
    %v1680 = vsel %vm1676, %v52, 512.0
    %v1681 = vsel %vm1677, %v53, 512.0
    %v1682 = vsel %vm1678, %v54, 512.0
    %v1683 = vsel %vm563, %v1679, inf
    %v1684 = vsel %vm563, %v1680, inf
    %v1685 = vsel %vm563, %v1681, inf
    %v1686 = vsel %vm563, %v1682, inf
    %v1687 = vmin.f32 %v1683, %v1684
    %v1688 = vmin.f32 %v1685, %v1686
    %v1689 = vmin.f32 %v1687, %v1688
    %1690 = vmin.xlane.f32.xlu0 %v1689
    %v1691 = vpop.xlane.xlu0 %1690
    %v1692 = vcvt.f32.s32.to.zero.pseudo %v1691
    %vm1693 = vcmp.eq.s32.totalorder %v45, 29
    %v1694 = vsel %vm1693, %v1674, %v1656
    %v1695 = vsel %vm1693, %v1692, %v1657
    %vm1696 = vcmp.eq.s32.totalorder %v45, %v1692
    %vm1697 = vcmp.eq.s32.totalorder %v46, %v1692
    %vm1698 = vcmp.eq.s32.totalorder %v47, %v1692
    %vm1699 = vcmp.eq.s32.totalorder %v48, %v1692
    %v1700 = vsel %vm1696, -3.4028235e+38, %v1662
    %v1701 = vsel %vm1697, -3.4028235e+38, %v1663
    %v1702 = vsel %vm1698, -3.4028235e+38, %v1664
    %v1703 = vsel %vm1699, -3.4028235e+38, %v1665
    %v1704 = vsel %vm563, %v1700, -inf
    %v1705 = vsel %vm563, %v1701, -inf
    %v1706 = vsel %vm563, %v1702, -inf
    %v1707 = vsel %vm563, %v1703, -inf
    %v1708 = vmax.f32 %v1704, %v1705
    %v1709 = vmax.f32 %v1706, %v1707
    %v1710 = vmax.f32 %v1708, %v1709
    %1711 = vmax.xlane.f32.xlu0 %v1710
    %v1712 = vpop.xlane.xlu0 %1711
    %vm1713 = vcmp.eq.f32.partialorder %v1700, %v1712
    %vm1714 = vcmp.eq.f32.partialorder %v1701, %v1712
    %vm1715 = vcmp.eq.f32.partialorder %v1702, %v1712
    %vm1716 = vcmp.eq.f32.partialorder %v1703, %v1712
    %v1717 = vsel %vm1713, %v51, 512.0
    %v1718 = vsel %vm1714, %v52, 512.0
    %v1719 = vsel %vm1715, %v53, 512.0
    %v1720 = vsel %vm1716, %v54, 512.0
    %v1721 = vsel %vm563, %v1717, inf
    %v1722 = vsel %vm563, %v1718, inf
    %v1723 = vsel %vm563, %v1719, inf
    %v1724 = vsel %vm563, %v1720, inf
    %v1725 = vmin.f32 %v1721, %v1722
    %v1726 = vmin.f32 %v1723, %v1724
    %v1727 = vmin.f32 %v1725, %v1726
    %1728 = vmin.xlane.f32.xlu0 %v1727
    %v1729 = vpop.xlane.xlu0 %1728
    %v1730 = vcvt.f32.s32.to.zero.pseudo %v1729
    %vm1731 = vcmp.eq.s32.totalorder %v45, 30
    %v1732 = vsel %vm1731, %v1712, %v1694
    %v1733 = vsel %vm1731, %v1730, %v1695
    %vm1734 = vcmp.eq.s32.totalorder %v45, %v1730
    %vm1735 = vcmp.eq.s32.totalorder %v46, %v1730
    %vm1736 = vcmp.eq.s32.totalorder %v47, %v1730
    %vm1737 = vcmp.eq.s32.totalorder %v48, %v1730
    %v1738 = vsel %vm1734, -3.4028235e+38, %v1700
    %v1739 = vsel %vm1735, -3.4028235e+38, %v1701
    %v1740 = vsel %vm1736, -3.4028235e+38, %v1702
    %v1741 = vsel %vm1737, -3.4028235e+38, %v1703
    %v1742 = vsel %vm563, %v1738, -inf
    %v1743 = vsel %vm563, %v1739, -inf
    %v1744 = vsel %vm563, %v1740, -inf
    %v1745 = vsel %vm563, %v1741, -inf
    %v1746 = vmax.f32 %v1742, %v1743
    %v1747 = vmax.f32 %v1744, %v1745
    %v1748 = vmax.f32 %v1746, %v1747
    %1749 = vmax.xlane.f32.xlu0 %v1748
    %v1750 = vpop.xlane.xlu0 %1749
    %vm1751 = vcmp.eq.f32.partialorder %v1738, %v1750
    %vm1752 = vcmp.eq.f32.partialorder %v1739, %v1750
    %vm1753 = vcmp.eq.f32.partialorder %v1740, %v1750
    %vm1754 = vcmp.eq.f32.partialorder %v1741, %v1750
    %v1755 = vsel %vm1751, %v51, 512.0
    %v1756 = vsel %vm1752, %v52, 512.0
    %v1757 = vsel %vm1753, %v53, 512.0
    %v1758 = vsel %vm1754, %v54, 512.0
    %v1759 = vsel %vm563, %v1755, inf
    %v1760 = vsel %vm563, %v1756, inf
    %v1761 = vsel %vm563, %v1757, inf
    %v1762 = vsel %vm563, %v1758, inf
    %v1763 = vmin.f32 %v1759, %v1760
    %v1764 = vmin.f32 %v1761, %v1762
    %v1765 = vmin.f32 %v1763, %v1764
    %1766 = vmin.xlane.f32.xlu0 %v1765
    %v1767 = vpop.xlane.xlu0 %1766
    %v1768 = vcvt.f32.s32.to.zero.pseudo %v1767
    %vm1769 = vcmp.eq.s32.totalorder %v45, 31
    %v1770 = vsel %vm1769, %v1750, %v1732
    %v1771 = vsel %vm1769, %v1768, %v1733
    %vm1772 = vcmp.eq.s32.totalorder %v45, %v1768
    %vm1773 = vcmp.eq.s32.totalorder %v46, %v1768
    %vm1774 = vcmp.eq.s32.totalorder %v47, %v1768
    %vm1775 = vcmp.eq.s32.totalorder %v48, %v1768
    %v1776 = vsel %vm1772, -3.4028235e+38, %v1738
    %v1777 = vsel %vm1773, -3.4028235e+38, %v1739
    %v1778 = vsel %vm1774, -3.4028235e+38, %v1740
    %v1779 = vsel %vm1775, -3.4028235e+38, %v1741
    %v1780 = vsel %vm563, %v1776, -inf
    %v1781 = vsel %vm563, %v1777, -inf
    %v1782 = vsel %vm563, %v1778, -inf
    %v1783 = vsel %vm563, %v1779, -inf
    %v1784 = vmax.f32 %v1780, %v1781
    %v1785 = vmax.f32 %v1782, %v1783
    %v1786 = vmax.f32 %v1784, %v1785
    %1787 = vmax.xlane.f32.xlu0 %v1786
    %v1788 = vpop.xlane.xlu0 %1787
    %vm1789 = vcmp.eq.f32.partialorder %v1776, %v1788
    %vm1790 = vcmp.eq.f32.partialorder %v1777, %v1788
    %vm1791 = vcmp.eq.f32.partialorder %v1778, %v1788
    %vm1792 = vcmp.eq.f32.partialorder %v1779, %v1788
    %v1793 = vsel %vm1789, %v51, 512.0
    %v1794 = vsel %vm1790, %v52, 512.0
    %v1795 = vsel %vm1791, %v53, 512.0
    %v1796 = vsel %vm1792, %v54, 512.0
    %v1797 = vsel %vm563, %v1793, inf
    %v1798 = vsel %vm563, %v1794, inf
    %v1799 = vsel %vm563, %v1795, inf
    %v1800 = vsel %vm563, %v1796, inf
    %v1801 = vmin.f32 %v1797, %v1798
    %v1802 = vmin.f32 %v1799, %v1800
    %v1803 = vmin.f32 %v1801, %v1802
    %1804 = vmin.xlane.f32.xlu0 %v1803
    %v1805 = vpop.xlane.xlu0 %1804
    %v1806 = vcvt.f32.s32.to.zero.pseudo %v1805
    %vm1807 = vcmp.eq.s32.totalorder %v45, 32
    %v1808 = vsel %vm1807, %v1788, %v1770
    %v1809 = vsel %vm1807, %v1806, %v1771
    %vm1810 = vcmp.eq.s32.totalorder %v45, %v1806
    %vm1811 = vcmp.eq.s32.totalorder %v46, %v1806
    %vm1812 = vcmp.eq.s32.totalorder %v47, %v1806
    %vm1813 = vcmp.eq.s32.totalorder %v48, %v1806
    %v1814 = vsel %vm1810, -3.4028235e+38, %v1776
    %v1815 = vsel %vm1811, -3.4028235e+38, %v1777
    %v1816 = vsel %vm1812, -3.4028235e+38, %v1778
    %v1817 = vsel %vm1813, -3.4028235e+38, %v1779
    %v1818 = vsel %vm563, %v1814, -inf
    %v1819 = vsel %vm563, %v1815, -inf
    %v1820 = vsel %vm563, %v1816, -inf
    %v1821 = vsel %vm563, %v1817, -inf
    %v1822 = vmax.f32 %v1818, %v1819
    %v1823 = vmax.f32 %v1820, %v1821
    %v1824 = vmax.f32 %v1822, %v1823
    %1825 = vmax.xlane.f32.xlu0 %v1824
    %v1826 = vpop.xlane.xlu0 %1825
    %vm1827 = vcmp.eq.f32.partialorder %v1814, %v1826
    %vm1828 = vcmp.eq.f32.partialorder %v1815, %v1826
    %vm1829 = vcmp.eq.f32.partialorder %v1816, %v1826
    %vm1830 = vcmp.eq.f32.partialorder %v1817, %v1826
    %v1831 = vsel %vm1827, %v51, 512.0
    %v1832 = vsel %vm1828, %v52, 512.0
    %v1833 = vsel %vm1829, %v53, 512.0
    %v1834 = vsel %vm1830, %v54, 512.0
    %v1835 = vsel %vm563, %v1831, inf
    %v1836 = vsel %vm563, %v1832, inf
    %v1837 = vsel %vm563, %v1833, inf
    %v1838 = vsel %vm563, %v1834, inf
    %v1839 = vmin.f32 %v1835, %v1836
    %v1840 = vmin.f32 %v1837, %v1838
    %v1841 = vmin.f32 %v1839, %v1840
    %1842 = vmin.xlane.f32.xlu0 %v1841
    %v1843 = vpop.xlane.xlu0 %1842
    %v1844 = vcvt.f32.s32.to.zero.pseudo %v1843
    %vm1845 = vcmp.eq.s32.totalorder %v45, 33
    %v1846 = vsel %vm1845, %v1826, %v1808
    %v1847 = vsel %vm1845, %v1844, %v1809
    %vm1848 = vcmp.eq.s32.totalorder %v45, %v1844
    %vm1849 = vcmp.eq.s32.totalorder %v46, %v1844
    %vm1850 = vcmp.eq.s32.totalorder %v47, %v1844
    %vm1851 = vcmp.eq.s32.totalorder %v48, %v1844
    %v1852 = vsel %vm1848, -3.4028235e+38, %v1814
    %v1853 = vsel %vm1849, -3.4028235e+38, %v1815
    %v1854 = vsel %vm1850, -3.4028235e+38, %v1816
    %v1855 = vsel %vm1851, -3.4028235e+38, %v1817
    %v1856 = vsel %vm563, %v1852, -inf
    %v1857 = vsel %vm563, %v1853, -inf
    %v1858 = vsel %vm563, %v1854, -inf
    %v1859 = vsel %vm563, %v1855, -inf
    %v1860 = vmax.f32 %v1856, %v1857
    %v1861 = vmax.f32 %v1858, %v1859
    %v1862 = vmax.f32 %v1860, %v1861
    %1863 = vmax.xlane.f32.xlu0 %v1862
    %v1864 = vpop.xlane.xlu0 %1863
    %vm1865 = vcmp.eq.f32.partialorder %v1852, %v1864
    %vm1866 = vcmp.eq.f32.partialorder %v1853, %v1864
    %vm1867 = vcmp.eq.f32.partialorder %v1854, %v1864
    %vm1868 = vcmp.eq.f32.partialorder %v1855, %v1864
    %v1869 = vsel %vm1865, %v51, 512.0
    %v1870 = vsel %vm1866, %v52, 512.0
    %v1871 = vsel %vm1867, %v53, 512.0
    %v1872 = vsel %vm1868, %v54, 512.0
    %v1873 = vsel %vm563, %v1869, inf
    %v1874 = vsel %vm563, %v1870, inf
    %v1875 = vsel %vm563, %v1871, inf
    %v1876 = vsel %vm563, %v1872, inf
    %v1877 = vmin.f32 %v1873, %v1874
    %v1878 = vmin.f32 %v1875, %v1876
    %v1879 = vmin.f32 %v1877, %v1878
    %1880 = vmin.xlane.f32.xlu0 %v1879
    %v1881 = vpop.xlane.xlu0 %1880
    %v1882 = vcvt.f32.s32.to.zero.pseudo %v1881
    %vm1883 = vcmp.eq.s32.totalorder %v45, 34
    %v1884 = vsel %vm1883, %v1864, %v1846
    %v1885 = vsel %vm1883, %v1882, %v1847
    %vm1886 = vcmp.eq.s32.totalorder %v45, %v1882
    %vm1887 = vcmp.eq.s32.totalorder %v46, %v1882
    %vm1888 = vcmp.eq.s32.totalorder %v47, %v1882
    %vm1889 = vcmp.eq.s32.totalorder %v48, %v1882
    %v1890 = vsel %vm1886, -3.4028235e+38, %v1852
    %v1891 = vsel %vm1887, -3.4028235e+38, %v1853
    %v1892 = vsel %vm1888, -3.4028235e+38, %v1854
    %v1893 = vsel %vm1889, -3.4028235e+38, %v1855
    %v1894 = vsel %vm563, %v1890, -inf
    %v1895 = vsel %vm563, %v1891, -inf
    %v1896 = vsel %vm563, %v1892, -inf
    %v1897 = vsel %vm563, %v1893, -inf
    %v1898 = vmax.f32 %v1894, %v1895
    %v1899 = vmax.f32 %v1896, %v1897
    %v1900 = vmax.f32 %v1898, %v1899
    %1901 = vmax.xlane.f32.xlu0 %v1900
    %v1902 = vpop.xlane.xlu0 %1901
    %vm1903 = vcmp.eq.f32.partialorder %v1890, %v1902
    %vm1904 = vcmp.eq.f32.partialorder %v1891, %v1902
    %vm1905 = vcmp.eq.f32.partialorder %v1892, %v1902
    %vm1906 = vcmp.eq.f32.partialorder %v1893, %v1902
    %v1907 = vsel %vm1903, %v51, 512.0
    %v1908 = vsel %vm1904, %v52, 512.0
    %v1909 = vsel %vm1905, %v53, 512.0
    %v1910 = vsel %vm1906, %v54, 512.0
    %v1911 = vsel %vm563, %v1907, inf
    %v1912 = vsel %vm563, %v1908, inf
    %v1913 = vsel %vm563, %v1909, inf
    %v1914 = vsel %vm563, %v1910, inf
    %v1915 = vmin.f32 %v1911, %v1912
    %v1916 = vmin.f32 %v1913, %v1914
    %v1917 = vmin.f32 %v1915, %v1916
    %1918 = vmin.xlane.f32.xlu0 %v1917
    %v1919 = vpop.xlane.xlu0 %1918
    %v1920 = vcvt.f32.s32.to.zero.pseudo %v1919
    %vm1921 = vcmp.eq.s32.totalorder %v45, 35
    %v1922 = vsel %vm1921, %v1902, %v1884
    %v1923 = vsel %vm1921, %v1920, %v1885
    %vm1924 = vcmp.eq.s32.totalorder %v45, %v1920
    %vm1925 = vcmp.eq.s32.totalorder %v46, %v1920
    %vm1926 = vcmp.eq.s32.totalorder %v47, %v1920
    %vm1927 = vcmp.eq.s32.totalorder %v48, %v1920
    %v1928 = vsel %vm1924, -3.4028235e+38, %v1890
    %v1929 = vsel %vm1925, -3.4028235e+38, %v1891
    %v1930 = vsel %vm1926, -3.4028235e+38, %v1892
    %v1931 = vsel %vm1927, -3.4028235e+38, %v1893
    %v1932 = vsel %vm563, %v1928, -inf
    %v1933 = vsel %vm563, %v1929, -inf
    %v1934 = vsel %vm563, %v1930, -inf
    %v1935 = vsel %vm563, %v1931, -inf
    %v1936 = vmax.f32 %v1932, %v1933
    %v1937 = vmax.f32 %v1934, %v1935
    %v1938 = vmax.f32 %v1936, %v1937
    %1939 = vmax.xlane.f32.xlu0 %v1938
    %v1940 = vpop.xlane.xlu0 %1939
    %vm1941 = vcmp.eq.f32.partialorder %v1928, %v1940
    %vm1942 = vcmp.eq.f32.partialorder %v1929, %v1940
    %vm1943 = vcmp.eq.f32.partialorder %v1930, %v1940
    %vm1944 = vcmp.eq.f32.partialorder %v1931, %v1940
    %v1945 = vsel %vm1941, %v51, 512.0
    %v1946 = vsel %vm1942, %v52, 512.0
    %v1947 = vsel %vm1943, %v53, 512.0
    %v1948 = vsel %vm1944, %v54, 512.0
    %v1949 = vsel %vm563, %v1945, inf
    %v1950 = vsel %vm563, %v1946, inf
    %v1951 = vsel %vm563, %v1947, inf
    %v1952 = vsel %vm563, %v1948, inf
    %v1953 = vmin.f32 %v1949, %v1950
    %v1954 = vmin.f32 %v1951, %v1952
    %v1955 = vmin.f32 %v1953, %v1954
    %1956 = vmin.xlane.f32.xlu0 %v1955
    %v1957 = vpop.xlane.xlu0 %1956
    %v1958 = vcvt.f32.s32.to.zero.pseudo %v1957
    %vm1959 = vcmp.eq.s32.totalorder %v45, 36
    %v1960 = vsel %vm1959, %v1940, %v1922
    %v1961 = vsel %vm1959, %v1958, %v1923
    %vm1962 = vcmp.eq.s32.totalorder %v45, %v1958
    %vm1963 = vcmp.eq.s32.totalorder %v46, %v1958
    %vm1964 = vcmp.eq.s32.totalorder %v47, %v1958
    %vm1965 = vcmp.eq.s32.totalorder %v48, %v1958
    %v1966 = vsel %vm1962, -3.4028235e+38, %v1928
    %v1967 = vsel %vm1963, -3.4028235e+38, %v1929
    %v1968 = vsel %vm1964, -3.4028235e+38, %v1930
    %v1969 = vsel %vm1965, -3.4028235e+38, %v1931
    %v1970 = vsel %vm563, %v1966, -inf
    %v1971 = vsel %vm563, %v1967, -inf
    %v1972 = vsel %vm563, %v1968, -inf
    %v1973 = vsel %vm563, %v1969, -inf
    %v1974 = vmax.f32 %v1970, %v1971
    %v1975 = vmax.f32 %v1972, %v1973
    %v1976 = vmax.f32 %v1974, %v1975
    %1977 = vmax.xlane.f32.xlu0 %v1976
    %v1978 = vpop.xlane.xlu0 %1977
    %vm1979 = vcmp.eq.f32.partialorder %v1966, %v1978
    %vm1980 = vcmp.eq.f32.partialorder %v1967, %v1978
    %vm1981 = vcmp.eq.f32.partialorder %v1968, %v1978
    %vm1982 = vcmp.eq.f32.partialorder %v1969, %v1978
    %v1983 = vsel %vm1979, %v51, 512.0
    %v1984 = vsel %vm1980, %v52, 512.0
    %v1985 = vsel %vm1981, %v53, 512.0
    %v1986 = vsel %vm1982, %v54, 512.0
    %v1987 = vsel %vm563, %v1983, inf
    %v1988 = vsel %vm563, %v1984, inf
    %v1989 = vsel %vm563, %v1985, inf
    %v1990 = vsel %vm563, %v1986, inf
    %v1991 = vmin.f32 %v1987, %v1988
    %v1992 = vmin.f32 %v1989, %v1990
    %v1993 = vmin.f32 %v1991, %v1992
    %1994 = vmin.xlane.f32.xlu0 %v1993
    %v1995 = vpop.xlane.xlu0 %1994
    %v1996 = vcvt.f32.s32.to.zero.pseudo %v1995
    %vm1997 = vcmp.eq.s32.totalorder %v45, 37
    %v1998 = vsel %vm1997, %v1978, %v1960
    %v1999 = vsel %vm1997, %v1996, %v1961
    %vm2000 = vcmp.eq.s32.totalorder %v45, %v1996
    %vm2001 = vcmp.eq.s32.totalorder %v46, %v1996
    %vm2002 = vcmp.eq.s32.totalorder %v47, %v1996
    %vm2003 = vcmp.eq.s32.totalorder %v48, %v1996
    %v2004 = vsel %vm2000, -3.4028235e+38, %v1966
    %v2005 = vsel %vm2001, -3.4028235e+38, %v1967
    %v2006 = vsel %vm2002, -3.4028235e+38, %v1968
    %v2007 = vsel %vm2003, -3.4028235e+38, %v1969
    %v2008 = vsel %vm563, %v2004, -inf
    %v2009 = vsel %vm563, %v2005, -inf
    %v2010 = vsel %vm563, %v2006, -inf
    %v2011 = vsel %vm563, %v2007, -inf
    %v2012 = vmax.f32 %v2008, %v2009
    %v2013 = vmax.f32 %v2010, %v2011
    %v2014 = vmax.f32 %v2012, %v2013
    %2015 = vmax.xlane.f32.xlu0 %v2014
    %v2016 = vpop.xlane.xlu0 %2015
    %vm2017 = vcmp.eq.f32.partialorder %v2004, %v2016
    %vm2018 = vcmp.eq.f32.partialorder %v2005, %v2016
    %vm2019 = vcmp.eq.f32.partialorder %v2006, %v2016
    %vm2020 = vcmp.eq.f32.partialorder %v2007, %v2016
    %v2021 = vsel %vm2017, %v51, 512.0
    %v2022 = vsel %vm2018, %v52, 512.0
    %v2023 = vsel %vm2019, %v53, 512.0
    %v2024 = vsel %vm2020, %v54, 512.0
    %v2025 = vsel %vm563, %v2021, inf
    %v2026 = vsel %vm563, %v2022, inf
    %v2027 = vsel %vm563, %v2023, inf
    %v2028 = vsel %vm563, %v2024, inf
    %v2029 = vmin.f32 %v2025, %v2026
    %v2030 = vmin.f32 %v2027, %v2028
    %v2031 = vmin.f32 %v2029, %v2030
    %2032 = vmin.xlane.f32.xlu0 %v2031
    %v2033 = vpop.xlane.xlu0 %2032
    %v2034 = vcvt.f32.s32.to.zero.pseudo %v2033
    %vm2035 = vcmp.eq.s32.totalorder %v45, 38
    %v2036 = vsel %vm2035, %v2016, %v1998
    %v2037 = vsel %vm2035, %v2034, %v1999
    %vm2038 = vcmp.eq.s32.totalorder %v45, %v2034
    %vm2039 = vcmp.eq.s32.totalorder %v46, %v2034
    %vm2040 = vcmp.eq.s32.totalorder %v47, %v2034
    %vm2041 = vcmp.eq.s32.totalorder %v48, %v2034
    %v2042 = vsel %vm2038, -3.4028235e+38, %v2004
    %v2043 = vsel %vm2039, -3.4028235e+38, %v2005
    %v2044 = vsel %vm2040, -3.4028235e+38, %v2006
    %v2045 = vsel %vm2041, -3.4028235e+38, %v2007
    %v2046 = vsel %vm563, %v2042, -inf
    %v2047 = vsel %vm563, %v2043, -inf
    %v2048 = vsel %vm563, %v2044, -inf
    %v2049 = vsel %vm563, %v2045, -inf
    %v2050 = vmax.f32 %v2046, %v2047
    %v2051 = vmax.f32 %v2048, %v2049
    %v2052 = vmax.f32 %v2050, %v2051
    %2053 = vmax.xlane.f32.xlu0 %v2052
    %v2054 = vpop.xlane.xlu0 %2053
    %vm2055 = vcmp.eq.f32.partialorder %v2042, %v2054
    %vm2056 = vcmp.eq.f32.partialorder %v2043, %v2054
    %vm2057 = vcmp.eq.f32.partialorder %v2044, %v2054
    %vm2058 = vcmp.eq.f32.partialorder %v2045, %v2054
    %v2059 = vsel %vm2055, %v51, 512.0
    %v2060 = vsel %vm2056, %v52, 512.0
    %v2061 = vsel %vm2057, %v53, 512.0
    %v2062 = vsel %vm2058, %v54, 512.0
    %v2063 = vsel %vm563, %v2059, inf
    %v2064 = vsel %vm563, %v2060, inf
    %v2065 = vsel %vm563, %v2061, inf
    %v2066 = vsel %vm563, %v2062, inf
    %v2067 = vmin.f32 %v2063, %v2064
    %v2068 = vmin.f32 %v2065, %v2066
    %v2069 = vmin.f32 %v2067, %v2068
    %2070 = vmin.xlane.f32.xlu0 %v2069
    %v2071 = vpop.xlane.xlu0 %2070
    %v2072 = vcvt.f32.s32.to.zero.pseudo %v2071
    %vm2073 = vcmp.eq.s32.totalorder %v45, 39
    %v2074 = vsel %vm2073, %v2054, %v2036
    %v2075 = vsel %vm2073, %v2072, %v2037
    %vm2076 = vcmp.eq.s32.totalorder %v45, %v2072
    %vm2077 = vcmp.eq.s32.totalorder %v46, %v2072
    %vm2078 = vcmp.eq.s32.totalorder %v47, %v2072
    %vm2079 = vcmp.eq.s32.totalorder %v48, %v2072
    %v2080 = vsel %vm2076, -3.4028235e+38, %v2042
    %v2081 = vsel %vm2077, -3.4028235e+38, %v2043
    %v2082 = vsel %vm2078, -3.4028235e+38, %v2044
    %v2083 = vsel %vm2079, -3.4028235e+38, %v2045
    %v2084 = vsel %vm563, %v2080, -inf
    %v2085 = vsel %vm563, %v2081, -inf
    %v2086 = vsel %vm563, %v2082, -inf
    %v2087 = vsel %vm563, %v2083, -inf
    %v2088 = vmax.f32 %v2084, %v2085
    %v2089 = vmax.f32 %v2086, %v2087
    %v2090 = vmax.f32 %v2088, %v2089
    %2091 = vmax.xlane.f32.xlu0 %v2090
    %v2092 = vpop.xlane.xlu0 %2091
    %vm2093 = vcmp.eq.f32.partialorder %v2080, %v2092
    %vm2094 = vcmp.eq.f32.partialorder %v2081, %v2092
    %vm2095 = vcmp.eq.f32.partialorder %v2082, %v2092
    %vm2096 = vcmp.eq.f32.partialorder %v2083, %v2092
    %v2097 = vsel %vm2093, %v51, 512.0
    %v2098 = vsel %vm2094, %v52, 512.0
    %v2099 = vsel %vm2095, %v53, 512.0
    %v2100 = vsel %vm2096, %v54, 512.0
    %v2101 = vsel %vm563, %v2097, inf
    %v2102 = vsel %vm563, %v2098, inf
    %v2103 = vsel %vm563, %v2099, inf
    %v2104 = vsel %vm563, %v2100, inf
    %v2105 = vmin.f32 %v2101, %v2102
    %v2106 = vmin.f32 %v2103, %v2104
    %v2107 = vmin.f32 %v2105, %v2106
    %2108 = vmin.xlane.f32.xlu0 %v2107
    %v2109 = vpop.xlane.xlu0 %2108
    %v2110 = vcvt.f32.s32.to.zero.pseudo %v2109
    %vm2111 = vcmp.eq.s32.totalorder %v45, 40
    %v2112 = vsel %vm2111, %v2092, %v2074
    %v2113 = vsel %vm2111, %v2110, %v2075
    %vm2114 = vcmp.eq.s32.totalorder %v45, %v2110
    %vm2115 = vcmp.eq.s32.totalorder %v46, %v2110
    %vm2116 = vcmp.eq.s32.totalorder %v47, %v2110
    %vm2117 = vcmp.eq.s32.totalorder %v48, %v2110
    %v2118 = vsel %vm2114, -3.4028235e+38, %v2080
    %v2119 = vsel %vm2115, -3.4028235e+38, %v2081
    %v2120 = vsel %vm2116, -3.4028235e+38, %v2082
    %v2121 = vsel %vm2117, -3.4028235e+38, %v2083
    %v2122 = vsel %vm563, %v2118, -inf
    %v2123 = vsel %vm563, %v2119, -inf
    %v2124 = vsel %vm563, %v2120, -inf
    %v2125 = vsel %vm563, %v2121, -inf
    %v2126 = vmax.f32 %v2122, %v2123
    %v2127 = vmax.f32 %v2124, %v2125
    %v2128 = vmax.f32 %v2126, %v2127
    %2129 = vmax.xlane.f32.xlu0 %v2128
    %v2130 = vpop.xlane.xlu0 %2129
    %vm2131 = vcmp.eq.f32.partialorder %v2118, %v2130
    %vm2132 = vcmp.eq.f32.partialorder %v2119, %v2130
    %vm2133 = vcmp.eq.f32.partialorder %v2120, %v2130
    %vm2134 = vcmp.eq.f32.partialorder %v2121, %v2130
    %v2135 = vsel %vm2131, %v51, 512.0
    %v2136 = vsel %vm2132, %v52, 512.0
    %v2137 = vsel %vm2133, %v53, 512.0
    %v2138 = vsel %vm2134, %v54, 512.0
    %v2139 = vsel %vm563, %v2135, inf
    %v2140 = vsel %vm563, %v2136, inf
    %v2141 = vsel %vm563, %v2137, inf
    %v2142 = vsel %vm563, %v2138, inf
    %v2143 = vmin.f32 %v2139, %v2140
    %v2144 = vmin.f32 %v2141, %v2142
    %v2145 = vmin.f32 %v2143, %v2144
    %2146 = vmin.xlane.f32.xlu0 %v2145
    %v2147 = vpop.xlane.xlu0 %2146
    %v2148 = vcvt.f32.s32.to.zero.pseudo %v2147
    %vm2149 = vcmp.eq.s32.totalorder %v45, 41
    %v2150 = vsel %vm2149, %v2130, %v2112
    %v2151 = vsel %vm2149, %v2148, %v2113
    %vm2152 = vcmp.eq.s32.totalorder %v45, %v2148
    %vm2153 = vcmp.eq.s32.totalorder %v46, %v2148
    %vm2154 = vcmp.eq.s32.totalorder %v47, %v2148
    %vm2155 = vcmp.eq.s32.totalorder %v48, %v2148
    %v2156 = vsel %vm2152, -3.4028235e+38, %v2118
    %v2157 = vsel %vm2153, -3.4028235e+38, %v2119
    %v2158 = vsel %vm2154, -3.4028235e+38, %v2120
    %v2159 = vsel %vm2155, -3.4028235e+38, %v2121
    %v2160 = vsel %vm563, %v2156, -inf
    %v2161 = vsel %vm563, %v2157, -inf
    %v2162 = vsel %vm563, %v2158, -inf
    %v2163 = vsel %vm563, %v2159, -inf
    %v2164 = vmax.f32 %v2160, %v2161
    %v2165 = vmax.f32 %v2162, %v2163
    %v2166 = vmax.f32 %v2164, %v2165
    %2167 = vmax.xlane.f32.xlu0 %v2166
    %v2168 = vpop.xlane.xlu0 %2167
    %vm2169 = vcmp.eq.f32.partialorder %v2156, %v2168
    %vm2170 = vcmp.eq.f32.partialorder %v2157, %v2168
    %vm2171 = vcmp.eq.f32.partialorder %v2158, %v2168
    %vm2172 = vcmp.eq.f32.partialorder %v2159, %v2168
    %v2173 = vsel %vm2169, %v51, 512.0
    %v2174 = vsel %vm2170, %v52, 512.0
    %v2175 = vsel %vm2171, %v53, 512.0
    %v2176 = vsel %vm2172, %v54, 512.0
    %v2177 = vsel %vm563, %v2173, inf
    %v2178 = vsel %vm563, %v2174, inf
    %v2179 = vsel %vm563, %v2175, inf
    %v2180 = vsel %vm563, %v2176, inf
    %v2181 = vmin.f32 %v2177, %v2178
    %v2182 = vmin.f32 %v2179, %v2180
    %v2183 = vmin.f32 %v2181, %v2182
    %2184 = vmin.xlane.f32.xlu0 %v2183
    %v2185 = vpop.xlane.xlu0 %2184
    %v2186 = vcvt.f32.s32.to.zero.pseudo %v2185
    %vm2187 = vcmp.eq.s32.totalorder %v45, 42
    %v2188 = vsel %vm2187, %v2168, %v2150
    %v2189 = vsel %vm2187, %v2186, %v2151
    %vm2190 = vcmp.eq.s32.totalorder %v45, %v2186
    %vm2191 = vcmp.eq.s32.totalorder %v46, %v2186
    %vm2192 = vcmp.eq.s32.totalorder %v47, %v2186
    %vm2193 = vcmp.eq.s32.totalorder %v48, %v2186
    %v2194 = vsel %vm2190, -3.4028235e+38, %v2156
    %v2195 = vsel %vm2191, -3.4028235e+38, %v2157
    %v2196 = vsel %vm2192, -3.4028235e+38, %v2158
    %v2197 = vsel %vm2193, -3.4028235e+38, %v2159
    %v2198 = vsel %vm563, %v2194, -inf
    %v2199 = vsel %vm563, %v2195, -inf
    %v2200 = vsel %vm563, %v2196, -inf
    %v2201 = vsel %vm563, %v2197, -inf
    %v2202 = vmax.f32 %v2198, %v2199
    %v2203 = vmax.f32 %v2200, %v2201
    %v2204 = vmax.f32 %v2202, %v2203
    %2205 = vmax.xlane.f32.xlu0 %v2204
    %v2206 = vpop.xlane.xlu0 %2205
    %vm2207 = vcmp.eq.f32.partialorder %v2194, %v2206
    %vm2208 = vcmp.eq.f32.partialorder %v2195, %v2206
    %vm2209 = vcmp.eq.f32.partialorder %v2196, %v2206
    %vm2210 = vcmp.eq.f32.partialorder %v2197, %v2206
    %v2211 = vsel %vm2207, %v51, 512.0
    %v2212 = vsel %vm2208, %v52, 512.0
    %v2213 = vsel %vm2209, %v53, 512.0
    %v2214 = vsel %vm2210, %v54, 512.0
    %v2215 = vsel %vm563, %v2211, inf
    %v2216 = vsel %vm563, %v2212, inf
    %v2217 = vsel %vm563, %v2213, inf
    %v2218 = vsel %vm563, %v2214, inf
    %v2219 = vmin.f32 %v2215, %v2216
    %v2220 = vmin.f32 %v2217, %v2218
    %v2221 = vmin.f32 %v2219, %v2220
    %2222 = vmin.xlane.f32.xlu0 %v2221
    %v2223 = vpop.xlane.xlu0 %2222
    %v2224 = vcvt.f32.s32.to.zero.pseudo %v2223
    %vm2225 = vcmp.eq.s32.totalorder %v45, 43
    %v2226 = vsel %vm2225, %v2206, %v2188
    %v2227 = vsel %vm2225, %v2224, %v2189
    %vm2228 = vcmp.eq.s32.totalorder %v45, %v2224
    %vm2229 = vcmp.eq.s32.totalorder %v46, %v2224
    %vm2230 = vcmp.eq.s32.totalorder %v47, %v2224
    %vm2231 = vcmp.eq.s32.totalorder %v48, %v2224
    %v2232 = vsel %vm2228, -3.4028235e+38, %v2194
    %v2233 = vsel %vm2229, -3.4028235e+38, %v2195
    %v2234 = vsel %vm2230, -3.4028235e+38, %v2196
    %v2235 = vsel %vm2231, -3.4028235e+38, %v2197
    %v2236 = vsel %vm563, %v2232, -inf
    %v2237 = vsel %vm563, %v2233, -inf
    %v2238 = vsel %vm563, %v2234, -inf
    %v2239 = vsel %vm563, %v2235, -inf
    %v2240 = vmax.f32 %v2236, %v2237
    %v2241 = vmax.f32 %v2238, %v2239
    %v2242 = vmax.f32 %v2240, %v2241
    %2243 = vmax.xlane.f32.xlu0 %v2242
    %v2244 = vpop.xlane.xlu0 %2243
    %vm2245 = vcmp.eq.f32.partialorder %v2232, %v2244
    %vm2246 = vcmp.eq.f32.partialorder %v2233, %v2244
    %vm2247 = vcmp.eq.f32.partialorder %v2234, %v2244
    %vm2248 = vcmp.eq.f32.partialorder %v2235, %v2244
    %v2249 = vsel %vm2245, %v51, 512.0
    %v2250 = vsel %vm2246, %v52, 512.0
    %v2251 = vsel %vm2247, %v53, 512.0
    %v2252 = vsel %vm2248, %v54, 512.0
    %v2253 = vsel %vm563, %v2249, inf
    %v2254 = vsel %vm563, %v2250, inf
    %v2255 = vsel %vm563, %v2251, inf
    %v2256 = vsel %vm563, %v2252, inf
    %v2257 = vmin.f32 %v2253, %v2254
    %v2258 = vmin.f32 %v2255, %v2256
    %v2259 = vmin.f32 %v2257, %v2258
    %2260 = vmin.xlane.f32.xlu0 %v2259
    %v2261 = vpop.xlane.xlu0 %2260
    %v2262 = vcvt.f32.s32.to.zero.pseudo %v2261
    %vm2263 = vcmp.eq.s32.totalorder %v45, 44
    %v2264 = vsel %vm2263, %v2244, %v2226
    %v2265 = vsel %vm2263, %v2262, %v2227
    %vm2266 = vcmp.eq.s32.totalorder %v45, %v2262
    %vm2267 = vcmp.eq.s32.totalorder %v46, %v2262
    %vm2268 = vcmp.eq.s32.totalorder %v47, %v2262
    %vm2269 = vcmp.eq.s32.totalorder %v48, %v2262
    %v2270 = vsel %vm2266, -3.4028235e+38, %v2232
    %v2271 = vsel %vm2267, -3.4028235e+38, %v2233
    %v2272 = vsel %vm2268, -3.4028235e+38, %v2234
    %v2273 = vsel %vm2269, -3.4028235e+38, %v2235
    %v2274 = vsel %vm563, %v2270, -inf
    %v2275 = vsel %vm563, %v2271, -inf
    %v2276 = vsel %vm563, %v2272, -inf
    %v2277 = vsel %vm563, %v2273, -inf
    %v2278 = vmax.f32 %v2274, %v2275
    %v2279 = vmax.f32 %v2276, %v2277
    %v2280 = vmax.f32 %v2278, %v2279
    %2281 = vmax.xlane.f32.xlu0 %v2280
    %v2282 = vpop.xlane.xlu0 %2281
    %vm2283 = vcmp.eq.f32.partialorder %v2270, %v2282
    %vm2284 = vcmp.eq.f32.partialorder %v2271, %v2282
    %vm2285 = vcmp.eq.f32.partialorder %v2272, %v2282
    %vm2286 = vcmp.eq.f32.partialorder %v2273, %v2282
    %v2287 = vsel %vm2283, %v51, 512.0
    %v2288 = vsel %vm2284, %v52, 512.0
    %v2289 = vsel %vm2285, %v53, 512.0
    %v2290 = vsel %vm2286, %v54, 512.0
    %v2291 = vsel %vm563, %v2287, inf
    %v2292 = vsel %vm563, %v2288, inf
    %v2293 = vsel %vm563, %v2289, inf
    %v2294 = vsel %vm563, %v2290, inf
    %v2295 = vmin.f32 %v2291, %v2292
    %v2296 = vmin.f32 %v2293, %v2294
    %v2297 = vmin.f32 %v2295, %v2296
    %2298 = vmin.xlane.f32.xlu0 %v2297
    %v2299 = vpop.xlane.xlu0 %2298
    %v2300 = vcvt.f32.s32.to.zero.pseudo %v2299
    %vm2301 = vcmp.eq.s32.totalorder %v45, 45
    %v2302 = vsel %vm2301, %v2282, %v2264
    %v2303 = vsel %vm2301, %v2300, %v2265
    %vm2304 = vcmp.eq.s32.totalorder %v45, %v2300
    %vm2305 = vcmp.eq.s32.totalorder %v46, %v2300
    %vm2306 = vcmp.eq.s32.totalorder %v47, %v2300
    %vm2307 = vcmp.eq.s32.totalorder %v48, %v2300
    %v2308 = vsel %vm2304, -3.4028235e+38, %v2270
    %v2309 = vsel %vm2305, -3.4028235e+38, %v2271
    %v2310 = vsel %vm2306, -3.4028235e+38, %v2272
    %v2311 = vsel %vm2307, -3.4028235e+38, %v2273
    %v2312 = vsel %vm563, %v2308, -inf
    %v2313 = vsel %vm563, %v2309, -inf
    %v2314 = vsel %vm563, %v2310, -inf
    %v2315 = vsel %vm563, %v2311, -inf
    %v2316 = vmax.f32 %v2312, %v2313
    %v2317 = vmax.f32 %v2314, %v2315
    %v2318 = vmax.f32 %v2316, %v2317
    %2319 = vmax.xlane.f32.xlu0 %v2318
    %v2320 = vpop.xlane.xlu0 %2319
    %vm2321 = vcmp.eq.f32.partialorder %v2308, %v2320
    %vm2322 = vcmp.eq.f32.partialorder %v2309, %v2320
    %vm2323 = vcmp.eq.f32.partialorder %v2310, %v2320
    %vm2324 = vcmp.eq.f32.partialorder %v2311, %v2320
    %v2325 = vsel %vm2321, %v51, 512.0
    %v2326 = vsel %vm2322, %v52, 512.0
    %v2327 = vsel %vm2323, %v53, 512.0
    %v2328 = vsel %vm2324, %v54, 512.0
    %v2329 = vsel %vm563, %v2325, inf
    %v2330 = vsel %vm563, %v2326, inf
    %v2331 = vsel %vm563, %v2327, inf
    %v2332 = vsel %vm563, %v2328, inf
    %v2333 = vmin.f32 %v2329, %v2330
    %v2334 = vmin.f32 %v2331, %v2332
    %v2335 = vmin.f32 %v2333, %v2334
    %2336 = vmin.xlane.f32.xlu0 %v2335
    %v2337 = vpop.xlane.xlu0 %2336
    %v2338 = vcvt.f32.s32.to.zero.pseudo %v2337
    %vm2339 = vcmp.eq.s32.totalorder %v45, 46
    %v2340 = vsel %vm2339, %v2320, %v2302
    %v2341 = vsel %vm2339, %v2338, %v2303
    %vm2342 = vcmp.eq.s32.totalorder %v45, %v2338
    %vm2343 = vcmp.eq.s32.totalorder %v46, %v2338
    %vm2344 = vcmp.eq.s32.totalorder %v47, %v2338
    %vm2345 = vcmp.eq.s32.totalorder %v48, %v2338
    %v2346 = vsel %vm2342, -3.4028235e+38, %v2308
    %v2347 = vsel %vm2343, -3.4028235e+38, %v2309
    %v2348 = vsel %vm2344, -3.4028235e+38, %v2310
    %v2349 = vsel %vm2345, -3.4028235e+38, %v2311
    %v2350 = vsel %vm563, %v2346, -inf
    %v2351 = vsel %vm563, %v2347, -inf
    %v2352 = vsel %vm563, %v2348, -inf
    %v2353 = vsel %vm563, %v2349, -inf
    %v2354 = vmax.f32 %v2350, %v2351
    %v2355 = vmax.f32 %v2352, %v2353
    %v2356 = vmax.f32 %v2354, %v2355
    %2357 = vmax.xlane.f32.xlu0 %v2356
    %v2358 = vpop.xlane.xlu0 %2357
    %vm2359 = vcmp.eq.f32.partialorder %v2346, %v2358
    %vm2360 = vcmp.eq.f32.partialorder %v2347, %v2358
    %vm2361 = vcmp.eq.f32.partialorder %v2348, %v2358
    %vm2362 = vcmp.eq.f32.partialorder %v2349, %v2358
    %v2363 = vsel %vm2359, %v51, 512.0
    %v2364 = vsel %vm2360, %v52, 512.0
    %v2365 = vsel %vm2361, %v53, 512.0
    %v2366 = vsel %vm2362, %v54, 512.0
    %v2367 = vsel %vm563, %v2363, inf
    %v2368 = vsel %vm563, %v2364, inf
    %v2369 = vsel %vm563, %v2365, inf
    %v2370 = vsel %vm563, %v2366, inf
    %v2371 = vmin.f32 %v2367, %v2368
    %v2372 = vmin.f32 %v2369, %v2370
    %v2373 = vmin.f32 %v2371, %v2372
    %2374 = vmin.xlane.f32.xlu0 %v2373
    %v2375 = vpop.xlane.xlu0 %2374
    %v2376 = vcvt.f32.s32.to.zero.pseudo %v2375
    %vm2377 = vcmp.eq.s32.totalorder %v45, 47
    %v2378 = vsel %vm2377, %v2358, %v2340
    %v2379 = vsel %vm2377, %v2376, %v2341
    %vm2380 = vcmp.eq.s32.totalorder %v45, %v2376
    %vm2381 = vcmp.eq.s32.totalorder %v46, %v2376
    %vm2382 = vcmp.eq.s32.totalorder %v47, %v2376
    %vm2383 = vcmp.eq.s32.totalorder %v48, %v2376
    %v2384 = vsel %vm2380, -3.4028235e+38, %v2346
    %v2385 = vsel %vm2381, -3.4028235e+38, %v2347
    %v2386 = vsel %vm2382, -3.4028235e+38, %v2348
    %v2387 = vsel %vm2383, -3.4028235e+38, %v2349
    %v2388 = vsel %vm563, %v2384, -inf
    %v2389 = vsel %vm563, %v2385, -inf
    %v2390 = vsel %vm563, %v2386, -inf
    %v2391 = vsel %vm563, %v2387, -inf
    %v2392 = vmax.f32 %v2388, %v2389
    %v2393 = vmax.f32 %v2390, %v2391
    %v2394 = vmax.f32 %v2392, %v2393
    %2395 = vmax.xlane.f32.xlu0 %v2394
    %v2396 = vpop.xlane.xlu0 %2395
    %vm2397 = vcmp.eq.f32.partialorder %v2384, %v2396
    %vm2398 = vcmp.eq.f32.partialorder %v2385, %v2396
    %vm2399 = vcmp.eq.f32.partialorder %v2386, %v2396
    %vm2400 = vcmp.eq.f32.partialorder %v2387, %v2396
    %v2401 = vsel %vm2397, %v51, 512.0
    %v2402 = vsel %vm2398, %v52, 512.0
    %v2403 = vsel %vm2399, %v53, 512.0
    %v2404 = vsel %vm2400, %v54, 512.0
    %v2405 = vsel %vm563, %v2401, inf
    %v2406 = vsel %vm563, %v2402, inf
    %v2407 = vsel %vm563, %v2403, inf
    %v2408 = vsel %vm563, %v2404, inf
    %v2409 = vmin.f32 %v2405, %v2406
    %v2410 = vmin.f32 %v2407, %v2408
    %v2411 = vmin.f32 %v2409, %v2410
    %2412 = vmin.xlane.f32.xlu0 %v2411
    %v2413 = vpop.xlane.xlu0 %2412
    %v2414 = vcvt.f32.s32.to.zero.pseudo %v2413
    %vm2415 = vcmp.eq.s32.totalorder %v45, 48
    %v2416 = vsel %vm2415, %v2396, %v2378
    %v2417 = vsel %vm2415, %v2414, %v2379
    %vm2418 = vcmp.eq.s32.totalorder %v45, %v2414
    %vm2419 = vcmp.eq.s32.totalorder %v46, %v2414
    %vm2420 = vcmp.eq.s32.totalorder %v47, %v2414
    %vm2421 = vcmp.eq.s32.totalorder %v48, %v2414
    %v2422 = vsel %vm2418, -3.4028235e+38, %v2384
    %v2423 = vsel %vm2419, -3.4028235e+38, %v2385
    %v2424 = vsel %vm2420, -3.4028235e+38, %v2386
    %v2425 = vsel %vm2421, -3.4028235e+38, %v2387
    %v2426 = vsel %vm563, %v2422, -inf
    %v2427 = vsel %vm563, %v2423, -inf
    %v2428 = vsel %vm563, %v2424, -inf
    %v2429 = vsel %vm563, %v2425, -inf
    %v2430 = vmax.f32 %v2426, %v2427
    %v2431 = vmax.f32 %v2428, %v2429
    %v2432 = vmax.f32 %v2430, %v2431
    %2433 = vmax.xlane.f32.xlu0 %v2432
    %v2434 = vpop.xlane.xlu0 %2433
    %vm2435 = vcmp.eq.f32.partialorder %v2422, %v2434
    %vm2436 = vcmp.eq.f32.partialorder %v2423, %v2434
    %vm2437 = vcmp.eq.f32.partialorder %v2424, %v2434
    %vm2438 = vcmp.eq.f32.partialorder %v2425, %v2434
    %v2439 = vsel %vm2435, %v51, 512.0
    %v2440 = vsel %vm2436, %v52, 512.0
    %v2441 = vsel %vm2437, %v53, 512.0
    %v2442 = vsel %vm2438, %v54, 512.0
    %v2443 = vsel %vm563, %v2439, inf
    %v2444 = vsel %vm563, %v2440, inf
    %v2445 = vsel %vm563, %v2441, inf
    %v2446 = vsel %vm563, %v2442, inf
    %v2447 = vmin.f32 %v2443, %v2444
    %v2448 = vmin.f32 %v2445, %v2446
    %v2449 = vmin.f32 %v2447, %v2448
    %2450 = vmin.xlane.f32.xlu0 %v2449
    %v2451 = vpop.xlane.xlu0 %2450
    %v2452 = vcvt.f32.s32.to.zero.pseudo %v2451
    %vm2453 = vcmp.eq.s32.totalorder %v45, 49
    %v2454 = vsel %vm2453, %v2434, %v2416
    %v2455 = vsel %vm2453, %v2452, %v2417
    %v2456 = vstv %s43
    %v2457 = vrcp.pop %v2456
    %v2458 = vmul.f32 %v2454, %v2457
    %vm2459 = vcmask 402432
    %v2460 = vsel %vm2459, %v2458, -inf
    %2461 = vmax.xlane.f32.xlu0 %v2460
    %v2462 = vpop.xlane.xlu0 %2461
    %v2463 = vsub.f32 %v2458, %v2462
    %v2464 = vmul.f32 %v2463, 1.442695
    %v2465 = vpow.pop %v2464
    %v2466 = vsel %vm2459, %v2465, 0.0
    %2467 = vadd.xlane.f32.xlu0 %v2466
    %v2468 = vpop.xlane.xlu0 %2467
    %v2469 = vrcp.pop %v2468
    %v2470 = vmul.f32 %v2465, %v2469
    %v2471 = vadd.s32 %v50, 8
    %v2472 = vadd.s32 %v50, 16
    %v2473 = vadd.s32 %v50, 24
    %v2474 = vadd.s32 %v50, 32
    %v2475 = vadd.s32 %v50, 40
    %v2476 = vadd.s32 %v50, 48
    %vm2477 = vcmp.le.s32.totalorder %v50, %v45
    %vm2478 = vcmp.le.s32.totalorder %v2471, %v45
    %vm2479 = vcmp.le.s32.totalorder %v2472, %v45
    %vm2480 = vcmp.le.s32.totalorder %v2473, %v45
    %vm2481 = vcmp.le.s32.totalorder %v2474, %v45
    %vm2482 = vcmp.le.s32.totalorder %v2475, %v45
    %vm2483 = vcmp.le.s32.totalorder %v2476, %v45
    %v2484 = vsel %vm2477, 1, 0
    %v2485 = vsel %vm2478, 1, 0
    %v2486 = vsel %vm2479, 1, 0
    %v2487 = vsel %vm2480, 1, 0
    %v2488 = vsel %vm2481, 1, 0
    %v2489 = vsel %vm2482, 1, 0
    %v2490 = vsel %vm2483, 1, 0
    %v2491 = vcvt.s32.f32 %v2484
    %v2492 = vcvt.s32.f32 %v2485
    %v2493 = vcvt.s32.f32 %v2486
    %v2494 = vcvt.s32.f32 %v2487
    %v2495 = vcvt.s32.f32 %v2488
    %v2496 = vcvt.s32.f32 %v2489
    %v2497 = vcvt.s32.f32 %v2490
    %vm2498 = vcmask 408576
    %v2500 = vsel %vm2498, %v2470, 0
    %v2503 = vsel %vm563, %v2497, 0
    %2505 = vmatprep.subr.mxu0 0.0
    %2506 = vmatpush1.msra.mxu0 0.0
    %2507 = vmatprep.subr.mxu0 0.0
    %2508 = vmatpush1.msra.mxu0 0.0
    %2509 = vmatprep.subr.mxu0 0.0
    %2510 = vmatpush1.msra.mxu0 0.0
    %2511 = vmatprep.subr.mxu0 0.0
    %2512 = vmatpush1.msra.mxu0 0.0
    %2513 = vmatprep.subr.mxu0 0.0
    %2514 = vmatpush1.msra.mxu0 0.0
    %2515 = vmatprep.subr.mxu0 0.0
    %2516 = vmatpush1.msra.mxu0 0.0
    %2517 = vmatprep.subr.mxu0 0.0
    %2518 = vmatpush1.msra.mxu0 0.0
    %2519 = vmatprep.subr.mxu0 0.0
    %2520 = vmatpush1.msra.mxu0 0.0
    %2521 = vmatprep.subr.mxu0 0.0
    %2522 = vmatpush1.msra.mxu0 0.0
    %2523 = vmatprep.subr.mxu0 0.0
    %2524 = vmatpush1.msra.mxu0 %v2503
    %2525 = vmatprep.subr.mxu0 0.0
    %2526 = vmatpush1.msra.mxu0 %v2496
    %2527 = vmatprep.subr.mxu0 0.0
    %2528 = vmatpush1.msra.mxu0 %v2495
    %2529 = vmatprep.subr.mxu0 0.0
    %2530 = vmatpush1.msra.mxu0 %v2494
    %2531 = vmatprep.subr.mxu0 0.0
    %2532 = vmatpush1.msra.mxu0 %v2493
    %2533 = vmatprep.subr.mxu0 0.0
    %2534 = vmatpush1.msra.mxu0 %v2492
    %2535 = vmatprep.subr.mxu0 0.0
    %2536 = vmatpush1.msra.mxu0 %v2491
    %2537 = vmatprep.subr.mxu0 0.0
    %2538 = vmatpush2.msra.mxu0 0.0
    %2539 = vmatprep.subr.mxu0 0.0
    %2540 = vmatpush2.msra.mxu0 0.0
    %2541 = vmatprep.subr.mxu0 0.0
    %2542 = vmatpush2.msra.mxu0 0.0
    %2543 = vmatprep.subr.mxu0 0.0
    %2544 = vmatpush2.msra.mxu0 0.0
    %2545 = vmatprep.subr.mxu0 0.0
    %2546 = vmatpush2.msra.mxu0 0.0
    %2547 = vmatprep.subr.mxu0 0.0
    %2548 = vmatpush2.msra.mxu0 0.0
    %2549 = vmatprep.subr.mxu0 0.0
    %2550 = vmatpush2.msra.mxu0 0.0
    %2551 = vmatprep.subr.mxu0 0.0
    %2552 = vmatpush2.msra.mxu0 0.0
    %2553 = vmatprep.subr.mxu0 0.0
    %2554 = vmatpush2.msra.mxu0 0.0
    %2555 = vmatprep.subr.mxu0 0.0
    %2556 = vmatpush2.msra.mxu0 0.0
    %2557 = vmatprep.subr.mxu0 0.0
    %2558 = vmatpush2.msra.mxu0 0.0
    %2559 = vmatprep.subr.mxu0 0.0
    %2560 = vmatpush2.msra.mxu0 0.0
    %2561 = vmatprep.subr.mxu0 0.0
    %2562 = vmatpush2.msra.mxu0 0.0
    %2563 = vmatprep.subr.mxu0 0.0
    %2564 = vmatpush2.msra.mxu0 0.0
    %2565 = vmatprep.subr.mxu0 0.0
    %2566 = vmatpush2.msra.mxu0 0.0
    %2567 = vmatprep.subr.mxu0 0.0
    %2568 = vmatpush2.msra.mxu0 0.0
    %2569 = vmatprep.mubr.f32.mxu0 0.0
    %2570 = vmatmul.mubr.f32.gmra.mxu0 %v2500
    %v2571 = vpop.f32.mrf.mxu0
    %v2572 = vadd.f32 0.0, %v2571
    %v2573 = vpop.f32.mrf.mxu0
    %2574 = vdwg.mxu0
    %vm2575 = vcmp.lt.s32.totalorder %v45, 5
    %v2576 = vstv %s42
    %vm2577 = vcmp.lt.f32.partialorder %v2572, %v2576
    %vm2578 = vmor %vm2577, %vm2575
    %v2579 = vsel %vm2578, %v2458, -1000.0
    %v2580 = vsel %vm2459, %v2579, -inf
    %2581 = vmax.xlane.f32.xlu0 %v2580
    %v2582 = vpop.xlane.xlu0 %2581
    %v2583 = vsub.f32 %v2579, %v2582
    %v2584 = vmul.f32 %v2583, 1.442695
    %v2585 = vpow.pop %v2584
    %v2586 = vsel %vm2459, %v2585, 0.0
    %2587 = vadd.xlane.f32.xlu0 %v2586
    %v2588 = vpop.xlane.xlu0 %2587
    %v2589 = vrcp.pop %v2588
    %v2590 = vmul.f32 %v2585, %v2589
    %2591 = vst.msk [vmem:[#allocation8] sm:$0x3] %vm2459, %v2590
    %2592 = vst.msk [vmem:[#allocation9] sm:$0x3] %vm2459, %v2455
    // Predicated region
    $region26: #{penalty_sample_head.1} parent=1 // pred_check
      _
    $region27: #{penalty_sample_head.1} parent=1 // pred_check_branch
      %2594 = sbr.rel (0) target = $region29
    $region28: #{penalty_sample_head.1} parent=1 // pred_region
      %s2596 = ssub.s32 32, 32
      %2597 = vsyncadd [#allocation6], %s2596
      %s2599 = sshll.u32 [#allocation8], 4
      %s2600 = int_to_ptr.vmem [resolvable:$true] %s2599
      %2602 = dma.vmem_to_hbm [thread:$0]  %s2600, 32, %s5, [#allocation6]
    $region29: #{penalty_sample_head.1} parent=1 // pred_fallthru
      _
    // Predicated region
    $region30: #{penalty_sample_head.1} parent=1 // pred_check
      _
    $region31: #{penalty_sample_head.1} parent=1 // pred_check_branch
      %2604 = sbr.rel (0) target = $region33
    $region32: #{penalty_sample_head.1} parent=1 // pred_region
      %s2606 = ssub.s32 32, 32
      %2607 = vsyncadd [#allocation10], %s2606
      %s2609 = sshll.u32 [#allocation9], 4
      %s2610 = int_to_ptr.vmem [resolvable:$true] %s2609
      %2612 = dma.vmem_to_hbm [thread:$0]  %s2610, 32, %s6, [#allocation10]
    $region33: #{penalty_sample_head.1} parent=1 // pred_fallthru
      _
    // Predicated region
    $region34: #{penalty_sample_head.1} parent=1 // pred_check
      _
    $region35: #{penalty_sample_head.1} parent=1 // pred_check_branch
      %2614 = sbr.rel (0) target = $region37
    $region36: #{penalty_sample_head.1} parent=1 // pred_region
      %2615 = dma.done [#allocation6], 32
    $region37: #{penalty_sample_head.1} parent=1 // pred_fallthru
      _
    // Predicated region
    $region38: #{penalty_sample_head.1} parent=1 // pred_check
      _
    $region39: #{penalty_sample_head.1} parent=1 // pred_check_branch
      %2617 = sbr.rel (0) target = $region41
    $region40: #{penalty_sample_head.1} parent=1 // pred_region
      %2618 = dma.done [#allocation10], 32
    $region41: #{penalty_sample_head.1} parent=1 // pred_fallthru
      _
    %2619 = vsyncpa [#allocation6], 1
    %2620 = vsyncpa [#allocation10], 1
    %2621 = vsyncpa [#allocation7], 1

</llo_original>
